<compile_context>
chip_gen: v7x
topology: tpu7x:2x2x1
jax: 0.10.0
libtpu: 0.0.40
codegen_flags: <defaults>
</compile_context>

<pallas_src>
import functools
import math

import jax
import jax.numpy as jnp
from jax.experimental import pallas as pl
from jax.experimental.pallas import tpu as pltpu

EPS = 1e-5                 # nn.BatchNorm1d default eps
LATENT = 2
LATENT_PAD = 128           # lane-dense padded latent width
IN_FEATURES = 28 * 28      # 784 (kernel input K dim, NOT padded)
OUT_PAD = 896              # 7 * 128, lane-dense padded reconstruction width
MAX_FUSED_BATCH = 2048     # keeps single-step VMEM residency within v7x's 64 MiB


def _layer_plan():
    """Static description of the 12 layers (encoder then decoder)."""
    enc = [IN_FEATURES, 512, 256, 128, 64, 16, LATENT]
    dec = [LATENT, 16, 64, 128, 256, 512, IN_FEATURES]
    fin_pad = {LATENT: LATENT_PAD}                           # decoder eats padded latent
    fout_pad = {LATENT: LATENT_PAD, IN_FEATURES: OUT_PAD}    # lane-dense HBM stores
    plan = []
    for dims, head_act in ((enc, "tanh"), (dec, "sigmoid")):
        n = len(dims) - 1
        for i in range(n):
            fin, fout = dims[i], dims[i + 1]
            has_bn = i < n - 1                               # every layer but the head
            plan.append(dict(
                fin=fin, fout=fout,
                fin_p=fin_pad.get(fin, fin),
                fout_p=fout_pad.get(fout, fout),
                has_bn=has_bn,
                act="relu" if has_bn else head_act,
                is_latent=(head_act == "tanh" and i == n - 1),
            ))
    return plan


LAYER_PLAN = _layer_plan()


# ---------------------------------------------------------------------------
# Fused kernel: 12 Linears + 10 training-mode BatchNorms + activations.
# ---------------------------------------------------------------------------

def _fused_autoencoder_kernel(*refs, plan):
    """refs = [x(bf16)] + flattened per-layer params + [enc_out, dec_out]."""
    x_ref = refs[0]
    enc_ref, dec_ref = refs[-2], refs[-1]
    params = refs[1:-2]

    h = x_ref[...]                       # bf16 [B, 784]
    h32 = None
    idx = 0
    for layer in plan:
        w = params[idx][...]             # bf16 [fin_p, fout_p]
        idx += 1
        # Linear (bias-free for BN layers): bf16 x bf16 on the MXU, f32 accumulation.
        h32 = jnp.dot(h, w, preferred_element_type=jnp.float32)
        if layer["has_bn"]:
            gamma = params[idx][...]     # f32 [1, fout]
            beta = params[idx + 1][...]
            idx += 2
            # BatchNorm1d training mode: full-batch mean / biased variance.
            # (The Linear bias cancels exactly under the mean subtraction — not loaded.)
            mean = jnp.mean(h32, axis=0, keepdims=True)
            var = jnp.mean(jnp.square(h32 - mean), axis=0, keepdims=True)
            h32 = (h32 - mean) * jax.lax.rsqrt(var + EPS) * gamma + beta
            h32 = jnp.maximum(h32, 0.0)                       # ReLU
        else:
            b = params[idx][...]         # f32 [1, fout_p] — only the two head layers
            idx += 1
            h32 = h32 + b
            h32 = jnp.tanh(h32) if layer["act"] == "tanh" else jax.nn.sigmoid(h32)
        if layer["is_latent"]:
            enc_ref[...] = h32           # padded lanes (>= LATENT) are exactly 0
        h = h32.astype(jnp.bfloat16)     # next layer's matmul input
    dec_ref[...] = h32                   # padded lanes (>= 784) sliced off outside


# ---------------------------------------------------------------------------
# Parameter construction (deterministic, PyTorch-like default init, zero-padded).
# ---------------------------------------------------------------------------

def init_params(key):
    params = []
    for layer in LAYER_PLAN:
        fin, fout = layer["fin"], layer["fout"]
        fin_p, fout_p = layer["fin_p"], layer["fout_p"]
        key, kw, kb = jax.random.split(key, 3)
        bound = 1.0 / math.sqrt(fin)
        w = jax.random.uniform(kw, (fin, fout), jnp.float32, -bound, bound)
        # Zero-pad to lane-aligned shapes; padded rows/cols contribute nothing.
        w = jnp.pad(w, ((0, fin_p - fin), (0, fout_p - fout)))
        p = {"w": w.astype(jnp.bfloat16)}
        if layer["has_bn"]:
            # Bias would be cancelled by training-mode BN — not materialized at all.
            p["gamma"] = jnp.ones((1, fout_p), jnp.float32)
            p["beta"] = jnp.zeros((1, fout_p), jnp.float32)
        else:
            b = jax.random.uniform(kb, (fout,), jnp.float32, -bound, bound)
            p["b"] = jnp.pad(b, (0, fout_p - fout)).reshape(1, fout_p)
        params.append(p)
    return params


def _flatten_params(params):
    flat = []
    for layer, p in zip(LAYER_PLAN, params):
        flat.append(p["w"])
        if layer["has_bn"]:
            flat.append(p["gamma"])
            flat.append(p["beta"])
        else:
            flat.append(p["b"])
    return flat


# ---------------------------------------------------------------------------
# Fused forward pass: one pallas_call for the whole autoencoder.
# ---------------------------------------------------------------------------

def autoencoder_forward(params, x):
    B = x.shape[0]
    if B > MAX_FUSED_BATCH:
        raise ValueError(
            f"batch {B} > {MAX_FUSED_BATCH}: add a batch grid + two-pass BN "
            "(see TODO) before scaling further.")
    x_bf16 = x.astype(jnp.bfloat16)          # halves input DMA; no pad pass
    flat = _flatten_params(params)
    n_in = 1 + len(flat)

    flops = 2 * B * sum(l["fin_p"] * l["fout_p"] for l in LAYER_PLAN)
    transcendentals = B * (LATENT_PAD + OUT_PAD) + sum(
        l["fout_p"] for l in LAYER_PLAN if l["has_bn"])     # tanh + sigmoid + BN rsqrt
    bytes_accessed = (
        sum(a.size * a.dtype.itemsize for a in flat)
        + x_bf16.size * 2
        + B * LATENT_PAD * 4
        + B * OUT_PAD * 4
    )

    vmem_spec = pl.BlockSpec(memory_space=pltpu.MemorySpace.VMEM)
    enc_p, dec_p = pl.pallas_call(
        functools.partial(_fused_autoencoder_kernel, plan=LAYER_PLAN),
        out_shape=(
            jax.ShapeDtypeStruct((B, LATENT_PAD), jnp.float32),
            jax.ShapeDtypeStruct((B, OUT_PAD), jnp.float32),
        ),
        in_specs=[vmem_spec] * n_in,
        out_specs=(vmem_spec, vmem_spec),
        compiler_params=pltpu.CompilerParams(
            vmem_limit_bytes=48 * 1024 * 1024,   # safe on v7x (64 MiB phys) and below
        ),
        cost_estimate=pl.CostEstimate(
            flops=flops,
            transcendentals=transcendentals,
            bytes_accessed=bytes_accessed,
        ),
    )(x_bf16, *flat)

    # TODO(synk): at large batch, emit bf16 / padded outputs and skip this slice pass.
    return enc_p[:, :LATENT], dec_p[:, :IN_FEATURES]


# ---------------------------------------------------------------------------
# Pure-JAX reference (same bf16-matmul / f32-accum math) for a tolerance check.
# ---------------------------------------------------------------------------

def reference_forward(params, x):
    h = x.astype(jnp.float32)
    enc = None
    for layer, p in zip(LAYER_PLAN, params):
        h = jnp.dot(h.astype(jnp.bfloat16), p["w"],
                    preferred_element_type=jnp.float32)
        if layer["has_bn"]:
            mean = jnp.mean(h, axis=0, keepdims=True)
            var = jnp.mean(jnp.square(h - mean), axis=0, keepdims=True)
            h = (h - mean) * jax.lax.rsqrt(var + EPS) * p["gamma"] + p["beta"]
            h = jnp.maximum(h, 0.0)
        else:
            h = h + p["b"]
            h = jnp.tanh(h) if layer["act"] == "tanh" else jax.nn.sigmoid(h)
        if layer["is_latent"]:
            enc = h[:, :LATENT]
    return enc, h[:, :IN_FEATURES]


if __name__ == "__main__":
    key = jax.random.PRNGKey(0)
    kp, kx = jax.random.split(key)
    params = init_params(kp)

    batch = 8
    x = jax.random.uniform(kx, (batch, IN_FEATURES), jnp.float32)  # flat MNIST-like

    fwd = jax.jit(autoencoder_forward)
    encoded, decoded = fwd(params, x)
    jax.block_until_ready((encoded, decoded))

    assert encoded.shape == (batch, LATENT)
    assert decoded.shape == (batch, IN_FEATURES)
    assert bool(jnp.all(jnp.isfinite(encoded)))
    assert bool(jnp.all(jnp.isfinite(decoded)))

    enc_ref, dec_ref = reference_forward(params, x)
    assert bool(jnp.max(jnp.abs(encoded - enc_ref)) < 5e-2)
    assert bool(jnp.max(jnp.abs(decoded - dec_ref)) < 5e-2)

    print("KERNEL_OK")
</pallas_src>

<mosaic_0001>
module attributes {stable_mosaic.version = 11 : i64} {
  func.func @_fused_autoencoder_kernel(%arg0: memref<8x784xbf16, #tpu.memory_space<vmem>>, %arg1: memref<784x512xbf16, #tpu.memory_space<vmem>>, %arg2: memref<1x512xf32, #tpu.memory_space<vmem>>, %arg3: memref<1x512xf32, #tpu.memory_space<vmem>>, %arg4: memref<512x256xbf16, #tpu.memory_space<vmem>>, %arg5: memref<1x256xf32, #tpu.memory_space<vmem>>, %arg6: memref<1x256xf32, #tpu.memory_space<vmem>>, %arg7: memref<256x128xbf16, #tpu.memory_space<vmem>>, %arg8: memref<1x128xf32, #tpu.memory_space<vmem>>, %arg9: memref<1x128xf32, #tpu.memory_space<vmem>>, %arg10: memref<128x64xbf16, #tpu.memory_space<vmem>>, %arg11: memref<1x64xf32, #tpu.memory_space<vmem>>, %arg12: memref<1x64xf32, #tpu.memory_space<vmem>>, %arg13: memref<64x16xbf16, #tpu.memory_space<vmem>>, %arg14: memref<1x16xf32, #tpu.memory_space<vmem>>, %arg15: memref<1x16xf32, #tpu.memory_space<vmem>>, %arg16: memref<16x128xbf16, #tpu.memory_space<vmem>>, %arg17: memref<1x128xf32, #tpu.memory_space<vmem>>, %arg18: memref<128x16xbf16, #tpu.memory_space<vmem>>, %arg19: memref<1x16xf32, #tpu.memory_space<vmem>>, %arg20: memref<1x16xf32, #tpu.memory_space<vmem>>, %arg21: memref<16x64xbf16, #tpu.memory_space<vmem>>, %arg22: memref<1x64xf32, #tpu.memory_space<vmem>>, %arg23: memref<1x64xf32, #tpu.memory_space<vmem>>, %arg24: memref<64x128xbf16, #tpu.memory_space<vmem>>, %arg25: memref<1x128xf32, #tpu.memory_space<vmem>>, %arg26: memref<1x128xf32, #tpu.memory_space<vmem>>, %arg27: memref<128x256xbf16, #tpu.memory_space<vmem>>, %arg28: memref<1x256xf32, #tpu.memory_space<vmem>>, %arg29: memref<1x256xf32, #tpu.memory_space<vmem>>, %arg30: memref<256x512xbf16, #tpu.memory_space<vmem>>, %arg31: memref<1x512xf32, #tpu.memory_space<vmem>>, %arg32: memref<1x512xf32, #tpu.memory_space<vmem>>, %arg33: memref<512x896xbf16, #tpu.memory_space<vmem>>, %arg34: memref<1x896xf32, #tpu.memory_space<vmem>>, %arg35: memref<8x128xf32, #tpu.memory_space<vmem>>, %arg36: memref<8x896xf32, #tpu.memory_space<vmem>>) attributes {dimension_semantics = [], scalar_prefetch = 0 : i64, scratch_operands = 0 : i64, tpu.core_type = #tpu.core_type<tc>} {
    %c0 = arith.constant 0 : index
    %c0_0 = arith.constant 0 : index
    %0 = vector.load %arg0[%c0, %c0_0] : memref<8x784xbf16, #tpu.memory_space<vmem>>, vector<8x784xbf16>
    %c0_1 = arith.constant 0 : index
    %c0_2 = arith.constant 0 : index
    %1 = vector.load %arg1[%c0_1, %c0_2] : memref<784x512xbf16, #tpu.memory_space<vmem>>, vector<784x512xbf16>
    %cst = arith.constant dense<0.000000e+00> : vector<8x512xf32>
    %2 = tpu.matmul %0, %1, %cst {dimension_numbers = #tpu.dot_dimension_numbers<[1], [0], [0], [1], [0, 0, 1, 1], [], []>} : vector<8x784xbf16>, vector<784x512xbf16>, vector<8x512xf32> -> vector<8x512xf32>
    %c0_3 = arith.constant 0 : index
    %c0_4 = arith.constant 0 : index
    %3 = vector.load %arg2[%c0_3, %c0_4] : memref<1x512xf32, #tpu.memory_space<vmem>>, vector<1x512xf32>
    %c0_5 = arith.constant 0 : index
    %c0_6 = arith.constant 0 : index
    %4 = vector.load %arg3[%c0_5, %c0_6] : memref<1x512xf32, #tpu.memory_space<vmem>>, vector<1x512xf32>
    %cst_7 = arith.constant dense<0.000000e+00> : vector<512xf32>
    %5 = vector.multi_reduction <add>, %2, %cst_7 [0] : vector<8x512xf32> to vector<512xf32>
    %6 = vector.shape_cast %5 : vector<512xf32> to vector<1x512xf32>
    %cst_8 = arith.constant 8.000000e+00 : f32
    %7 = vector.broadcast %cst_8 : f32 to vector<1x512xf32>
    %8 = arith.divf %6, %7 : vector<1x512xf32>
    %9 = vector.broadcast %8 : vector<1x512xf32> to vector<8x512xf32>
    %10 = arith.subf %2, %9 : vector<8x512xf32>
    %11 = arith.mulf %10, %10 : vector<8x512xf32>
    %cst_9 = arith.constant dense<0.000000e+00> : vector<512xf32>
    %12 = vector.multi_reduction <add>, %11, %cst_9 [0] : vector<8x512xf32> to vector<512xf32>
    %13 = vector.shape_cast %12 : vector<512xf32> to vector<1x512xf32>
    %cst_10 = arith.constant 8.000000e+00 : f32
    %14 = vector.broadcast %cst_10 : f32 to vector<1x512xf32>
    %15 = arith.divf %13, %14 : vector<1x512xf32>
    %16 = vector.broadcast %8 : vector<1x512xf32> to vector<8x512xf32>
    %17 = arith.subf %2, %16 : vector<8x512xf32>
    %cst_11 = arith.constant 9.99999974E-6 : f32
    %18 = vector.broadcast %cst_11 : f32 to vector<1x512xf32>
    %19 = arith.addf %15, %18 : vector<1x512xf32>
    %20 = math.rsqrt %19 : vector<1x512xf32>
    %21 = vector.broadcast %20 : vector<1x512xf32> to vector<8x512xf32>
    %22 = arith.mulf %17, %21 : vector<8x512xf32>
    %23 = vector.broadcast %3 : vector<1x512xf32> to vector<8x512xf32>
    %24 = arith.mulf %22, %23 : vector<8x512xf32>
    %25 = vector.broadcast %4 : vector<1x512xf32> to vector<8x512xf32>
    %26 = arith.addf %24, %25 : vector<8x512xf32>
    %cst_12 = arith.constant 0.000000e+00 : f32
    %27 = vector.broadcast %cst_12 : f32 to vector<8x512xf32>
    %28 = arith.maximumf %26, %27 : vector<8x512xf32>
    %29 = arith.truncf %28 : vector<8x512xf32> to vector<8x512xbf16>
    %c0_13 = arith.constant 0 : index
    %c0_14 = arith.constant 0 : index
    %30 = vector.load %arg4[%c0_13, %c0_14] : memref<512x256xbf16, #tpu.memory_space<vmem>>, vector<512x256xbf16>
    %cst_15 = arith.constant dense<0.000000e+00> : vector<8x256xf32>
    %31 = tpu.matmul %29, %30, %cst_15 {dimension_numbers = #tpu.dot_dimension_numbers<[1], [0], [0], [1], [0, 0, 1, 1], [], []>} : vector<8x512xbf16>, vector<512x256xbf16>, vector<8x256xf32> -> vector<8x256xf32>
    %c0_16 = arith.constant 0 : index
    %c0_17 = arith.constant 0 : index
    %32 = vector.load %arg5[%c0_16, %c0_17] : memref<1x256xf32, #tpu.memory_space<vmem>>, vector<1x256xf32>
    %c0_18 = arith.constant 0 : index
    %c0_19 = arith.constant 0 : index
    %33 = vector.load %arg6[%c0_18, %c0_19] : memref<1x256xf32, #tpu.memory_space<vmem>>, vector<1x256xf32>
    %cst_20 = arith.constant dense<0.000000e+00> : vector<256xf32>
    %34 = vector.multi_reduction <add>, %31, %cst_20 [0] : vector<8x256xf32> to vector<256xf32>
    %35 = vector.shape_cast %34 : vector<256xf32> to vector<1x256xf32>
    %cst_21 = arith.constant 8.000000e+00 : f32
    %36 = vector.broadcast %cst_21 : f32 to vector<1x256xf32>
    %37 = arith.divf %35, %36 : vector<1x256xf32>
    %38 = vector.broadcast %37 : vector<1x256xf32> to vector<8x256xf32>
    %39 = arith.subf %31, %38 : vector<8x256xf32>
    %40 = arith.mulf %39, %39 : vector<8x256xf32>
    %cst_22 = arith.constant dense<0.000000e+00> : vector<256xf32>
    %41 = vector.multi_reduction <add>, %40, %cst_22 [0] : vector<8x256xf32> to vector<256xf32>
    %42 = vector.shape_cast %41 : vector<256xf32> to vector<1x256xf32>
    %cst_23 = arith.constant 8.000000e+00 : f32
    %43 = vector.broadcast %cst_23 : f32 to vector<1x256xf32>
    %44 = arith.divf %42, %43 : vector<1x256xf32>
    %45 = vector.broadcast %37 : vector<1x256xf32> to vector<8x256xf32>
    %46 = arith.subf %31, %45 : vector<8x256xf32>
    %cst_24 = arith.constant 9.99999974E-6 : f32
    %47 = vector.broadcast %cst_24 : f32 to vector<1x256xf32>
    %48 = arith.addf %44, %47 : vector<1x256xf32>
    %49 = math.rsqrt %48 : vector<1x256xf32>
    %50 = vector.broadcast %49 : vector<1x256xf32> to vector<8x256xf32>
    %51 = arith.mulf %46, %50 : vector<8x256xf32>
    %52 = vector.broadcast %32 : vector<1x256xf32> to vector<8x256xf32>
    %53 = arith.mulf %51, %52 : vector<8x256xf32>
    %54 = vector.broadcast %33 : vector<1x256xf32> to vector<8x256xf32>
    %55 = arith.addf %53, %54 : vector<8x256xf32>
    %cst_25 = arith.constant 0.000000e+00 : f32
    %56 = vector.broadcast %cst_25 : f32 to vector<8x256xf32>
    %57 = arith.maximumf %55, %56 : vector<8x256xf32>
    %58 = arith.truncf %57 : vector<8x256xf32> to vector<8x256xbf16>
    %c0_26 = arith.constant 0 : index
    %c0_27 = arith.constant 0 : index
    %59 = vector.load %arg7[%c0_26, %c0_27] : memref<256x128xbf16, #tpu.memory_space<vmem>>, vector<256x128xbf16>
    %cst_28 = arith.constant dense<0.000000e+00> : vector<8x128xf32>
    %60 = tpu.matmul %58, %59, %cst_28 {dimension_numbers = #tpu.dot_dimension_numbers<[1], [0], [0], [1], [0, 0, 1, 1], [], []>} : vector<8x256xbf16>, vector<256x128xbf16>, vector<8x128xf32> -> vector<8x128xf32>
    %c0_29 = arith.constant 0 : index
    %c0_30 = arith.constant 0 : index
    %61 = vector.load %arg8[%c0_29, %c0_30] : memref<1x128xf32, #tpu.memory_space<vmem>>, vector<1x128xf32>
    %c0_31 = arith.constant 0 : index
    %c0_32 = arith.constant 0 : index
    %62 = vector.load %arg9[%c0_31, %c0_32] : memref<1x128xf32, #tpu.memory_space<vmem>>, vector<1x128xf32>
    %cst_33 = arith.constant dense<0.000000e+00> : vector<128xf32>
    %63 = vector.multi_reduction <add>, %60, %cst_33 [0] : vector<8x128xf32> to vector<128xf32>
    %64 = vector.shape_cast %63 : vector<128xf32> to vector<1x128xf32>
    %cst_34 = arith.constant 8.000000e+00 : f32
    %65 = vector.broadcast %cst_34 : f32 to vector<1x128xf32>
    %66 = arith.divf %64, %65 : vector<1x128xf32>
    %67 = vector.broadcast %66 : vector<1x128xf32> to vector<8x128xf32>
    %68 = arith.subf %60, %67 : vector<8x128xf32>
    %69 = arith.mulf %68, %68 : vector<8x128xf32>
    %cst_35 = arith.constant dense<0.000000e+00> : vector<128xf32>
    %70 = vector.multi_reduction <add>, %69, %cst_35 [0] : vector<8x128xf32> to vector<128xf32>
    %71 = vector.shape_cast %70 : vector<128xf32> to vector<1x128xf32>
    %cst_36 = arith.constant 8.000000e+00 : f32
    %72 = vector.broadcast %cst_36 : f32 to vector<1x128xf32>
    %73 = arith.divf %71, %72 : vector<1x128xf32>
    %74 = vector.broadcast %66 : vector<1x128xf32> to vector<8x128xf32>
    %75 = arith.subf %60, %74 : vector<8x128xf32>
    %cst_37 = arith.constant 9.99999974E-6 : f32
    %76 = vector.broadcast %cst_37 : f32 to vector<1x128xf32>
    %77 = arith.addf %73, %76 : vector<1x128xf32>
    %78 = math.rsqrt %77 : vector<1x128xf32>
    %79 = vector.broadcast %78 : vector<1x128xf32> to vector<8x128xf32>
    %80 = arith.mulf %75, %79 : vector<8x128xf32>
    %81 = vector.broadcast %61 : vector<1x128xf32> to vector<8x128xf32>
    %82 = arith.mulf %80, %81 : vector<8x128xf32>
    %83 = vector.broadcast %62 : vector<1x128xf32> to vector<8x128xf32>
    %84 = arith.addf %82, %83 : vector<8x128xf32>
    %cst_38 = arith.constant 0.000000e+00 : f32
    %85 = vector.broadcast %cst_38 : f32 to vector<8x128xf32>
    %86 = arith.maximumf %84, %85 : vector<8x128xf32>
    %87 = arith.truncf %86 : vector<8x128xf32> to vector<8x128xbf16>
    %c0_39 = arith.constant 0 : index
    %c0_40 = arith.constant 0 : index
    %88 = vector.load %arg10[%c0_39, %c0_40] : memref<128x64xbf16, #tpu.memory_space<vmem>>, vector<128x64xbf16>
    %cst_41 = arith.constant dense<0.000000e+00> : vector<8x64xf32>
    %89 = tpu.matmul %87, %88, %cst_41 {dimension_numbers = #tpu.dot_dimension_numbers<[1], [0], [0], [1], [0, 0, 1, 1], [], []>} : vector<8x128xbf16>, vector<128x64xbf16>, vector<8x64xf32> -> vector<8x64xf32>
    %c0_42 = arith.constant 0 : index
    %c0_43 = arith.constant 0 : index
    %90 = vector.load %arg11[%c0_42, %c0_43] : memref<1x64xf32, #tpu.memory_space<vmem>>, vector<1x64xf32>
    %c0_44 = arith.constant 0 : index
    %c0_45 = arith.constant 0 : index
    %91 = vector.load %arg12[%c0_44, %c0_45] : memref<1x64xf32, #tpu.memory_space<vmem>>, vector<1x64xf32>
    %cst_46 = arith.constant dense<0.000000e+00> : vector<64xf32>
    %92 = vector.multi_reduction <add>, %89, %cst_46 [0] : vector<8x64xf32> to vector<64xf32>
    %93 = vector.shape_cast %92 : vector<64xf32> to vector<1x64xf32>
    %cst_47 = arith.constant 8.000000e+00 : f32
    %94 = vector.broadcast %cst_47 : f32 to vector<1x64xf32>
    %95 = arith.divf %93, %94 : vector<1x64xf32>
    %96 = vector.broadcast %95 : vector<1x64xf32> to vector<8x64xf32>
    %97 = arith.subf %89, %96 : vector<8x64xf32>
    %98 = arith.mulf %97, %97 : vector<8x64xf32>
    %cst_48 = arith.constant dense<0.000000e+00> : vector<64xf32>
    %99 = vector.multi_reduction <add>, %98, %cst_48 [0] : vector<8x64xf32> to vector<64xf32>
    %100 = vector.shape_cast %99 : vector<64xf32> to vector<1x64xf32>
    %cst_49 = arith.constant 8.000000e+00 : f32
    %101 = vector.broadcast %cst_49 : f32 to vector<1x64xf32>
    %102 = arith.divf %100, %101 : vector<1x64xf32>
    %103 = vector.broadcast %95 : vector<1x64xf32> to vector<8x64xf32>
    %104 = arith.subf %89, %103 : vector<8x64xf32>
    %cst_50 = arith.constant 9.99999974E-6 : f32
    %105 = vector.broadcast %cst_50 : f32 to vector<1x64xf32>
    %106 = arith.addf %102, %105 : vector<1x64xf32>
    %107 = math.rsqrt %106 : vector<1x64xf32>
    %108 = vector.broadcast %107 : vector<1x64xf32> to vector<8x64xf32>
    %109 = arith.mulf %104, %108 : vector<8x64xf32>
    %110 = vector.broadcast %90 : vector<1x64xf32> to vector<8x64xf32>
    %111 = arith.mulf %109, %110 : vector<8x64xf32>
    %112 = vector.broadcast %91 : vector<1x64xf32> to vector<8x64xf32>
    %113 = arith.addf %111, %112 : vector<8x64xf32>
    %cst_51 = arith.constant 0.000000e+00 : f32
    %114 = vector.broadcast %cst_51 : f32 to vector<8x64xf32>
    %115 = arith.maximumf %113, %114 : vector<8x64xf32>
    %116 = arith.truncf %115 : vector<8x64xf32> to vector<8x64xbf16>
    %c0_52 = arith.constant 0 : index
    %c0_53 = arith.constant 0 : index
    %117 = vector.load %arg13[%c0_52, %c0_53] : memref<64x16xbf16, #tpu.memory_space<vmem>>, vector<64x16xbf16>
    %cst_54 = arith.constant dense<0.000000e+00> : vector<8x16xf32>
    %118 = tpu.matmul %116, %117, %cst_54 {dimension_numbers = #tpu.dot_dimension_numbers<[1], [0], [0], [1], [0, 0, 1, 1], [], []>} : vector<8x64xbf16>, vector<64x16xbf16>, vector<8x16xf32> -> vector<8x16xf32>
    %c0_55 = arith.constant 0 : index
    %c0_56 = arith.constant 0 : index
    %119 = vector.load %arg14[%c0_55, %c0_56] : memref<1x16xf32, #tpu.memory_space<vmem>>, vector<1x16xf32>
    %c0_57 = arith.constant 0 : index
    %c0_58 = arith.constant 0 : index
    %120 = vector.load %arg15[%c0_57, %c0_58] : memref<1x16xf32, #tpu.memory_space<vmem>>, vector<1x16xf32>
    %cst_59 = arith.constant dense<0.000000e+00> : vector<16xf32>
    %121 = vector.multi_reduction <add>, %118, %cst_59 [0] : vector<8x16xf32> to vector<16xf32>
    %122 = vector.shape_cast %121 : vector<16xf32> to vector<1x16xf32>
    %cst_60 = arith.constant 8.000000e+00 : f32
    %123 = vector.broadcast %cst_60 : f32 to vector<1x16xf32>
    %124 = arith.divf %122, %123 : vector<1x16xf32>
    %125 = vector.broadcast %124 : vector<1x16xf32> to vector<8x16xf32>
    %126 = arith.subf %118, %125 : vector<8x16xf32>
    %127 = arith.mulf %126, %126 : vector<8x16xf32>
    %cst_61 = arith.constant dense<0.000000e+00> : vector<16xf32>
    %128 = vector.multi_reduction <add>, %127, %cst_61 [0] : vector<8x16xf32> to vector<16xf32>
    %129 = vector.shape_cast %128 : vector<16xf32> to vector<1x16xf32>
    %cst_62 = arith.constant 8.000000e+00 : f32
    %130 = vector.broadcast %cst_62 : f32 to vector<1x16xf32>
    %131 = arith.divf %129, %130 : vector<1x16xf32>
    %132 = vector.broadcast %124 : vector<1x16xf32> to vector<8x16xf32>
    %133 = arith.subf %118, %132 : vector<8x16xf32>
    %cst_63 = arith.constant 9.99999974E-6 : f32
    %134 = vector.broadcast %cst_63 : f32 to vector<1x16xf32>
    %135 = arith.addf %131, %134 : vector<1x16xf32>
    %136 = math.rsqrt %135 : vector<1x16xf32>
    %137 = vector.broadcast %136 : vector<1x16xf32> to vector<8x16xf32>
    %138 = arith.mulf %133, %137 : vector<8x16xf32>
    %139 = vector.broadcast %119 : vector<1x16xf32> to vector<8x16xf32>
    %140 = arith.mulf %138, %139 : vector<8x16xf32>
    %141 = vector.broadcast %120 : vector<1x16xf32> to vector<8x16xf32>
    %142 = arith.addf %140, %141 : vector<8x16xf32>
    %cst_64 = arith.constant 0.000000e+00 : f32
    %143 = vector.broadcast %cst_64 : f32 to vector<8x16xf32>
    %144 = arith.maximumf %142, %143 : vector<8x16xf32>
    %145 = arith.truncf %144 : vector<8x16xf32> to vector<8x16xbf16>
    %c0_65 = arith.constant 0 : index
    %c0_66 = arith.constant 0 : index
    %146 = vector.load %arg16[%c0_65, %c0_66] : memref<16x128xbf16, #tpu.memory_space<vmem>>, vector<16x128xbf16>
    %cst_67 = arith.constant dense<0.000000e+00> : vector<8x128xf32>
    %147 = tpu.matmul %145, %146, %cst_67 {dimension_numbers = #tpu.dot_dimension_numbers<[1], [0], [0], [1], [0, 0, 1, 1], [], []>} : vector<8x16xbf16>, vector<16x128xbf16>, vector<8x128xf32> -> vector<8x128xf32>
    %c0_68 = arith.constant 0 : index
    %c0_69 = arith.constant 0 : index
    %148 = vector.load %arg17[%c0_68, %c0_69] : memref<1x128xf32, #tpu.memory_space<vmem>>, vector<1x128xf32>
    %149 = vector.broadcast %148 : vector<1x128xf32> to vector<8x128xf32>
    %150 = arith.addf %147, %149 : vector<8x128xf32>
    %151 = math.tanh %150 : vector<8x128xf32>
    %c0_70 = arith.constant 0 : index
    %c0_71 = arith.constant 0 : index
    %152 = vector.load %arg35[%c0_70, %c0_71] : memref<8x128xf32, #tpu.memory_space<vmem>>, vector<8x128xf32>
    tpu.vector_store %arg35[%c0_70, %c0_71], %151 {strides = array<i32>} : memref<8x128xf32, #tpu.memory_space<vmem>>, vector<8x128xf32>,
    %153 = arith.truncf %151 : vector<8x128xf32> to vector<8x128xbf16>
    %c0_72 = arith.constant 0 : index
    %c0_73 = arith.constant 0 : index
    %154 = vector.load %arg18[%c0_72, %c0_73] : memref<128x16xbf16, #tpu.memory_space<vmem>>, vector<128x16xbf16>
    %cst_74 = arith.constant dense<0.000000e+00> : vector<8x16xf32>
    %155 = tpu.matmul %153, %154, %cst_74 {dimension_numbers = #tpu.dot_dimension_numbers<[1], [0], [0], [1], [0, 0, 1, 1], [], []>} : vector<8x128xbf16>, vector<128x16xbf16>, vector<8x16xf32> -> vector<8x16xf32>
    %c0_75 = arith.constant 0 : index
    %c0_76 = arith.constant 0 : index
    %156 = vector.load %arg19[%c0_75, %c0_76] : memref<1x16xf32, #tpu.memory_space<vmem>>, vector<1x16xf32>
    %c0_77 = arith.constant 0 : index
    %c0_78 = arith.constant 0 : index
    %157 = vector.load %arg20[%c0_77, %c0_78] : memref<1x16xf32, #tpu.memory_space<vmem>>, vector<1x16xf32>
    %cst_79 = arith.constant dense<0.000000e+00> : vector<16xf32>
    %158 = vector.multi_reduction <add>, %155, %cst_79 [0] : vector<8x16xf32> to vector<16xf32>
    %159 = vector.shape_cast %158 : vector<16xf32> to vector<1x16xf32>
    %cst_80 = arith.constant 8.000000e+00 : f32
    %160 = vector.broadcast %cst_80 : f32 to vector<1x16xf32>
    %161 = arith.divf %159, %160 : vector<1x16xf32>
    %162 = vector.broadcast %161 : vector<1x16xf32> to vector<8x16xf32>
    %163 = arith.subf %155, %162 : vector<8x16xf32>
    %164 = arith.mulf %163, %163 : vector<8x16xf32>
    %cst_81 = arith.constant dense<0.000000e+00> : vector<16xf32>
    %165 = vector.multi_reduction <add>, %164, %cst_81 [0] : vector<8x16xf32> to vector<16xf32>
    %166 = vector.shape_cast %165 : vector<16xf32> to vector<1x16xf32>
    %cst_82 = arith.constant 8.000000e+00 : f32
    %167 = vector.broadcast %cst_82 : f32 to vector<1x16xf32>
    %168 = arith.divf %166, %167 : vector<1x16xf32>
    %169 = vector.broadcast %161 : vector<1x16xf32> to vector<8x16xf32>
    %170 = arith.subf %155, %169 : vector<8x16xf32>
    %cst_83 = arith.constant 9.99999974E-6 : f32
    %171 = vector.broadcast %cst_83 : f32 to vector<1x16xf32>
    %172 = arith.addf %168, %171 : vector<1x16xf32>
    %173 = math.rsqrt %172 : vector<1x16xf32>
    %174 = vector.broadcast %173 : vector<1x16xf32> to vector<8x16xf32>
    %175 = arith.mulf %170, %174 : vector<8x16xf32>
    %176 = vector.broadcast %156 : vector<1x16xf32> to vector<8x16xf32>
    %177 = arith.mulf %175, %176 : vector<8x16xf32>
    %178 = vector.broadcast %157 : vector<1x16xf32> to vector<8x16xf32>
    %179 = arith.addf %177, %178 : vector<8x16xf32>
    %cst_84 = arith.constant 0.000000e+00 : f32
    %180 = vector.broadcast %cst_84 : f32 to vector<8x16xf32>
    %181 = arith.maximumf %179, %180 : vector<8x16xf32>
    %182 = arith.truncf %181 : vector<8x16xf32> to vector<8x16xbf16>
    %c0_85 = arith.constant 0 : index
    %c0_86 = arith.constant 0 : index
    %183 = vector.load %arg21[%c0_85, %c0_86] : memref<16x64xbf16, #tpu.memory_space<vmem>>, vector<16x64xbf16>
    %cst_87 = arith.constant dense<0.000000e+00> : vector<8x64xf32>
    %184 = tpu.matmul %182, %183, %cst_87 {dimension_numbers = #tpu.dot_dimension_numbers<[1], [0], [0], [1], [0, 0, 1, 1], [], []>} : vector<8x16xbf16>, vector<16x64xbf16>, vector<8x64xf32> -> vector<8x64xf32>
    %c0_88 = arith.constant 0 : index
    %c0_89 = arith.constant 0 : index
    %185 = vector.load %arg22[%c0_88, %c0_89] : memref<1x64xf32, #tpu.memory_space<vmem>>, vector<1x64xf32>
    %c0_90 = arith.constant 0 : index
    %c0_91 = arith.constant 0 : index
    %186 = vector.load %arg23[%c0_90, %c0_91] : memref<1x64xf32, #tpu.memory_space<vmem>>, vector<1x64xf32>
    %cst_92 = arith.constant dense<0.000000e+00> : vector<64xf32>
    %187 = vector.multi_reduction <add>, %184, %cst_92 [0] : vector<8x64xf32> to vector<64xf32>
    %188 = vector.shape_cast %187 : vector<64xf32> to vector<1x64xf32>
    %cst_93 = arith.constant 8.000000e+00 : f32
    %189 = vector.broadcast %cst_93 : f32 to vector<1x64xf32>
    %190 = arith.divf %188, %189 : vector<1x64xf32>
    %191 = vector.broadcast %190 : vector<1x64xf32> to vector<8x64xf32>
    %192 = arith.subf %184, %191 : vector<8x64xf32>
    %193 = arith.mulf %192, %192 : vector<8x64xf32>
    %cst_94 = arith.constant dense<0.000000e+00> : vector<64xf32>
    %194 = vector.multi_reduction <add>, %193, %cst_94 [0] : vector<8x64xf32> to vector<64xf32>
    %195 = vector.shape_cast %194 : vector<64xf32> to vector<1x64xf32>
    %cst_95 = arith.constant 8.000000e+00 : f32
    %196 = vector.broadcast %cst_95 : f32 to vector<1x64xf32>
    %197 = arith.divf %195, %196 : vector<1x64xf32>
    %198 = vector.broadcast %190 : vector<1x64xf32> to vector<8x64xf32>
    %199 = arith.subf %184, %198 : vector<8x64xf32>
    %cst_96 = arith.constant 9.99999974E-6 : f32
    %200 = vector.broadcast %cst_96 : f32 to vector<1x64xf32>
    %201 = arith.addf %197, %200 : vector<1x64xf32>
    %202 = math.rsqrt %201 : vector<1x64xf32>
    %203 = vector.broadcast %202 : vector<1x64xf32> to vector<8x64xf32>
    %204 = arith.mulf %199, %203 : vector<8x64xf32>
    %205 = vector.broadcast %185 : vector<1x64xf32> to vector<8x64xf32>
    %206 = arith.mulf %204, %205 : vector<8x64xf32>
    %207 = vector.broadcast %186 : vector<1x64xf32> to vector<8x64xf32>
    %208 = arith.addf %206, %207 : vector<8x64xf32>
    %cst_97 = arith.constant 0.000000e+00 : f32
    %209 = vector.broadcast %cst_97 : f32 to vector<8x64xf32>
    %210 = arith.maximumf %208, %209 : vector<8x64xf32>
    %211 = arith.truncf %210 : vector<8x64xf32> to vector<8x64xbf16>
    %c0_98 = arith.constant 0 : index
    %c0_99 = arith.constant 0 : index
    %212 = vector.load %arg24[%c0_98, %c0_99] : memref<64x128xbf16, #tpu.memory_space<vmem>>, vector<64x128xbf16>
    %cst_100 = arith.constant dense<0.000000e+00> : vector<8x128xf32>
    %213 = tpu.matmul %211, %212, %cst_100 {dimension_numbers = #tpu.dot_dimension_numbers<[1], [0], [0], [1], [0, 0, 1, 1], [], []>} : vector<8x64xbf16>, vector<64x128xbf16>, vector<8x128xf32> -> vector<8x128xf32>
    %c0_101 = arith.constant 0 : index
    %c0_102 = arith.constant 0 : index
    %214 = vector.load %arg25[%c0_101, %c0_102] : memref<1x128xf32, #tpu.memory_space<vmem>>, vector<1x128xf32>
    %c0_103 = arith.constant 0 : index
    %c0_104 = arith.constant 0 : index
    %215 = vector.load %arg26[%c0_103, %c0_104] : memref<1x128xf32, #tpu.memory_space<vmem>>, vector<1x128xf32>
    %cst_105 = arith.constant dense<0.000000e+00> : vector<128xf32>
    %216 = vector.multi_reduction <add>, %213, %cst_105 [0] : vector<8x128xf32> to vector<128xf32>
    %217 = vector.shape_cast %216 : vector<128xf32> to vector<1x128xf32>
    %cst_106 = arith.constant 8.000000e+00 : f32
    %218 = vector.broadcast %cst_106 : f32 to vector<1x128xf32>
    %219 = arith.divf %217, %218 : vector<1x128xf32>
    %220 = vector.broadcast %219 : vector<1x128xf32> to vector<8x128xf32>
    %221 = arith.subf %213, %220 : vector<8x128xf32>
    %222 = arith.mulf %221, %221 : vector<8x128xf32>
    %cst_107 = arith.constant dense<0.000000e+00> : vector<128xf32>
    %223 = vector.multi_reduction <add>, %222, %cst_107 [0] : vector<8x128xf32> to vector<128xf32>
    %224 = vector.shape_cast %223 : vector<128xf32> to vector<1x128xf32>
    %cst_108 = arith.constant 8.000000e+00 : f32
    %225 = vector.broadcast %cst_108 : f32 to vector<1x128xf32>
    %226 = arith.divf %224, %225 : vector<1x128xf32>
    %227 = vector.broadcast %219 : vector<1x128xf32> to vector<8x128xf32>
    %228 = arith.subf %213, %227 : vector<8x128xf32>
    %cst_109 = arith.constant 9.99999974E-6 : f32
    %229 = vector.broadcast %cst_109 : f32 to vector<1x128xf32>
    %230 = arith.addf %226, %229 : vector<1x128xf32>
    %231 = math.rsqrt %230 : vector<1x128xf32>
    %232 = vector.broadcast %231 : vector<1x128xf32> to vector<8x128xf32>
    %233 = arith.mulf %228, %232 : vector<8x128xf32>
    %234 = vector.broadcast %214 : vector<1x128xf32> to vector<8x128xf32>
    %235 = arith.mulf %233, %234 : vector<8x128xf32>
    %236 = vector.broadcast %215 : vector<1x128xf32> to vector<8x128xf32>
    %237 = arith.addf %235, %236 : vector<8x128xf32>
    %cst_110 = arith.constant 0.000000e+00 : f32
    %238 = vector.broadcast %cst_110 : f32 to vector<8x128xf32>
    %239 = arith.maximumf %237, %238 : vector<8x128xf32>
    %240 = arith.truncf %239 : vector<8x128xf32> to vector<8x128xbf16>
    %c0_111 = arith.constant 0 : index
    %c0_112 = arith.constant 0 : index
    %241 = vector.load %arg27[%c0_111, %c0_112] : memref<128x256xbf16, #tpu.memory_space<vmem>>, vector<128x256xbf16>
    %cst_113 = arith.constant dense<0.000000e+00> : vector<8x256xf32>
    %242 = tpu.matmul %240, %241, %cst_113 {dimension_numbers = #tpu.dot_dimension_numbers<[1], [0], [0], [1], [0, 0, 1, 1], [], []>} : vector<8x128xbf16>, vector<128x256xbf16>, vector<8x256xf32> -> vector<8x256xf32>
    %c0_114 = arith.constant 0 : index
    %c0_115 = arith.constant 0 : index
    %243 = vector.load %arg28[%c0_114, %c0_115] : memref<1x256xf32, #tpu.memory_space<vmem>>, vector<1x256xf32>
    %c0_116 = arith.constant 0 : index
    %c0_117 = arith.constant 0 : index
    %244 = vector.load %arg29[%c0_116, %c0_117] : memref<1x256xf32, #tpu.memory_space<vmem>>, vector<1x256xf32>
    %cst_118 = arith.constant dense<0.000000e+00> : vector<256xf32>
    %245 = vector.multi_reduction <add>, %242, %cst_118 [0] : vector<8x256xf32> to vector<256xf32>
    %246 = vector.shape_cast %245 : vector<256xf32> to vector<1x256xf32>
    %cst_119 = arith.constant 8.000000e+00 : f32
    %247 = vector.broadcast %cst_119 : f32 to vector<1x256xf32>
    %248 = arith.divf %246, %247 : vector<1x256xf32>
    %249 = vector.broadcast %248 : vector<1x256xf32> to vector<8x256xf32>
    %250 = arith.subf %242, %249 : vector<8x256xf32>
    %251 = arith.mulf %250, %250 : vector<8x256xf32>
    %cst_120 = arith.constant dense<0.000000e+00> : vector<256xf32>
    %252 = vector.multi_reduction <add>, %251, %cst_120 [0] : vector<8x256xf32> to vector<256xf32>
    %253 = vector.shape_cast %252 : vector<256xf32> to vector<1x256xf32>
    %cst_121 = arith.constant 8.000000e+00 : f32
    %254 = vector.broadcast %cst_121 : f32 to vector<1x256xf32>
    %255 = arith.divf %253, %254 : vector<1x256xf32>
    %256 = vector.broadcast %248 : vector<1x256xf32> to vector<8x256xf32>
    %257 = arith.subf %242, %256 : vector<8x256xf32>
    %cst_122 = arith.constant 9.99999974E-6 : f32
    %258 = vector.broadcast %cst_122 : f32 to vector<1x256xf32>
    %259 = arith.addf %255, %258 : vector<1x256xf32>
    %260 = math.rsqrt %259 : vector<1x256xf32>
    %261 = vector.broadcast %260 : vector<1x256xf32> to vector<8x256xf32>
    %262 = arith.mulf %257, %261 : vector<8x256xf32>
    %263 = vector.broadcast %243 : vector<1x256xf32> to vector<8x256xf32>
    %264 = arith.mulf %262, %263 : vector<8x256xf32>
    %265 = vector.broadcast %244 : vector<1x256xf32> to vector<8x256xf32>
    %266 = arith.addf %264, %265 : vector<8x256xf32>
    %cst_123 = arith.constant 0.000000e+00 : f32
    %267 = vector.broadcast %cst_123 : f32 to vector<8x256xf32>
    %268 = arith.maximumf %266, %267 : vector<8x256xf32>
    %269 = arith.truncf %268 : vector<8x256xf32> to vector<8x256xbf16>
    %c0_124 = arith.constant 0 : index
    %c0_125 = arith.constant 0 : index
    %270 = vector.load %arg30[%c0_124, %c0_125] : memref<256x512xbf16, #tpu.memory_space<vmem>>, vector<256x512xbf16>
    %cst_126 = arith.constant dense<0.000000e+00> : vector<8x512xf32>
    %271 = tpu.matmul %269, %270, %cst_126 {dimension_numbers = #tpu.dot_dimension_numbers<[1], [0], [0], [1], [0, 0, 1, 1], [], []>} : vector<8x256xbf16>, vector<256x512xbf16>, vector<8x512xf32> -> vector<8x512xf32>
    %c0_127 = arith.constant 0 : index
    %c0_128 = arith.constant 0 : index
    %272 = vector.load %arg31[%c0_127, %c0_128] : memref<1x512xf32, #tpu.memory_space<vmem>>, vector<1x512xf32>
    %c0_129 = arith.constant 0 : index
    %c0_130 = arith.constant 0 : index
    %273 = vector.load %arg32[%c0_129, %c0_130] : memref<1x512xf32, #tpu.memory_space<vmem>>, vector<1x512xf32>
    %cst_131 = arith.constant dense<0.000000e+00> : vector<512xf32>
    %274 = vector.multi_reduction <add>, %271, %cst_131 [0] : vector<8x512xf32> to vector<512xf32>
    %275 = vector.shape_cast %274 : vector<512xf32> to vector<1x512xf32>
    %cst_132 = arith.constant 8.000000e+00 : f32
    %276 = vector.broadcast %cst_132 : f32 to vector<1x512xf32>
    %277 = arith.divf %275, %276 : vector<1x512xf32>
    %278 = vector.broadcast %277 : vector<1x512xf32> to vector<8x512xf32>
    %279 = arith.subf %271, %278 : vector<8x512xf32>
    %280 = arith.mulf %279, %279 : vector<8x512xf32>
    %cst_133 = arith.constant dense<0.000000e+00> : vector<512xf32>
    %281 = vector.multi_reduction <add>, %280, %cst_133 [0] : vector<8x512xf32> to vector<512xf32>
    %282 = vector.shape_cast %281 : vector<512xf32> to vector<1x512xf32>
    %cst_134 = arith.constant 8.000000e+00 : f32
    %283 = vector.broadcast %cst_134 : f32 to vector<1x512xf32>
    %284 = arith.divf %282, %283 : vector<1x512xf32>
    %285 = vector.broadcast %277 : vector<1x512xf32> to vector<8x512xf32>
    %286 = arith.subf %271, %285 : vector<8x512xf32>
    %cst_135 = arith.constant 9.99999974E-6 : f32
    %287 = vector.broadcast %cst_135 : f32 to vector<1x512xf32>
    %288 = arith.addf %284, %287 : vector<1x512xf32>
    %289 = math.rsqrt %288 : vector<1x512xf32>
    %290 = vector.broadcast %289 : vector<1x512xf32> to vector<8x512xf32>
    %291 = arith.mulf %286, %290 : vector<8x512xf32>
    %292 = vector.broadcast %272 : vector<1x512xf32> to vector<8x512xf32>
    %293 = arith.mulf %291, %292 : vector<8x512xf32>
    %294 = vector.broadcast %273 : vector<1x512xf32> to vector<8x512xf32>
    %295 = arith.addf %293, %294 : vector<8x512xf32>
    %cst_136 = arith.constant 0.000000e+00 : f32
    %296 = vector.broadcast %cst_136 : f32 to vector<8x512xf32>
    %297 = arith.maximumf %295, %296 : vector<8x512xf32>
    %298 = arith.truncf %297 : vector<8x512xf32> to vector<8x512xbf16>
    %c0_137 = arith.constant 0 : index
    %c0_138 = arith.constant 0 : index
    %299 = vector.load %arg33[%c0_137, %c0_138] : memref<512x896xbf16, #tpu.memory_space<vmem>>, vector<512x896xbf16>
    %cst_139 = arith.constant dense<0.000000e+00> : vector<8x896xf32>
    %300 = tpu.matmul %298, %299, %cst_139 {dimension_numbers = #tpu.dot_dimension_numbers<[1], [0], [0], [1], [0, 0, 1, 1], [], []>} : vector<8x512xbf16>, vector<512x896xbf16>, vector<8x896xf32> -> vector<8x896xf32>
    %c0_140 = arith.constant 0 : index
    %c0_141 = arith.constant 0 : index
    %301 = vector.load %arg34[%c0_140, %c0_141] : memref<1x896xf32, #tpu.memory_space<vmem>>, vector<1x896xf32>
    %302 = vector.broadcast %301 : vector<1x896xf32> to vector<8x896xf32>
    %303 = arith.addf %300, %302 : vector<8x896xf32>
    %304 = arith.negf %303 : vector<8x896xf32>
    %305 = math.exp %304 : vector<8x896xf32>
    %cst_142 = arith.constant 1.000000e+00 : f32
    %306 = vector.broadcast %cst_142 : f32 to vector<8x896xf32>
    %307 = arith.addf %306, %305 : vector<8x896xf32>
    %308 = arith.divf %306, %307 : vector<8x896xf32>
    %c0_143 = arith.constant 0 : index
    %c0_144 = arith.constant 0 : index
    %309 = vector.load %arg36[%c0_143, %c0_144] : memref<8x896xf32, #tpu.memory_space<vmem>>, vector<8x896xf32>
    tpu.vector_store %arg36[%c0_143, %c0_144], %308 {strides = array<i32>} : memref<8x896xf32, #tpu.memory_space<vmem>>, vector<8x896xf32>,
    return
  }
}

</mosaic_0001>

<llo_original>
// kernel: autoencoder_forward.1
$region0: #{autoencoder_forward.1}
  #allocation0 [shape = 'u32[]', space=smem, size = 0x4, offset = 0x4, fixed_abs, tag = 'smem constant byte address 0x4 - core index']
  #allocation1 [shape = 'u32[144,128]{1,0:T(1,128)}', space=vmem, size = 0x12000, scoped, tag = 'internal scratch']
  %s0 = inlined_call_operand.smem [shape: u32[37], index: -1, kind: input, shape index: {}]
  %s1 = sld [smem:[%s0]]
  %s2 = scalar_lea.smem %s0, 1
  %s3 = sld [smem:[%s2]]
  %s4 = scalar_lea.smem %s0, 2
  %s5 = sld [smem:[%s4]]
  %s6 = scalar_lea.smem %s0, 3
  %s7 = sld [smem:[%s6]]
  %s8 = scalar_lea.smem %s0, 4
  %s9 = sld [smem:[%s8]]
  %s10 = scalar_lea.smem %s0, 5
  %s11 = sld [smem:[%s10]]
  %s12 = scalar_lea.smem %s0, 6
  %s13 = sld [smem:[%s12]]
  %s14 = scalar_lea.smem %s0, 7
  %s15 = sld [smem:[%s14]]
  %s16 = scalar_lea.smem %s0, 8
  %s17 = sld [smem:[%s16]]
  %s18 = scalar_lea.smem %s0, 9
  %s19 = sld [smem:[%s18]]
  %s20 = scalar_lea.smem %s0, 10
  %s21 = sld [smem:[%s20]]
  %s22 = scalar_lea.smem %s0, 11
  %s23 = sld [smem:[%s22]]
  %s24 = scalar_lea.smem %s0, 12
  %s25 = sld [smem:[%s24]]
  %s26 = scalar_lea.smem %s0, 13
  %s27 = sld [smem:[%s26]]
  %s28 = scalar_lea.smem %s0, 14
  %s29 = sld [smem:[%s28]]
  %s30 = scalar_lea.smem %s0, 15
  %s31 = sld [smem:[%s30]]
  %s32 = scalar_lea.smem %s0, 16
  %s33 = sld [smem:[%s32]]
  %s34 = scalar_lea.smem %s0, 17
  %s35 = sld [smem:[%s34]]
  %s36 = scalar_lea.smem %s0, 18
  %s37 = sld [smem:[%s36]]
  %s38 = scalar_lea.smem %s0, 19
  %s39 = sld [smem:[%s38]]
  %s40 = scalar_lea.smem %s0, 20
  %s41 = sld [smem:[%s40]]
  %s42 = scalar_lea.smem %s0, 21
  %s43 = sld [smem:[%s42]]
  %s44 = scalar_lea.smem %s0, 22
  %s45 = sld [smem:[%s44]]
  %s46 = scalar_lea.smem %s0, 23
  %s47 = sld [smem:[%s46]]
  %s48 = scalar_lea.smem %s0, 24
  %s49 = sld [smem:[%s48]]
  %s50 = scalar_lea.smem %s0, 25
  %s51 = sld [smem:[%s50]]
  %s52 = scalar_lea.smem %s0, 26
  %s53 = sld [smem:[%s52]]
  %s54 = scalar_lea.smem %s0, 27
  %s55 = sld [smem:[%s54]]
  %s56 = scalar_lea.smem %s0, 28
  %s57 = sld [smem:[%s56]]
  %s58 = scalar_lea.smem %s0, 29
  %s59 = sld [smem:[%s58]]
  %s60 = scalar_lea.smem %s0, 30
  %s61 = sld [smem:[%s60]]
  %s62 = scalar_lea.smem %s0, 31
  %s63 = sld [smem:[%s62]]
  %s64 = scalar_lea.smem %s0, 32
  %s65 = sld [smem:[%s64]]
  %s66 = scalar_lea.smem %s0, 33
  %s67 = sld [smem:[%s66]]
  %s68 = scalar_lea.smem %s0, 34
  %s69 = sld [smem:[%s68]]
  %s70 = scalar_lea.smem %s0, 35
  %s71 = sld [smem:[%s70]]
  %s72 = scalar_lea.smem %s0, 36
  %s73 = sld [smem:[%s72]]
  %74 = xla_tuple %s71, %s73
  %s75 = sld [smem:[#allocation0]]
  $region250: #{autoencoder_forward.1} parent=0
    _
  %s77 = ssub.s32 1, %s75
  %s78 = scalar_select 0, %s77, %s75
  $region1: #{autoencoder_forward.1} parent=0
    #allocation2 [shape = 'u8[802816]{0}', space=vmem, size = 0xc4000, scoped, tag = 'input window, operand 1, single buffered']
    #allocation3 [shape = 's32[1]{0}', space=sflag, size = 0x4, scoped, tag = 'scoped memory for autoencoder_forward.1']
    #allocation4 [shape = 's32[1]{0}', space=sflag, size = 0x4, scoped, tag = 'scoped memory for autoencoder_forward.1']
    #allocation5 [shape = 'u8[2048]{0}', space=vmem, size = 0x800, scoped, tag = 'input window, operand 2, single buffered']
    #allocation6 [shape = 's32[1]{0}', space=sflag, size = 0x4, scoped, tag = 'scoped memory for autoencoder_forward.1']
    #allocation7 [shape = 'u8[2048]{0}', space=vmem, size = 0x800, scoped, tag = 'input window, operand 3, single buffered']
    #allocation8 [shape = 'u8[262144]{0}', space=vmem, size = 0x40000, scoped, tag = 'input window, operand 4, single buffered']
    #allocation9 [shape = 's32[1]{0}', space=sflag, size = 0x4, scoped, tag = 'scoped memory for autoencoder_forward.1']
    #allocation10 [shape = 'u8[1024]{0}', space=vmem, size = 0x400, scoped, tag = 'input window, operand 5, single buffered']
    #allocation11 [shape = 'u8[1024]{0}', space=vmem, size = 0x400, scoped, tag = 'input window, operand 6, single buffered']
    #allocation12 [shape = 's32[1]{0}', space=sflag, size = 0x4, scoped, tag = 'scoped memory for autoencoder_forward.1']
    #allocation13 [shape = 'u8[512]{0}', space=vmem, size = 0x400, scoped, tag = 'input window, operand 9, single buffered']
    #allocation14 [shape = 'u8[512]{0}', space=vmem, size = 0x400, scoped, tag = 'input window, operand 11, single buffered']
    #allocation15 [shape = 's32[1]{0}', space=sflag, size = 0x4, scoped, tag = 'scoped memory for autoencoder_forward.1']
    #allocation16 [shape = 'u8[512]{0}', space=vmem, size = 0x400, scoped, tag = 'input window, operand 12, single buffered']
    #allocation17 [shape = 'u8[512]{0}', space=vmem, size = 0x400, scoped, tag = 'input window, operand 14, single buffered']
    #allocation18 [shape = 's32[1]{0}', space=sflag, size = 0x4, scoped, tag = 'scoped memory for autoencoder_forward.1']
    #allocation19 [shape = 'u8[512]{0}', space=vmem, size = 0x400, scoped, tag = 'input window, operand 15, single buffered']
    #allocation20 [shape = 'u8[512]{0}', space=vmem, size = 0x400, scoped, tag = 'input window, operand 17, single buffered']
    #allocation21 [shape = 's32[1]{0}', space=sflag, size = 0x4, scoped, tag = 'scoped memory for autoencoder_forward.1']
    #allocation22 [shape = 'u8[512]{0}', space=vmem, size = 0x400, scoped, tag = 'input window, operand 19, single buffered']
    #allocation23 [shape = 'u8[512]{0}', space=vmem, size = 0x400, scoped, tag = 'input window, operand 20, single buffered']
    #allocation24 [shape = 's32[1]{0}', space=sflag, size = 0x4, scoped, tag = 'scoped memory for autoencoder_forward.1']
    #allocation25 [shape = 'u8[512]{0}', space=vmem, size = 0x400, scoped, tag = 'input window, operand 22, single buffered']
    #allocation26 [shape = 'u8[512]{0}', space=vmem, size = 0x400, scoped, tag = 'input window, operand 23, single buffered']
    #allocation27 [shape = 's32[1]{0}', space=sflag, size = 0x4, scoped, tag = 'scoped memory for autoencoder_forward.1']
    #allocation28 [shape = 'u8[512]{0}', space=vmem, size = 0x400, scoped, tag = 'input window, operand 25, single buffered']
    #allocation29 [shape = 'u8[512]{0}', space=vmem, size = 0x400, scoped, tag = 'input window, operand 26, single buffered']
    #allocation30 [shape = 's32[1]{0}', space=sflag, size = 0x4, scoped, tag = 'scoped memory for autoencoder_forward.1']
    #allocation31 [shape = 'u8[1024]{0}', space=vmem, size = 0x400, scoped, tag = 'input window, operand 28, single buffered']
    #allocation32 [shape = 'u8[1024]{0}', space=vmem, size = 0x400, scoped, tag = 'input window, operand 29, single buffered']
    #allocation33 [shape = 's32[1]{0}', space=sflag, size = 0x4, scoped, tag = 'scoped memory for autoencoder_forward.1']
    #allocation34 [shape = 'u8[262144]{0}', space=vmem, size = 0x40000, scoped, tag = 'input window, operand 30, single buffered']
    #allocation35 [shape = 'u8[2048]{0}', space=vmem, size = 0x800, scoped, tag = 'input window, operand 32, single buffered']
    #allocation36 [shape = 's32[1]{0}', space=sflag, size = 0x4, scoped, tag = 'scoped memory for autoencoder_forward.1']
    #allocation37 [shape = 'u8[917504]{0}', space=vmem, size = 0xe0000, scoped, tag = 'input window, operand 33, single buffered']
    #allocation38 [shape = 'u8[28672]{0}', space=vmem, size = 0x7000, scoped, tag = 'output window, operand 1, single buffered']
    %79 = vsyncpa [#allocation3], 0
    %80 = vsyncpa [#allocation6], 0
    %81 = vsyncpa [#allocation9], 0
    %82 = vsyncpa [#allocation12], 0
    %83 = vsyncpa [#allocation15], 0
    %84 = vsyncpa [#allocation18], 0
    %85 = vsyncpa [#allocation21], 0
    %86 = vsyncpa [#allocation24], 0
    %87 = vsyncpa [#allocation27], 0
    %88 = vsyncpa [#allocation30], 0
    %89 = vsyncpa [#allocation33], 0
    %90 = vsyncpa [#allocation36], 0
    %91 = vsyncpa [#allocation4], 0
    // Predicated region
    $region2: #{autoencoder_forward.1} parent=1 // pred_check
      _
    $region3: #{autoencoder_forward.1} parent=1 // pred_check_branch
      %93 = sbr.rel (0) target = $region5
    $region4: #{autoencoder_forward.1} parent=1 // pred_region
      _
    $region5: #{autoencoder_forward.1} parent=1 // pred_fallthru
      _
    // Predicated region
    $region6: #{autoencoder_forward.1} parent=1 // pred_check
      _
    $region7: #{autoencoder_forward.1} parent=1 // pred_check_branch
      %95 = sbr.rel (0) target = $region9
    $region8: #{autoencoder_forward.1} parent=1 // pred_region
      %s97 = ssub.s32 25088, 25088
      %98 = vsyncadd [#allocation3], %s97
      %s99 = sshll.u32 [#allocation2], 4
      %s100 = int_to_ptr.vmem [resolvable:$true] %s99
      %105 = dma.hbm_to_vmem [thread:$0]  %s3, 25088, %s100, [#allocation3], 256, 256, 16
    $region9: #{autoencoder_forward.1} parent=1 // pred_fallthru
      _
    // Predicated region
    $region10: #{autoencoder_forward.1} parent=1 // pred_check
      _
    $region11: #{autoencoder_forward.1} parent=1 // pred_check_branch
      %107 = sbr.rel (0) target = $region13
    $region12: #{autoencoder_forward.1} parent=1 // pred_region
      %s109 = ssub.s32 64, 64
      %110 = vsyncadd [#allocation6], %s109
      %s112 = sshll.u32 [#allocation5], 4
      %s113 = int_to_ptr.vmem [resolvable:$true] %s112
      %115 = dma.hbm_to_vmem [thread:$0]  %s5, 64, %s113, [#allocation6]
    $region13: #{autoencoder_forward.1} parent=1 // pred_fallthru
      _
    // Predicated region
    $region14: #{autoencoder_forward.1} parent=1 // pred_check
      _
    $region15: #{autoencoder_forward.1} parent=1 // pred_check_branch
      %117 = sbr.rel (0) target = $region17
    $region16: #{autoencoder_forward.1} parent=1 // pred_region
      %s119 = ssub.s32 64, 64
      %120 = vsyncadd [#allocation6], %s119
      %s122 = sshll.u32 [#allocation7], 4
      %s123 = int_to_ptr.vmem [resolvable:$true] %s122
      %125 = dma.hbm_to_vmem [thread:$0]  %s7, 64, %s123, [#allocation6]
    $region17: #{autoencoder_forward.1} parent=1 // pred_fallthru
      _
    // Predicated region
    $region18: #{autoencoder_forward.1} parent=1 // pred_check
      _
    $region19: #{autoencoder_forward.1} parent=1 // pred_check_branch
      %127 = sbr.rel (0) target = $region21
    $region20: #{autoencoder_forward.1} parent=1 // pred_region
      %s129 = ssub.s32 8192, 8192
      %130 = vsyncadd [#allocation9], %s129
      %s131 = sshll.u32 [#allocation8], 4
      %s132 = int_to_ptr.vmem [resolvable:$true] %s131
      %137 = dma.hbm_to_vmem [thread:$0]  %s9, 8192, %s132, [#allocation9], 128, 128, 8
    $region21: #{autoencoder_forward.1} parent=1 // pred_fallthru
      _
    // Predicated region
    $region22: #{autoencoder_forward.1} parent=1 // pred_check
      _
    $region23: #{autoencoder_forward.1} parent=1 // pred_check_branch
      %139 = sbr.rel (0) target = $region25
    $region24: #{autoencoder_forward.1} parent=1 // pred_region
      %s141 = ssub.s32 32, 32
      %142 = vsyncadd [#allocation9], %s141
      %s144 = sshll.u32 [#allocation10], 4
      %s145 = int_to_ptr.vmem [resolvable:$true] %s144
      %147 = dma.hbm_to_vmem [thread:$0]  %s11, 32, %s145, [#allocation9]
    $region25: #{autoencoder_forward.1} parent=1 // pred_fallthru
      _
    // Predicated region
    $region26: #{autoencoder_forward.1} parent=1 // pred_check
      _
    $region27: #{autoencoder_forward.1} parent=1 // pred_check_branch
      %149 = sbr.rel (0) target = $region29
    $region28: #{autoencoder_forward.1} parent=1 // pred_region
      %s151 = ssub.s32 32, 32
      %152 = vsyncadd [#allocation12], %s151
      %s154 = sshll.u32 [#allocation11], 4
      %s155 = int_to_ptr.vmem [resolvable:$true] %s154
      %157 = dma.hbm_to_vmem [thread:$0]  %s13, 32, %s155, [#allocation12]
    $region29: #{autoencoder_forward.1} parent=1 // pred_fallthru
      _
    // Predicated region
    $region30: #{autoencoder_forward.1} parent=1 // pred_check
      _
    $region31: #{autoencoder_forward.1} parent=1 // pred_check_branch
      %159 = sbr.rel (0) target = $region33
    $region32: #{autoencoder_forward.1} parent=1 // pred_region
      _
    $region33: #{autoencoder_forward.1} parent=1 // pred_fallthru
      _
    // Predicated region
    $region34: #{autoencoder_forward.1} parent=1 // pred_check
      _
    $region35: #{autoencoder_forward.1} parent=1 // pred_check_branch
      %161 = sbr.rel (0) target = $region37
    $region36: #{autoencoder_forward.1} parent=1 // pred_region
      _
    $region37: #{autoencoder_forward.1} parent=1 // pred_fallthru
      _
    // Predicated region
    $region38: #{autoencoder_forward.1} parent=1 // pred_check
      _
    $region39: #{autoencoder_forward.1} parent=1 // pred_check_branch
      %163 = sbr.rel (0) target = $region41
    $region40: #{autoencoder_forward.1} parent=1 // pred_region
      %s165 = ssub.s32 16, 16
      %166 = vsyncadd [#allocation12], %s165
      %s168 = sshll.u32 [#allocation13], 4
      %s169 = int_to_ptr.vmem [resolvable:$true] %s168
      %171 = dma.hbm_to_vmem [thread:$0]  %s19, 16, %s169, [#allocation12]
    $region41: #{autoencoder_forward.1} parent=1 // pred_fallthru
      _
    // Predicated region
    $region42: #{autoencoder_forward.1} parent=1 // pred_check
      _
    $region43: #{autoencoder_forward.1} parent=1 // pred_check_branch
      %173 = sbr.rel (0) target = $region45
    $region44: #{autoencoder_forward.1} parent=1 // pred_region
      _
    $region45: #{autoencoder_forward.1} parent=1 // pred_fallthru
      _
    // Predicated region
    $region46: #{autoencoder_forward.1} parent=1 // pred_check
      _
    $region47: #{autoencoder_forward.1} parent=1 // pred_check_branch
      %175 = sbr.rel (0) target = $region49
    $region48: #{autoencoder_forward.1} parent=1 // pred_region
      %s177 = ssub.s32 16, 16
      %178 = vsyncadd [#allocation15], %s177
      %s180 = sshll.u32 [#allocation14], 4
      %s181 = int_to_ptr.vmem [resolvable:$true] %s180
      %183 = dma.hbm_to_vmem [thread:$0]  %s23, 16, %s181, [#allocation15]
    $region49: #{autoencoder_forward.1} parent=1 // pred_fallthru
      _
    // Predicated region
    $region50: #{autoencoder_forward.1} parent=1 // pred_check
      _
    $region51: #{autoencoder_forward.1} parent=1 // pred_check_branch
      %185 = sbr.rel (0) target = $region53
    $region52: #{autoencoder_forward.1} parent=1 // pred_region
      %s187 = ssub.s32 16, 16
      %188 = vsyncadd [#allocation15], %s187
      %s190 = sshll.u32 [#allocation16], 4
      %s191 = int_to_ptr.vmem [resolvable:$true] %s190
      %193 = dma.hbm_to_vmem [thread:$0]  %s25, 16, %s191, [#allocation15]
    $region53: #{autoencoder_forward.1} parent=1 // pred_fallthru
      _
    // Predicated region
    $region54: #{autoencoder_forward.1} parent=1 // pred_check
      _
    $region55: #{autoencoder_forward.1} parent=1 // pred_check_branch
      %195 = sbr.rel (0) target = $region57
    $region56: #{autoencoder_forward.1} parent=1 // pred_region
      _
    $region57: #{autoencoder_forward.1} parent=1 // pred_fallthru
      _
    // Predicated region
    $region58: #{autoencoder_forward.1} parent=1 // pred_check
      _
    $region59: #{autoencoder_forward.1} parent=1 // pred_check_branch
      %197 = sbr.rel (0) target = $region61
    $region60: #{autoencoder_forward.1} parent=1 // pred_region
      %s199 = ssub.s32 16, 16
      %200 = vsyncadd [#allocation18], %s199
      %s202 = sshll.u32 [#allocation17], 4
      %s203 = int_to_ptr.vmem [resolvable:$true] %s202
      %205 = dma.hbm_to_vmem [thread:$0]  %s29, 16, %s203, [#allocation18]
    $region61: #{autoencoder_forward.1} parent=1 // pred_fallthru
      _
    // Predicated region
    $region62: #{autoencoder_forward.1} parent=1 // pred_check
      _
    $region63: #{autoencoder_forward.1} parent=1 // pred_check_branch
      %207 = sbr.rel (0) target = $region65
    $region64: #{autoencoder_forward.1} parent=1 // pred_region
      %s209 = ssub.s32 16, 16
      %210 = vsyncadd [#allocation18], %s209
      %s212 = sshll.u32 [#allocation19], 4
      %s213 = int_to_ptr.vmem [resolvable:$true] %s212
      %215 = dma.hbm_to_vmem [thread:$0]  %s31, 16, %s213, [#allocation18]
    $region65: #{autoencoder_forward.1} parent=1 // pred_fallthru
      _
    // Predicated region
    $region66: #{autoencoder_forward.1} parent=1 // pred_check
      _
    $region67: #{autoencoder_forward.1} parent=1 // pred_check_branch
      %217 = sbr.rel (0) target = $region69
    $region68: #{autoencoder_forward.1} parent=1 // pred_region
      _
    $region69: #{autoencoder_forward.1} parent=1 // pred_fallthru
      _
    // Predicated region
    $region70: #{autoencoder_forward.1} parent=1 // pred_check
      _
    $region71: #{autoencoder_forward.1} parent=1 // pred_check_branch
      %219 = sbr.rel (0) target = $region73
    $region72: #{autoencoder_forward.1} parent=1 // pred_region
      %s221 = ssub.s32 16, 16
      %222 = vsyncadd [#allocation21], %s221
      %s224 = sshll.u32 [#allocation20], 4
      %s225 = int_to_ptr.vmem [resolvable:$true] %s224
      %227 = dma.hbm_to_vmem [thread:$0]  %s35, 16, %s225, [#allocation21]
    $region73: #{autoencoder_forward.1} parent=1 // pred_fallthru
      _
    // Predicated region
    $region74: #{autoencoder_forward.1} parent=1 // pred_check
      _
    $region75: #{autoencoder_forward.1} parent=1 // pred_check_branch
      %229 = sbr.rel (0) target = $region77
    $region76: #{autoencoder_forward.1} parent=1 // pred_region
      _
    $region77: #{autoencoder_forward.1} parent=1 // pred_fallthru
      _
    // Predicated region
    $region78: #{autoencoder_forward.1} parent=1 // pred_check
      _
    $region79: #{autoencoder_forward.1} parent=1 // pred_check_branch
      %231 = sbr.rel (0) target = $region81
    $region80: #{autoencoder_forward.1} parent=1 // pred_region
      %s233 = ssub.s32 16, 16
      %234 = vsyncadd [#allocation21], %s233
      %s236 = sshll.u32 [#allocation22], 4
      %s237 = int_to_ptr.vmem [resolvable:$true] %s236
      %239 = dma.hbm_to_vmem [thread:$0]  %s39, 16, %s237, [#allocation21]
    $region81: #{autoencoder_forward.1} parent=1 // pred_fallthru
      _
    // Predicated region
    $region82: #{autoencoder_forward.1} parent=1 // pred_check
      _
    $region83: #{autoencoder_forward.1} parent=1 // pred_check_branch
      %241 = sbr.rel (0) target = $region85
    $region84: #{autoencoder_forward.1} parent=1 // pred_region
      %s243 = ssub.s32 16, 16
      %244 = vsyncadd [#allocation24], %s243
      %s246 = sshll.u32 [#allocation23], 4
      %s247 = int_to_ptr.vmem [resolvable:$true] %s246
      %249 = dma.hbm_to_vmem [thread:$0]  %s41, 16, %s247, [#allocation24]
    $region85: #{autoencoder_forward.1} parent=1 // pred_fallthru
      _
    // Predicated region
    $region86: #{autoencoder_forward.1} parent=1 // pred_check
      _
    $region87: #{autoencoder_forward.1} parent=1 // pred_check_branch
      %251 = sbr.rel (0) target = $region89
    $region88: #{autoencoder_forward.1} parent=1 // pred_region
      _
    $region89: #{autoencoder_forward.1} parent=1 // pred_fallthru
      _
    // Predicated region
    $region90: #{autoencoder_forward.1} parent=1 // pred_check
      _
    $region91: #{autoencoder_forward.1} parent=1 // pred_check_branch
      %253 = sbr.rel (0) target = $region93
    $region92: #{autoencoder_forward.1} parent=1 // pred_region
      %s255 = ssub.s32 16, 16
      %256 = vsyncadd [#allocation24], %s255
      %s258 = sshll.u32 [#allocation25], 4
      %s259 = int_to_ptr.vmem [resolvable:$true] %s258
      %261 = dma.hbm_to_vmem [thread:$0]  %s45, 16, %s259, [#allocation24]
    $region93: #{autoencoder_forward.1} parent=1 // pred_fallthru
      _
    // Predicated region
    $region94: #{autoencoder_forward.1} parent=1 // pred_check
      _
    $region95: #{autoencoder_forward.1} parent=1 // pred_check_branch
      %263 = sbr.rel (0) target = $region97
    $region96: #{autoencoder_forward.1} parent=1 // pred_region
      %s265 = ssub.s32 16, 16
      %266 = vsyncadd [#allocation27], %s265
      %s268 = sshll.u32 [#allocation26], 4
      %s269 = int_to_ptr.vmem [resolvable:$true] %s268
      %271 = dma.hbm_to_vmem [thread:$0]  %s47, 16, %s269, [#allocation27]
    $region97: #{autoencoder_forward.1} parent=1 // pred_fallthru
      _
    // Predicated region
    $region98: #{autoencoder_forward.1} parent=1 // pred_check
      _
    $region99: #{autoencoder_forward.1} parent=1 // pred_check_branch
      %273 = sbr.rel (0) target = $region101
    $region100: #{autoencoder_forward.1} parent=1 // pred_region
      _
    $region101: #{autoencoder_forward.1} parent=1 // pred_fallthru
      _
    // Predicated region
    $region102: #{autoencoder_forward.1} parent=1 // pred_check
      _
    $region103: #{autoencoder_forward.1} parent=1 // pred_check_branch
      %275 = sbr.rel (0) target = $region105
    $region104: #{autoencoder_forward.1} parent=1 // pred_region
      %s277 = ssub.s32 16, 16
      %278 = vsyncadd [#allocation27], %s277
      %s280 = sshll.u32 [#allocation28], 4
      %s281 = int_to_ptr.vmem [resolvable:$true] %s280
      %283 = dma.hbm_to_vmem [thread:$0]  %s51, 16, %s281, [#allocation27]
    $region105: #{autoencoder_forward.1} parent=1 // pred_fallthru
      _
    // Predicated region
    $region106: #{autoencoder_forward.1} parent=1 // pred_check
      _
    $region107: #{autoencoder_forward.1} parent=1 // pred_check_branch
      %285 = sbr.rel (0) target = $region109
    $region108: #{autoencoder_forward.1} parent=1 // pred_region
      %s287 = ssub.s32 16, 16
      %288 = vsyncadd [#allocation30], %s287
      %s290 = sshll.u32 [#allocation29], 4
      %s291 = int_to_ptr.vmem [resolvable:$true] %s290
      %293 = dma.hbm_to_vmem [thread:$0]  %s53, 16, %s291, [#allocation30]
    $region109: #{autoencoder_forward.1} parent=1 // pred_fallthru
      _
    // Predicated region
    $region110: #{autoencoder_forward.1} parent=1 // pred_check
      _
    $region111: #{autoencoder_forward.1} parent=1 // pred_check_branch
      %295 = sbr.rel (0) target = $region113
    $region112: #{autoencoder_forward.1} parent=1 // pred_region
      _
    $region113: #{autoencoder_forward.1} parent=1 // pred_fallthru
      _
    // Predicated region
    $region114: #{autoencoder_forward.1} parent=1 // pred_check
      _
    $region115: #{autoencoder_forward.1} parent=1 // pred_check_branch
      %297 = sbr.rel (0) target = $region117
    $region116: #{autoencoder_forward.1} parent=1 // pred_region
      %s299 = ssub.s32 32, 32
      %300 = vsyncadd [#allocation30], %s299
      %s302 = sshll.u32 [#allocation31], 4
      %s303 = int_to_ptr.vmem [resolvable:$true] %s302
      %305 = dma.hbm_to_vmem [thread:$0]  %s57, 32, %s303, [#allocation30]
    $region117: #{autoencoder_forward.1} parent=1 // pred_fallthru
      _
    // Predicated region
    $region118: #{autoencoder_forward.1} parent=1 // pred_check
      _
    $region119: #{autoencoder_forward.1} parent=1 // pred_check_branch
      %307 = sbr.rel (0) target = $region121
    $region120: #{autoencoder_forward.1} parent=1 // pred_region
      %s309 = ssub.s32 32, 32
      %310 = vsyncadd [#allocation33], %s309
      %s312 = sshll.u32 [#allocation32], 4
      %s313 = int_to_ptr.vmem [resolvable:$true] %s312
      %315 = dma.hbm_to_vmem [thread:$0]  %s59, 32, %s313, [#allocation33]
    $region121: #{autoencoder_forward.1} parent=1 // pred_fallthru
      _
    // Predicated region
    $region122: #{autoencoder_forward.1} parent=1 // pred_check
      _
    $region123: #{autoencoder_forward.1} parent=1 // pred_check_branch
      %317 = sbr.rel (0) target = $region125
    $region124: #{autoencoder_forward.1} parent=1 // pred_region
      %s319 = ssub.s32 8192, 8192
      %320 = vsyncadd [#allocation33], %s319
      %s321 = sshll.u32 [#allocation34], 4
      %s322 = int_to_ptr.vmem [resolvable:$true] %s321
      %327 = dma.hbm_to_vmem [thread:$0]  %s61, 8192, %s322, [#allocation33], 256, 256, 16
    $region125: #{autoencoder_forward.1} parent=1 // pred_fallthru
      _
    // Predicated region
    $region126: #{autoencoder_forward.1} parent=1 // pred_check
      _
    $region127: #{autoencoder_forward.1} parent=1 // pred_check_branch
      %329 = sbr.rel (0) target = $region129
    $region128: #{autoencoder_forward.1} parent=1 // pred_region
      _
    $region129: #{autoencoder_forward.1} parent=1 // pred_fallthru
      _
    // Predicated region
    $region130: #{autoencoder_forward.1} parent=1 // pred_check
      _
    $region131: #{autoencoder_forward.1} parent=1 // pred_check_branch
      %331 = sbr.rel (0) target = $region133
    $region132: #{autoencoder_forward.1} parent=1 // pred_region
      %s333 = ssub.s32 64, 64
      %334 = vsyncadd [#allocation36], %s333
      %s336 = sshll.u32 [#allocation35], 4
      %s337 = int_to_ptr.vmem [resolvable:$true] %s336
      %339 = dma.hbm_to_vmem [thread:$0]  %s65, 64, %s337, [#allocation36]
    $region133: #{autoencoder_forward.1} parent=1 // pred_fallthru
      _
    // Predicated region
    $region134: #{autoencoder_forward.1} parent=1 // pred_check
      _
    $region135: #{autoencoder_forward.1} parent=1 // pred_check_branch
      %341 = sbr.rel (0) target = $region137
    $region136: #{autoencoder_forward.1} parent=1 // pred_region
      %s343 = ssub.s32 28672, 28672
      %344 = vsyncadd [#allocation36], %s343
      %s345 = sshll.u32 [#allocation37], 4
      %s346 = int_to_ptr.vmem [resolvable:$true] %s345
      %351 = dma.hbm_to_vmem [thread:$0]  %s67, 28672, %s346, [#allocation36], 448, 448, 28
    $region137: #{autoencoder_forward.1} parent=1 // pred_fallthru
      _
    // Predicated region
    $region138: #{autoencoder_forward.1} parent=1 // pred_check
      _
    $region139: #{autoencoder_forward.1} parent=1 // pred_check_branch
      %353 = sbr.rel (0) target = $region141
    $region140: #{autoencoder_forward.1} parent=1 // pred_region
      _
    $region141: #{autoencoder_forward.1} parent=1 // pred_fallthru
      _
    // Predicated region
    $region142: #{autoencoder_forward.1} parent=1 // pred_check
      _
    $region143: #{autoencoder_forward.1} parent=1 // pred_check_branch
      %355 = sbr.rel (0) target = $region145
    $region144: #{autoencoder_forward.1} parent=1 // pred_region
      %356 = dma.done [#allocation3], 25088
    $region145: #{autoencoder_forward.1} parent=1 // pred_fallthru
      _
    // Predicated region
    $region146: #{autoencoder_forward.1} parent=1 // pred_check
      _
    $region147: #{autoencoder_forward.1} parent=1 // pred_check_branch
      %358 = sbr.rel (0) target = $region149
    $region148: #{autoencoder_forward.1} parent=1 // pred_region
      %359 = dma.done [#allocation6], 64
    $region149: #{autoencoder_forward.1} parent=1 // pred_fallthru
      _
    // Predicated region
    $region150: #{autoencoder_forward.1} parent=1 // pred_check
      _
    $region151: #{autoencoder_forward.1} parent=1 // pred_check_branch
      %361 = sbr.rel (0) target = $region153
    $region152: #{autoencoder_forward.1} parent=1 // pred_region
      %362 = dma.done [#allocation6], 64
    $region153: #{autoencoder_forward.1} parent=1 // pred_fallthru
      _
    // Predicated region
    $region154: #{autoencoder_forward.1} parent=1 // pred_check
      _
    $region155: #{autoencoder_forward.1} parent=1 // pred_check_branch
      %364 = sbr.rel (0) target = $region157
    $region156: #{autoencoder_forward.1} parent=1 // pred_region
      %365 = dma.done [#allocation9], 8192
    $region157: #{autoencoder_forward.1} parent=1 // pred_fallthru
      _
    // Predicated region
    $region158: #{autoencoder_forward.1} parent=1 // pred_check
      _
    $region159: #{autoencoder_forward.1} parent=1 // pred_check_branch
      %367 = sbr.rel (0) target = $region161
    $region160: #{autoencoder_forward.1} parent=1 // pred_region
      %368 = dma.done [#allocation9], 32
    $region161: #{autoencoder_forward.1} parent=1 // pred_fallthru
      _
    // Predicated region
    $region162: #{autoencoder_forward.1} parent=1 // pred_check
      _
    $region163: #{autoencoder_forward.1} parent=1 // pred_check_branch
      %370 = sbr.rel (0) target = $region165
    $region164: #{autoencoder_forward.1} parent=1 // pred_region
      %371 = dma.done [#allocation12], 32
    $region165: #{autoencoder_forward.1} parent=1 // pred_fallthru
      _
    // Predicated region
    $region166: #{autoencoder_forward.1} parent=1 // pred_check
      _
    $region167: #{autoencoder_forward.1} parent=1 // pred_check_branch
      %373 = sbr.rel (0) target = $region169
    $region168: #{autoencoder_forward.1} parent=1 // pred_region
      %374 = dma.done [#allocation12], 16
    $region169: #{autoencoder_forward.1} parent=1 // pred_fallthru
      _
    // Predicated region
    $region170: #{autoencoder_forward.1} parent=1 // pred_check
      _
    $region171: #{autoencoder_forward.1} parent=1 // pred_check_branch
      %376 = sbr.rel (0) target = $region173
    $region172: #{autoencoder_forward.1} parent=1 // pred_region
      %377 = dma.done [#allocation15], 16
    $region173: #{autoencoder_forward.1} parent=1 // pred_fallthru
      _
    // Predicated region
    $region174: #{autoencoder_forward.1} parent=1 // pred_check
      _
    $region175: #{autoencoder_forward.1} parent=1 // pred_check_branch
      %379 = sbr.rel (0) target = $region177
    $region176: #{autoencoder_forward.1} parent=1 // pred_region
      %380 = dma.done [#allocation15], 16
    $region177: #{autoencoder_forward.1} parent=1 // pred_fallthru
      _
    // Predicated region
    $region178: #{autoencoder_forward.1} parent=1 // pred_check
      _
    $region179: #{autoencoder_forward.1} parent=1 // pred_check_branch
      %382 = sbr.rel (0) target = $region181
    $region180: #{autoencoder_forward.1} parent=1 // pred_region
      %383 = dma.done [#allocation18], 16
    $region181: #{autoencoder_forward.1} parent=1 // pred_fallthru
      _
    // Predicated region
    $region182: #{autoencoder_forward.1} parent=1 // pred_check
      _
    $region183: #{autoencoder_forward.1} parent=1 // pred_check_branch
      %385 = sbr.rel (0) target = $region185
    $region184: #{autoencoder_forward.1} parent=1 // pred_region
      %386 = dma.done [#allocation18], 16
    $region185: #{autoencoder_forward.1} parent=1 // pred_fallthru
      _
    // Predicated region
    $region186: #{autoencoder_forward.1} parent=1 // pred_check
      _
    $region187: #{autoencoder_forward.1} parent=1 // pred_check_branch
      %388 = sbr.rel (0) target = $region189
    $region188: #{autoencoder_forward.1} parent=1 // pred_region
      %389 = dma.done [#allocation21], 16
    $region189: #{autoencoder_forward.1} parent=1 // pred_fallthru
      _
    // Predicated region
    $region190: #{autoencoder_forward.1} parent=1 // pred_check
      _
    $region191: #{autoencoder_forward.1} parent=1 // pred_check_branch
      %391 = sbr.rel (0) target = $region193
    $region192: #{autoencoder_forward.1} parent=1 // pred_region
      %392 = dma.done [#allocation21], 16
    $region193: #{autoencoder_forward.1} parent=1 // pred_fallthru
      _
    // Predicated region
    $region194: #{autoencoder_forward.1} parent=1 // pred_check
      _
    $region195: #{autoencoder_forward.1} parent=1 // pred_check_branch
      %394 = sbr.rel (0) target = $region197
    $region196: #{autoencoder_forward.1} parent=1 // pred_region
      %395 = dma.done [#allocation24], 16
    $region197: #{autoencoder_forward.1} parent=1 // pred_fallthru
      _
    // Predicated region
    $region198: #{autoencoder_forward.1} parent=1 // pred_check
      _
    $region199: #{autoencoder_forward.1} parent=1 // pred_check_branch
      %397 = sbr.rel (0) target = $region201
    $region200: #{autoencoder_forward.1} parent=1 // pred_region
      %398 = dma.done [#allocation24], 16
    $region201: #{autoencoder_forward.1} parent=1 // pred_fallthru
      _
    // Predicated region
    $region202: #{autoencoder_forward.1} parent=1 // pred_check
      _
    $region203: #{autoencoder_forward.1} parent=1 // pred_check_branch
      %400 = sbr.rel (0) target = $region205
    $region204: #{autoencoder_forward.1} parent=1 // pred_region
      %401 = dma.done [#allocation27], 16
    $region205: #{autoencoder_forward.1} parent=1 // pred_fallthru
      _
    // Predicated region
    $region206: #{autoencoder_forward.1} parent=1 // pred_check
      _
    $region207: #{autoencoder_forward.1} parent=1 // pred_check_branch
      %403 = sbr.rel (0) target = $region209
    $region208: #{autoencoder_forward.1} parent=1 // pred_region
      %404 = dma.done [#allocation27], 16
    $region209: #{autoencoder_forward.1} parent=1 // pred_fallthru
      _
    // Predicated region
    $region210: #{autoencoder_forward.1} parent=1 // pred_check
      _
    $region211: #{autoencoder_forward.1} parent=1 // pred_check_branch
      %406 = sbr.rel (0) target = $region213
    $region212: #{autoencoder_forward.1} parent=1 // pred_region
      %407 = dma.done [#allocation30], 16
    $region213: #{autoencoder_forward.1} parent=1 // pred_fallthru
      _
    // Predicated region
    $region214: #{autoencoder_forward.1} parent=1 // pred_check
      _
    $region215: #{autoencoder_forward.1} parent=1 // pred_check_branch
      %409 = sbr.rel (0) target = $region217
    $region216: #{autoencoder_forward.1} parent=1 // pred_region
      %410 = dma.done [#allocation30], 32
    $region217: #{autoencoder_forward.1} parent=1 // pred_fallthru
      _
    // Predicated region
    $region218: #{autoencoder_forward.1} parent=1 // pred_check
      _
    $region219: #{autoencoder_forward.1} parent=1 // pred_check_branch
      %412 = sbr.rel (0) target = $region221
    $region220: #{autoencoder_forward.1} parent=1 // pred_region
      %413 = dma.done [#allocation33], 32
    $region221: #{autoencoder_forward.1} parent=1 // pred_fallthru
      _
    // Predicated region
    $region222: #{autoencoder_forward.1} parent=1 // pred_check
      _
    $region223: #{autoencoder_forward.1} parent=1 // pred_check_branch
      %415 = sbr.rel (0) target = $region225
    $region224: #{autoencoder_forward.1} parent=1 // pred_region
      %416 = dma.done [#allocation33], 8192
    $region225: #{autoencoder_forward.1} parent=1 // pred_fallthru
      _
    // Predicated region
    $region226: #{autoencoder_forward.1} parent=1 // pred_check
      _
    $region227: #{autoencoder_forward.1} parent=1 // pred_check_branch
      %418 = sbr.rel (0) target = $region229
    $region228: #{autoencoder_forward.1} parent=1 // pred_region
      %419 = dma.done [#allocation36], 64
    $region229: #{autoencoder_forward.1} parent=1 // pred_fallthru
      _
    // Predicated region
    $region230: #{autoencoder_forward.1} parent=1 // pred_check
      _
    $region231: #{autoencoder_forward.1} parent=1 // pred_check_branch
      %421 = sbr.rel (0) target = $region233
    $region232: #{autoencoder_forward.1} parent=1 // pred_region
      %422 = dma.done [#allocation36], 28672
    $region233: #{autoencoder_forward.1} parent=1 // pred_fallthru
      _
    %v424 = vld [vmem:[%s1] sm:$0xff]
    %v425 = vld [vmem:[%s1 + $0x8] sm:$0xff]
    %v426 = vld [vmem:[%s1 + $0x10] sm:$0xff]
    %v427 = vld [vmem:[%s1 + $0x18] sm:$0xf]
    %v428 = vld [vmem:[#allocation2] sm:$0xff]
    %v429 = vld [vmem:[#allocation2 + $0x8] sm:$0xff]
    %v430 = vld [vmem:[#allocation2 + $0x10] sm:$0xff]
    %v431 = vld [vmem:[#allocation2 + $0x18] sm:$0xff]
    %v432 = vld [vmem:[#allocation2 + $0x20] sm:$0xff]
    %v433 = vld [vmem:[#allocation2 + $0x28] sm:$0xff]
    %v434 = vld [vmem:[#allocation2 + $0x30] sm:$0xff]
    %v435 = vld [vmem:[#allocation2 + $0x38] sm:$0xff]
    %v436 = vld [vmem:[#allocation2 + $0x40] sm:$0xff]
    %v437 = vld [vmem:[#allocation2 + $0x48] sm:$0xff]
    %v438 = vld [vmem:[#allocation2 + $0x50] sm:$0xff]
    %v439 = vld [vmem:[#allocation2 + $0x58] sm:$0xff]
    %v440 = vld [vmem:[#allocation2 + $0x60] sm:$0xff]
    %v441 = vld [vmem:[#allocation2 + $0x68] sm:$0xff]
    %v442 = vld [vmem:[#allocation2 + $0x70] sm:$0xff]
    %v443 = vld [vmem:[#allocation2 + $0x78] sm:$0xff]
    %v444 = vld [vmem:[#allocation2 + $0x80] sm:$0xff]
    %v445 = vld [vmem:[#allocation2 + $0x88] sm:$0xff]
    %v446 = vld [vmem:[#allocation2 + $0x90] sm:$0xff]
    %v447 = vld [vmem:[#allocation2 + $0x98] sm:$0xff]
    %v448 = vld [vmem:[#allocation2 + $0xa0] sm:$0xff]
    %v449 = vld [vmem:[#allocation2 + $0xa8] sm:$0xff]
    %v450 = vld [vmem:[#allocation2 + $0xb0] sm:$0xff]
    %v451 = vld [vmem:[#allocation2 + $0xb8] sm:$0xff]
    %v452 = vld [vmem:[#allocation2 + $0xc0] sm:$0xff]
    %v453 = vld [vmem:[#allocation2 + $0xc8] sm:$0xff]
    %v454 = vld [vmem:[#allocation2 + $0xd0] sm:$0xff]
    %v455 = vld [vmem:[#allocation2 + $0xd8] sm:$0xff]
    %v456 = vld [vmem:[#allocation2 + $0xe0] sm:$0xff]
    %v457 = vld [vmem:[#allocation2 + $0xe8] sm:$0xff]
    %v458 = vld [vmem:[#allocation2 + $0xf0] sm:$0xff]
    %v459 = vld [vmem:[#allocation2 + $0xf8] sm:$0xff]
    %v460 = vld [vmem:[#allocation2 + $0x100] sm:$0xff]
    %v461 = vld [vmem:[#allocation2 + $0x108] sm:$0xff]
    %v462 = vld [vmem:[#allocation2 + $0x110] sm:$0xff]
    %v463 = vld [vmem:[#allocation2 + $0x118] sm:$0xff]
    %v464 = vld [vmem:[#allocation2 + $0x120] sm:$0xff]
    %v465 = vld [vmem:[#allocation2 + $0x128] sm:$0xff]
    %v466 = vld [vmem:[#allocation2 + $0x130] sm:$0xff]
    %v467 = vld [vmem:[#allocation2 + $0x138] sm:$0xff]
    %v468 = vld [vmem:[#allocation2 + $0x140] sm:$0xff]
    %v469 = vld [vmem:[#allocation2 + $0x148] sm:$0xff]
    %v470 = vld [vmem:[#allocation2 + $0x150] sm:$0xff]
    %v471 = vld [vmem:[#allocation2 + $0x158] sm:$0xff]
    %v472 = vld [vmem:[#allocation2 + $0x160] sm:$0xff]
    %v473 = vld [vmem:[#allocation2 + $0x168] sm:$0xff]
    %v474 = vld [vmem:[#allocation2 + $0x170] sm:$0xff]
    %v475 = vld [vmem:[#allocation2 + $0x178] sm:$0xff]
    %v476 = vld [vmem:[#allocation2 + $0x180] sm:$0xff]
    %v477 = vld [vmem:[#allocation2 + $0x188] sm:$0xff]
    %v478 = vld [vmem:[#allocation2 + $0x190] sm:$0xff]
    %v479 = vld [vmem:[#allocation2 + $0x198] sm:$0xff]
    %v480 = vld [vmem:[#allocation2 + $0x1a0] sm:$0xff]
    %v481 = vld [vmem:[#allocation2 + $0x1a8] sm:$0xff]
    %v482 = vld [vmem:[#allocation2 + $0x1b0] sm:$0xff]
    %v483 = vld [vmem:[#allocation2 + $0x1b8] sm:$0xff]
    %v484 = vld [vmem:[#allocation2 + $0x1c0] sm:$0xff]
    %v485 = vld [vmem:[#allocation2 + $0x1c8] sm:$0xff]
    %v486 = vld [vmem:[#allocation2 + $0x1d0] sm:$0xff]
    %v487 = vld [vmem:[#allocation2 + $0x1d8] sm:$0xff]
    %v488 = vld [vmem:[#allocation2 + $0x1e0] sm:$0xff]
    %v489 = vld [vmem:[#allocation2 + $0x1e8] sm:$0xff]
    %v490 = vld [vmem:[#allocation2 + $0x1f0] sm:$0xff]
    %v491 = vld [vmem:[#allocation2 + $0x1f8] sm:$0xff]
    %v492 = vld [vmem:[#allocation2 + $0x200] sm:$0xff]
    %v493 = vld [vmem:[#allocation2 + $0x208] sm:$0xff]
    %v494 = vld [vmem:[#allocation2 + $0x210] sm:$0xff]
    %v495 = vld [vmem:[#allocation2 + $0x218] sm:$0xff]
    %v496 = vld [vmem:[#allocation2 + $0x220] sm:$0xff]
    %v497 = vld [vmem:[#allocation2 + $0x228] sm:$0xff]
    %v498 = vld [vmem:[#allocation2 + $0x230] sm:$0xff]
    %v499 = vld [vmem:[#allocation2 + $0x238] sm:$0xff]
    %v500 = vld [vmem:[#allocation2 + $0x240] sm:$0xff]
    %v501 = vld [vmem:[#allocation2 + $0x248] sm:$0xff]
    %v502 = vld [vmem:[#allocation2 + $0x250] sm:$0xff]
    %v503 = vld [vmem:[#allocation2 + $0x258] sm:$0xff]
    %v504 = vld [vmem:[#allocation2 + $0x260] sm:$0xff]
    %v505 = vld [vmem:[#allocation2 + $0x268] sm:$0xff]
    %v506 = vld [vmem:[#allocation2 + $0x270] sm:$0xff]
    %v507 = vld [vmem:[#allocation2 + $0x278] sm:$0xff]
    %v508 = vld [vmem:[#allocation2 + $0x280] sm:$0xff]
    %v509 = vld [vmem:[#allocation2 + $0x288] sm:$0xff]
    %v510 = vld [vmem:[#allocation2 + $0x290] sm:$0xff]
    %v511 = vld [vmem:[#allocation2 + $0x298] sm:$0xff]
    %v512 = vld [vmem:[#allocation2 + $0x2a0] sm:$0xff]
    %v513 = vld [vmem:[#allocation2 + $0x2a8] sm:$0xff]
    %v514 = vld [vmem:[#allocation2 + $0x2b0] sm:$0xff]
    %v515 = vld [vmem:[#allocation2 + $0x2b8] sm:$0xff]
    %v516 = vld [vmem:[#allocation2 + $0x2c0] sm:$0xff]
    %v517 = vld [vmem:[#allocation2 + $0x2c8] sm:$0xff]
    %v518 = vld [vmem:[#allocation2 + $0x2d0] sm:$0xff]
    %v519 = vld [vmem:[#allocation2 + $0x2d8] sm:$0xff]
    %v520 = vld [vmem:[#allocation2 + $0x2e0] sm:$0xff]
    %v521 = vld [vmem:[#allocation2 + $0x2e8] sm:$0xff]
    %v522 = vld [vmem:[#allocation2 + $0x2f0] sm:$0xff]
    %v523 = vld [vmem:[#allocation2 + $0x2f8] sm:$0xff]
    %v524 = vld [vmem:[#allocation2 + $0x300] sm:$0xff]
    %v525 = vld [vmem:[#allocation2 + $0x308] sm:$0xff]
    %v526 = vld [vmem:[#allocation2 + $0x310] sm:$0xff]
    %v527 = vld [vmem:[#allocation2 + $0x318] sm:$0xff]
    %v528 = vld [vmem:[#allocation2 + $0x320] sm:$0xff]
    %v529 = vld [vmem:[#allocation2 + $0x328] sm:$0xff]
    %v530 = vld [vmem:[#allocation2 + $0x330] sm:$0xff]
    %v531 = vld [vmem:[#allocation2 + $0x338] sm:$0xff]
    %v532 = vld [vmem:[#allocation2 + $0x340] sm:$0xff]
    %v533 = vld [vmem:[#allocation2 + $0x348] sm:$0xff]
    %v534 = vld [vmem:[#allocation2 + $0x350] sm:$0xff]
    %v535 = vld [vmem:[#allocation2 + $0x358] sm:$0xff]
    %v536 = vld [vmem:[#allocation2 + $0x360] sm:$0xff]
    %v537 = vld [vmem:[#allocation2 + $0x368] sm:$0xff]
    %v538 = vld [vmem:[#allocation2 + $0x370] sm:$0xff]
    %v539 = vld [vmem:[#allocation2 + $0x378] sm:$0xff]
    %v540 = vld [vmem:[#allocation2 + $0x380] sm:$0xff]
    %v541 = vld [vmem:[#allocation2 + $0x388] sm:$0xff]
    %v542 = vld [vmem:[#allocation2 + $0x390] sm:$0xff]
    %v543 = vld [vmem:[#allocation2 + $0x398] sm:$0xff]
    %v544 = vld [vmem:[#allocation2 + $0x3a0] sm:$0xff]
    %v545 = vld [vmem:[#allocation2 + $0x3a8] sm:$0xff]
    %v546 = vld [vmem:[#allocation2 + $0x3b0] sm:$0xff]
    %v547 = vld [vmem:[#allocation2 + $0x3b8] sm:$0xff]
    %v548 = vld [vmem:[#allocation2 + $0x3c0] sm:$0xff]
    %v549 = vld [vmem:[#allocation2 + $0x3c8] sm:$0xff]
    %v550 = vld [vmem:[#allocation2 + $0x3d0] sm:$0xff]
    %v551 = vld [vmem:[#allocation2 + $0x3d8] sm:$0xff]
    %v552 = vld [vmem:[#allocation2 + $0x3e0] sm:$0xff]
    %v553 = vld [vmem:[#allocation2 + $0x3e8] sm:$0xff]
    %v554 = vld [vmem:[#allocation2 + $0x3f0] sm:$0xff]
    %v555 = vld [vmem:[#allocation2 + $0x3f8] sm:$0xff]
    %v556 = vld [vmem:[#allocation2 + $0x400] sm:$0xff]
    %v557 = vld [vmem:[#allocation2 + $0x408] sm:$0xff]
    %v558 = vld [vmem:[#allocation2 + $0x410] sm:$0xff]
    %v559 = vld [vmem:[#allocation2 + $0x418] sm:$0xff]
    %v560 = vld [vmem:[#allocation2 + $0x420] sm:$0xff]
    %v561 = vld [vmem:[#allocation2 + $0x428] sm:$0xff]
    %v562 = vld [vmem:[#allocation2 + $0x430] sm:$0xff]
    %v563 = vld [vmem:[#allocation2 + $0x438] sm:$0xff]
    %v564 = vld [vmem:[#allocation2 + $0x440] sm:$0xff]
    %v565 = vld [vmem:[#allocation2 + $0x448] sm:$0xff]
    %v566 = vld [vmem:[#allocation2 + $0x450] sm:$0xff]
    %v567 = vld [vmem:[#allocation2 + $0x458] sm:$0xff]
    %v568 = vld [vmem:[#allocation2 + $0x460] sm:$0xff]
    %v569 = vld [vmem:[#allocation2 + $0x468] sm:$0xff]
    %v570 = vld [vmem:[#allocation2 + $0x470] sm:$0xff]
    %v571 = vld [vmem:[#allocation2 + $0x478] sm:$0xff]
    %v572 = vld [vmem:[#allocation2 + $0x480] sm:$0xff]
    %v573 = vld [vmem:[#allocation2 + $0x488] sm:$0xff]
    %v574 = vld [vmem:[#allocation2 + $0x490] sm:$0xff]
    %v575 = vld [vmem:[#allocation2 + $0x498] sm:$0xff]
    %v576 = vld [vmem:[#allocation2 + $0x4a0] sm:$0xff]
    %v577 = vld [vmem:[#allocation2 + $0x4a8] sm:$0xff]
    %v578 = vld [vmem:[#allocation2 + $0x4b0] sm:$0xff]
    %v579 = vld [vmem:[#allocation2 + $0x4b8] sm:$0xff]
    %v580 = vld [vmem:[#allocation2 + $0x4c0] sm:$0xff]
    %v581 = vld [vmem:[#allocation2 + $0x4c8] sm:$0xff]
    %v582 = vld [vmem:[#allocation2 + $0x4d0] sm:$0xff]
    %v583 = vld [vmem:[#allocation2 + $0x4d8] sm:$0xff]
    %v584 = vld [vmem:[#allocation2 + $0x4e0] sm:$0xff]
    %v585 = vld [vmem:[#allocation2 + $0x4e8] sm:$0xff]
    %v586 = vld [vmem:[#allocation2 + $0x4f0] sm:$0xff]
    %v587 = vld [vmem:[#allocation2 + $0x4f8] sm:$0xff]
    %v588 = vld [vmem:[#allocation2 + $0x500] sm:$0xff]
    %v589 = vld [vmem:[#allocation2 + $0x508] sm:$0xff]
    %v590 = vld [vmem:[#allocation2 + $0x510] sm:$0xff]
    %v591 = vld [vmem:[#allocation2 + $0x518] sm:$0xff]
    %v592 = vld [vmem:[#allocation2 + $0x520] sm:$0xff]
    %v593 = vld [vmem:[#allocation2 + $0x528] sm:$0xff]
    %v594 = vld [vmem:[#allocation2 + $0x530] sm:$0xff]
    %v595 = vld [vmem:[#allocation2 + $0x538] sm:$0xff]
    %v596 = vld [vmem:[#allocation2 + $0x540] sm:$0xff]
    %v597 = vld [vmem:[#allocation2 + $0x548] sm:$0xff]
    %v598 = vld [vmem:[#allocation2 + $0x550] sm:$0xff]
    %v599 = vld [vmem:[#allocation2 + $0x558] sm:$0xff]
    %v600 = vld [vmem:[#allocation2 + $0x560] sm:$0xff]
    %v601 = vld [vmem:[#allocation2 + $0x568] sm:$0xff]
    %v602 = vld [vmem:[#allocation2 + $0x570] sm:$0xff]
    %v603 = vld [vmem:[#allocation2 + $0x578] sm:$0xff]
    %v604 = vld [vmem:[#allocation2 + $0x580] sm:$0xff]
    %v605 = vld [vmem:[#allocation2 + $0x588] sm:$0xff]
    %v606 = vld [vmem:[#allocation2 + $0x590] sm:$0xff]
    %v607 = vld [vmem:[#allocation2 + $0x598] sm:$0xff]
    %v608 = vld [vmem:[#allocation2 + $0x5a0] sm:$0xff]
    %v609 = vld [vmem:[#allocation2 + $0x5a8] sm:$0xff]
    %v610 = vld [vmem:[#allocation2 + $0x5b0] sm:$0xff]
    %v611 = vld [vmem:[#allocation2 + $0x5b8] sm:$0xff]
    %v612 = vld [vmem:[#allocation2 + $0x5c0] sm:$0xff]
    %v613 = vld [vmem:[#allocation2 + $0x5c8] sm:$0xff]
    %v614 = vld [vmem:[#allocation2 + $0x5d0] sm:$0xff]
    %v615 = vld [vmem:[#allocation2 + $0x5d8] sm:$0xff]
    %v616 = vld [vmem:[#allocation2 + $0x5e0] sm:$0xff]
    %v617 = vld [vmem:[#allocation2 + $0x5e8] sm:$0xff]
    %v618 = vld [vmem:[#allocation2 + $0x5f0] sm:$0xff]
    %v619 = vld [vmem:[#allocation2 + $0x5f8] sm:$0xff]
    %v620 = vld [vmem:[#allocation2 + $0x600] sm:$0xff]
    %v621 = vld [vmem:[#allocation2 + $0x608] sm:$0xff]
    %v622 = vld [vmem:[#allocation2 + $0x610] sm:$0xff]
    %v623 = vld [vmem:[#allocation2 + $0x618] sm:$0xff]
    %v628 = vunpack.c.l.b16 %v424
    %v629 = vunpack.c.h.b16 %v424
    %v630 = vunpack.c.l.b16 %v425
    %v631 = vunpack.c.h.b16 %v425
    %v632 = vunpack.c.l.b16 %v426
    %v633 = vunpack.c.h.b16 %v426
    %v634 = vunpack.c.l.b16 %v427
    %v635 = vpack.c.b16 %v628, %v628
    %v636 = vpack.c.b16 %v629, %v629
    %v637 = vpack.c.b16 %v630, %v630
    %v638 = vpack.c.b16 %v631, %v631
    %v639 = vpack.c.b16 %v632, %v632
    %v640 = vpack.c.b16 %v633, %v633
    %v641 = vpack.c.b16 %v634, %v634
    %v844 = vunpack.c.l.b16 %v428
    %v845 = vunpack.c.h.b16 %v428
    %v846 = vunpack.c.l.b16 %v429
    %v847 = vunpack.c.h.b16 %v429
    %v848 = vunpack.c.l.b16 %v430
    %v849 = vunpack.c.h.b16 %v430
    %v850 = vunpack.c.l.b16 %v431
    %v851 = vunpack.c.h.b16 %v431
    %v852 = vunpack.c.l.b16 %v432
    %v853 = vunpack.c.h.b16 %v432
    %v854 = vunpack.c.l.b16 %v433
    %v855 = vunpack.c.h.b16 %v433
    %v856 = vunpack.c.l.b16 %v434
    %v857 = vunpack.c.h.b16 %v434
    %v858 = vunpack.c.l.b16 %v435
    %v859 = vunpack.c.h.b16 %v435
    %v860 = vunpack.c.l.b16 %v436
    %v861 = vunpack.c.h.b16 %v436
    %v862 = vunpack.c.l.b16 %v437
    %v863 = vunpack.c.h.b16 %v437
    %v864 = vunpack.c.l.b16 %v438
    %v865 = vunpack.c.h.b16 %v438
    %v866 = vunpack.c.l.b16 %v439
    %v867 = vunpack.c.h.b16 %v439
    %v868 = vunpack.c.l.b16 %v440
    %v869 = vunpack.c.h.b16 %v440
    %v870 = vunpack.c.l.b16 %v441
    %v871 = vunpack.c.h.b16 %v441
    %v872 = vunpack.c.l.b16 %v442
    %v873 = vunpack.c.h.b16 %v442
    %v874 = vunpack.c.l.b16 %v443
    %v875 = vunpack.c.h.b16 %v443
    %v876 = vunpack.c.l.b16 %v444
    %v877 = vunpack.c.h.b16 %v444
    %v878 = vunpack.c.l.b16 %v445
    %v879 = vunpack.c.h.b16 %v445
    %v880 = vunpack.c.l.b16 %v446
    %v881 = vunpack.c.h.b16 %v446
    %v882 = vunpack.c.l.b16 %v447
    %v883 = vunpack.c.h.b16 %v447
    %v884 = vunpack.c.l.b16 %v448
    %v885 = vunpack.c.h.b16 %v448
    %v886 = vunpack.c.l.b16 %v449
    %v887 = vunpack.c.h.b16 %v449
    %v888 = vunpack.c.l.b16 %v450
    %v889 = vunpack.c.h.b16 %v450
    %v890 = vunpack.c.l.b16 %v451
    %v891 = vunpack.c.h.b16 %v451
    %v892 = vunpack.c.l.b16 %v452
    %v893 = vunpack.c.h.b16 %v452
    %v894 = vunpack.c.l.b16 %v453
    %v895 = vunpack.c.h.b16 %v453
    %v896 = vunpack.c.l.b16 %v454
    %v897 = vunpack.c.h.b16 %v454
    %v898 = vunpack.c.l.b16 %v455
    %v899 = vunpack.c.h.b16 %v455
    %v900 = vunpack.c.l.b16 %v456
    %v901 = vunpack.c.h.b16 %v456
    %v902 = vunpack.c.l.b16 %v457
    %v903 = vunpack.c.h.b16 %v457
    %v904 = vunpack.c.l.b16 %v458
    %v905 = vunpack.c.h.b16 %v458
    %v906 = vunpack.c.l.b16 %v459
    %v907 = vunpack.c.h.b16 %v459
    %v908 = vunpack.c.l.b16 %v460
    %v909 = vunpack.c.h.b16 %v460
    %v910 = vunpack.c.l.b16 %v461
    %v911 = vunpack.c.h.b16 %v461
    %v912 = vunpack.c.l.b16 %v462
    %v913 = vunpack.c.h.b16 %v462
    %v914 = vunpack.c.l.b16 %v463
    %v915 = vunpack.c.h.b16 %v463
    %v916 = vunpack.c.l.b16 %v464
    %v917 = vunpack.c.h.b16 %v464
    %v918 = vunpack.c.l.b16 %v465
    %v919 = vunpack.c.h.b16 %v465
    %v920 = vunpack.c.l.b16 %v466
    %v921 = vunpack.c.h.b16 %v466
    %v922 = vunpack.c.l.b16 %v467
    %v923 = vunpack.c.h.b16 %v467
    %v924 = vunpack.c.l.b16 %v468
    %v925 = vunpack.c.h.b16 %v468
    %v926 = vunpack.c.l.b16 %v469
    %v927 = vunpack.c.h.b16 %v469
    %v928 = vunpack.c.l.b16 %v470
    %v929 = vunpack.c.h.b16 %v470
    %v930 = vunpack.c.l.b16 %v471
    %v931 = vunpack.c.h.b16 %v471
    %v932 = vunpack.c.l.b16 %v472
    %v933 = vunpack.c.h.b16 %v472
    %v934 = vunpack.c.l.b16 %v473
    %v935 = vunpack.c.h.b16 %v473
    %v936 = vunpack.c.l.b16 %v474
    %v937 = vunpack.c.h.b16 %v474
    %v938 = vunpack.c.l.b16 %v475
    %v939 = vunpack.c.h.b16 %v475
    %v940 = vunpack.c.l.b16 %v476
    %v941 = vunpack.c.h.b16 %v476
    %v942 = vunpack.c.l.b16 %v477
    %v943 = vunpack.c.h.b16 %v477
    %v944 = vunpack.c.l.b16 %v478
    %v945 = vunpack.c.h.b16 %v478
    %v946 = vunpack.c.l.b16 %v479
    %v947 = vunpack.c.h.b16 %v479
    %v948 = vunpack.c.l.b16 %v480
    %v949 = vunpack.c.h.b16 %v480
    %v950 = vunpack.c.l.b16 %v481
    %v951 = vunpack.c.h.b16 %v481
    %v952 = vunpack.c.l.b16 %v482
    %v953 = vunpack.c.h.b16 %v482
    %v954 = vunpack.c.l.b16 %v483
    %v955 = vunpack.c.h.b16 %v483
    %v956 = vunpack.c.l.b16 %v484
    %v957 = vunpack.c.h.b16 %v484
    %v958 = vunpack.c.l.b16 %v485
    %v959 = vunpack.c.h.b16 %v485
    %v960 = vunpack.c.l.b16 %v486
    %v961 = vunpack.c.h.b16 %v486
    %v962 = vunpack.c.l.b16 %v487
    %v963 = vunpack.c.h.b16 %v487
    %v964 = vunpack.c.l.b16 %v488
    %v965 = vunpack.c.h.b16 %v488
    %v966 = vunpack.c.l.b16 %v489
    %v967 = vunpack.c.h.b16 %v489
    %v968 = vunpack.c.l.b16 %v490
    %v969 = vunpack.c.h.b16 %v490
    %v970 = vunpack.c.l.b16 %v491
    %v971 = vunpack.c.h.b16 %v491
    %v972 = vunpack.c.l.b16 %v492
    %v973 = vunpack.c.h.b16 %v492
    %v974 = vunpack.c.l.b16 %v493
    %v975 = vunpack.c.h.b16 %v493
    %v976 = vunpack.c.l.b16 %v494
    %v977 = vunpack.c.h.b16 %v494
    %v978 = vunpack.c.l.b16 %v495
    %v979 = vunpack.c.h.b16 %v495
    %v980 = vunpack.c.l.b16 %v496
    %v981 = vunpack.c.h.b16 %v496
    %v982 = vunpack.c.l.b16 %v497
    %v983 = vunpack.c.h.b16 %v497
    %v984 = vunpack.c.l.b16 %v498
    %v985 = vunpack.c.h.b16 %v498
    %v986 = vunpack.c.l.b16 %v499
    %v987 = vunpack.c.h.b16 %v499
    %v988 = vunpack.c.l.b16 %v500
    %v989 = vunpack.c.h.b16 %v500
    %v990 = vunpack.c.l.b16 %v501
    %v991 = vunpack.c.h.b16 %v501
    %v992 = vunpack.c.l.b16 %v502
    %v993 = vunpack.c.h.b16 %v502
    %v994 = vunpack.c.l.b16 %v503
    %v995 = vunpack.c.h.b16 %v503
    %v996 = vunpack.c.l.b16 %v504
    %v997 = vunpack.c.h.b16 %v504
    %v998 = vunpack.c.l.b16 %v505
    %v999 = vunpack.c.h.b16 %v505
    %v1000 = vunpack.c.l.b16 %v506
    %v1001 = vunpack.c.h.b16 %v506
    %v1002 = vunpack.c.l.b16 %v507
    %v1003 = vunpack.c.h.b16 %v507
    %v1004 = vunpack.c.l.b16 %v508
    %v1005 = vunpack.c.h.b16 %v508
    %v1006 = vunpack.c.l.b16 %v509
    %v1007 = vunpack.c.h.b16 %v509
    %v1008 = vunpack.c.l.b16 %v510
    %v1009 = vunpack.c.h.b16 %v510
    %v1010 = vunpack.c.l.b16 %v511
    %v1011 = vunpack.c.h.b16 %v511
    %v1012 = vunpack.c.l.b16 %v512
    %v1013 = vunpack.c.h.b16 %v512
    %v1014 = vunpack.c.l.b16 %v513
    %v1015 = vunpack.c.h.b16 %v513
    %v1016 = vunpack.c.l.b16 %v514
    %v1017 = vunpack.c.h.b16 %v514
    %v1018 = vunpack.c.l.b16 %v515
    %v1019 = vunpack.c.h.b16 %v515
    %v1020 = vunpack.c.l.b16 %v516
    %v1021 = vunpack.c.h.b16 %v516
    %v1022 = vunpack.c.l.b16 %v517
    %v1023 = vunpack.c.h.b16 %v517
    %v1024 = vunpack.c.l.b16 %v518
    %v1025 = vunpack.c.h.b16 %v518
    %v1026 = vunpack.c.l.b16 %v519
    %v1027 = vunpack.c.h.b16 %v519
    %v1028 = vunpack.c.l.b16 %v520
    %v1029 = vunpack.c.h.b16 %v520
    %v1030 = vunpack.c.l.b16 %v521
    %v1031 = vunpack.c.h.b16 %v521
    %v1032 = vunpack.c.l.b16 %v522
    %v1033 = vunpack.c.h.b16 %v522
    %v1034 = vunpack.c.l.b16 %v523
    %v1035 = vunpack.c.h.b16 %v523
    %v1036 = vunpack.c.l.b16 %v524
    %v1037 = vunpack.c.h.b16 %v524
    %v1038 = vunpack.c.l.b16 %v525
    %v1039 = vunpack.c.h.b16 %v525
    %v1040 = vunpack.c.l.b16 %v526
    %v1041 = vunpack.c.h.b16 %v526
    %v1042 = vunpack.c.l.b16 %v527
    %v1043 = vunpack.c.h.b16 %v527
    %v1044 = vunpack.c.l.b16 %v528
    %v1045 = vunpack.c.h.b16 %v528
    %v1046 = vunpack.c.l.b16 %v529
    %v1047 = vunpack.c.h.b16 %v529
    %v1048 = vunpack.c.l.b16 %v530
    %v1049 = vunpack.c.h.b16 %v530
    %v1050 = vunpack.c.l.b16 %v531
    %v1051 = vunpack.c.h.b16 %v531
    %v1052 = vunpack.c.l.b16 %v532
    %v1053 = vunpack.c.h.b16 %v532
    %v1054 = vunpack.c.l.b16 %v533
    %v1055 = vunpack.c.h.b16 %v533
    %v1056 = vunpack.c.l.b16 %v534
    %v1057 = vunpack.c.h.b16 %v534
    %v1058 = vunpack.c.l.b16 %v535
    %v1059 = vunpack.c.h.b16 %v535
    %v1060 = vunpack.c.l.b16 %v536
    %v1061 = vunpack.c.h.b16 %v536
    %v1062 = vunpack.c.l.b16 %v537
    %v1063 = vunpack.c.h.b16 %v537
    %v1064 = vunpack.c.l.b16 %v538
    %v1065 = vunpack.c.h.b16 %v538
    %v1066 = vunpack.c.l.b16 %v539
    %v1067 = vunpack.c.h.b16 %v539
    %v1068 = vunpack.c.l.b16 %v540
    %v1069 = vunpack.c.h.b16 %v540
    %v1070 = vunpack.c.l.b16 %v541
    %v1071 = vunpack.c.h.b16 %v541
    %v1072 = vunpack.c.l.b16 %v542
    %v1073 = vunpack.c.h.b16 %v542
    %v1074 = vunpack.c.l.b16 %v543
    %v1075 = vunpack.c.h.b16 %v543
    %v1076 = vunpack.c.l.b16 %v544
    %v1077 = vunpack.c.h.b16 %v544
    %v1078 = vunpack.c.l.b16 %v545
    %v1079 = vunpack.c.h.b16 %v545
    %v1080 = vunpack.c.l.b16 %v546
    %v1081 = vunpack.c.h.b16 %v546
    %v1082 = vunpack.c.l.b16 %v547
    %v1083 = vunpack.c.h.b16 %v547
    %v1084 = vunpack.c.l.b16 %v548
    %v1085 = vunpack.c.h.b16 %v548
    %v1086 = vunpack.c.l.b16 %v549
    %v1087 = vunpack.c.h.b16 %v549
    %v1088 = vunpack.c.l.b16 %v550
    %v1089 = vunpack.c.h.b16 %v550
    %v1090 = vunpack.c.l.b16 %v551
    %v1091 = vunpack.c.h.b16 %v551
    %v1092 = vunpack.c.l.b16 %v552
    %v1093 = vunpack.c.h.b16 %v552
    %v1094 = vunpack.c.l.b16 %v553
    %v1095 = vunpack.c.h.b16 %v553
    %v1096 = vunpack.c.l.b16 %v554
    %v1097 = vunpack.c.h.b16 %v554
    %v1098 = vunpack.c.l.b16 %v555
    %v1099 = vunpack.c.h.b16 %v555
    %v1100 = vunpack.c.l.b16 %v556
    %v1101 = vunpack.c.h.b16 %v556
    %v1102 = vunpack.c.l.b16 %v557
    %v1103 = vunpack.c.h.b16 %v557
    %v1104 = vunpack.c.l.b16 %v558
    %v1105 = vunpack.c.h.b16 %v558
    %v1106 = vunpack.c.l.b16 %v559
    %v1107 = vunpack.c.h.b16 %v559
    %v1108 = vunpack.c.l.b16 %v560
    %v1109 = vunpack.c.h.b16 %v560
    %v1110 = vunpack.c.l.b16 %v561
    %v1111 = vunpack.c.h.b16 %v561
    %v1112 = vunpack.c.l.b16 %v562
    %v1113 = vunpack.c.h.b16 %v562
    %v1114 = vunpack.c.l.b16 %v563
    %v1115 = vunpack.c.h.b16 %v563
    %v1116 = vunpack.c.l.b16 %v564
    %v1117 = vunpack.c.h.b16 %v564
    %v1118 = vunpack.c.l.b16 %v565
    %v1119 = vunpack.c.h.b16 %v565
    %v1120 = vunpack.c.l.b16 %v566
    %v1121 = vunpack.c.h.b16 %v566
    %v1122 = vunpack.c.l.b16 %v567
    %v1123 = vunpack.c.h.b16 %v567
    %v1124 = vunpack.c.l.b16 %v568
    %v1125 = vunpack.c.h.b16 %v568
    %v1126 = vunpack.c.l.b16 %v569
    %v1127 = vunpack.c.h.b16 %v569
    %v1128 = vunpack.c.l.b16 %v570
    %v1129 = vunpack.c.h.b16 %v570
    %v1130 = vunpack.c.l.b16 %v571
    %v1131 = vunpack.c.h.b16 %v571
    %v1132 = vunpack.c.l.b16 %v572
    %v1133 = vunpack.c.h.b16 %v572
    %v1134 = vunpack.c.l.b16 %v573
    %v1135 = vunpack.c.h.b16 %v573
    %v1136 = vunpack.c.l.b16 %v574
    %v1137 = vunpack.c.h.b16 %v574
    %v1138 = vunpack.c.l.b16 %v575
    %v1139 = vunpack.c.h.b16 %v575
    %v1140 = vunpack.c.l.b16 %v576
    %v1141 = vunpack.c.h.b16 %v576
    %v1142 = vunpack.c.l.b16 %v577
    %v1143 = vunpack.c.h.b16 %v577
    %v1144 = vunpack.c.l.b16 %v578
    %v1145 = vunpack.c.h.b16 %v578
    %v1146 = vunpack.c.l.b16 %v579
    %v1147 = vunpack.c.h.b16 %v579
    %v1148 = vunpack.c.l.b16 %v580
    %v1149 = vunpack.c.h.b16 %v580
    %v1150 = vunpack.c.l.b16 %v581
    %v1151 = vunpack.c.h.b16 %v581
    %v1152 = vunpack.c.l.b16 %v582
    %v1153 = vunpack.c.h.b16 %v582
    %v1154 = vunpack.c.l.b16 %v583
    %v1155 = vunpack.c.h.b16 %v583
    %v1156 = vunpack.c.l.b16 %v584
    %v1157 = vunpack.c.h.b16 %v584
    %v1158 = vunpack.c.l.b16 %v585
    %v1159 = vunpack.c.h.b16 %v585
    %v1160 = vunpack.c.l.b16 %v586
    %v1161 = vunpack.c.h.b16 %v586
    %v1162 = vunpack.c.l.b16 %v587
    %v1163 = vunpack.c.h.b16 %v587
    %v1164 = vunpack.c.l.b16 %v588
    %v1165 = vunpack.c.h.b16 %v588
    %v1166 = vunpack.c.l.b16 %v589
    %v1167 = vunpack.c.h.b16 %v589
    %v1168 = vunpack.c.l.b16 %v590
    %v1169 = vunpack.c.h.b16 %v590
    %v1170 = vunpack.c.l.b16 %v591
    %v1171 = vunpack.c.h.b16 %v591
    %v1172 = vunpack.c.l.b16 %v592
    %v1173 = vunpack.c.h.b16 %v592
    %v1174 = vunpack.c.l.b16 %v593
    %v1175 = vunpack.c.h.b16 %v593
    %v1176 = vunpack.c.l.b16 %v594
    %v1177 = vunpack.c.h.b16 %v594
    %v1178 = vunpack.c.l.b16 %v595
    %v1179 = vunpack.c.h.b16 %v595
    %v1180 = vunpack.c.l.b16 %v596
    %v1181 = vunpack.c.h.b16 %v596
    %v1182 = vunpack.c.l.b16 %v597
    %v1183 = vunpack.c.h.b16 %v597
    %v1184 = vunpack.c.l.b16 %v598
    %v1185 = vunpack.c.h.b16 %v598
    %v1186 = vunpack.c.l.b16 %v599
    %v1187 = vunpack.c.h.b16 %v599
    %v1188 = vunpack.c.l.b16 %v600
    %v1189 = vunpack.c.h.b16 %v600
    %v1190 = vunpack.c.l.b16 %v601
    %v1191 = vunpack.c.h.b16 %v601
    %v1192 = vunpack.c.l.b16 %v602
    %v1193 = vunpack.c.h.b16 %v602
    %v1194 = vunpack.c.l.b16 %v603
    %v1195 = vunpack.c.h.b16 %v603
    %v1196 = vunpack.c.l.b16 %v604
    %v1197 = vunpack.c.h.b16 %v604
    %v1198 = vunpack.c.l.b16 %v605
    %v1199 = vunpack.c.h.b16 %v605
    %v1200 = vunpack.c.l.b16 %v606
    %v1201 = vunpack.c.h.b16 %v606
    %v1202 = vunpack.c.l.b16 %v607
    %v1203 = vunpack.c.h.b16 %v607
    %v1204 = vunpack.c.l.b16 %v608
    %v1205 = vunpack.c.h.b16 %v608
    %v1206 = vunpack.c.l.b16 %v609
    %v1207 = vunpack.c.h.b16 %v609
    %v1208 = vunpack.c.l.b16 %v610
    %v1209 = vunpack.c.h.b16 %v610
    %v1210 = vunpack.c.l.b16 %v611
    %v1211 = vunpack.c.h.b16 %v611
    %v1212 = vunpack.c.l.b16 %v612
    %v1213 = vunpack.c.h.b16 %v612
    %v1214 = vunpack.c.l.b16 %v613
    %v1215 = vunpack.c.h.b16 %v613
    %v1216 = vunpack.c.l.b16 %v614
    %v1217 = vunpack.c.h.b16 %v614
    %v1218 = vunpack.c.l.b16 %v615
    %v1219 = vunpack.c.h.b16 %v615
    %v1220 = vunpack.c.l.b16 %v616
    %v1221 = vunpack.c.h.b16 %v616
    %v1222 = vunpack.c.l.b16 %v617
    %v1223 = vunpack.c.h.b16 %v617
    %v1224 = vunpack.c.l.b16 %v618
    %v1225 = vunpack.c.h.b16 %v618
    %v1226 = vunpack.c.l.b16 %v619
    %v1227 = vunpack.c.h.b16 %v619
    %v1228 = vunpack.c.l.b16 %v620
    %v1229 = vunpack.c.h.b16 %v620
    %v1230 = vunpack.c.l.b16 %v621
    %v1231 = vunpack.c.h.b16 %v621
    %v1232 = vunpack.c.l.b16 %v622
    %v1233 = vunpack.c.h.b16 %v622
    %v1234 = vunpack.c.l.b16 %v623
    %v1235 = vunpack.c.h.b16 %v623
    %v1236 = vpack.c.b16 %v848, %v844
    %v1237 = vpack.c.b16 %v849, %v845
    %v1238 = vpack.c.b16 %v850, %v846
    %v1239 = vpack.c.b16 %v851, %v847
    %v1240 = vpack.c.b16 %v856, %v852
    %v1241 = vpack.c.b16 %v857, %v853
    %v1242 = vpack.c.b16 %v858, %v854
    %v1243 = vpack.c.b16 %v859, %v855
    %v1244 = vpack.c.b16 %v864, %v860
    %v1245 = vpack.c.b16 %v865, %v861
    %v1246 = vpack.c.b16 %v866, %v862
    %v1247 = vpack.c.b16 %v867, %v863
    %v1248 = vpack.c.b16 %v872, %v868
    %v1249 = vpack.c.b16 %v873, %v869
    %v1250 = vpack.c.b16 %v874, %v870
    %v1251 = vpack.c.b16 %v875, %v871
    %v1252 = vpack.c.b16 %v880, %v876
    %v1253 = vpack.c.b16 %v881, %v877
    %v1254 = vpack.c.b16 %v882, %v878
    %v1255 = vpack.c.b16 %v883, %v879
    %v1256 = vpack.c.b16 %v888, %v884
    %v1257 = vpack.c.b16 %v889, %v885
    %v1258 = vpack.c.b16 %v890, %v886
    %v1259 = vpack.c.b16 %v891, %v887
    %v1260 = vpack.c.b16 %v896, %v892
    %v1261 = vpack.c.b16 %v897, %v893
    %v1262 = vpack.c.b16 %v898, %v894
    %v1263 = vpack.c.b16 %v899, %v895
    %v1264 = vpack.c.b16 %v904, %v900
    %v1265 = vpack.c.b16 %v905, %v901
    %v1266 = vpack.c.b16 %v906, %v902
    %v1267 = vpack.c.b16 %v907, %v903
    %v1268 = vpack.c.b16 %v912, %v908
    %v1269 = vpack.c.b16 %v913, %v909
    %v1270 = vpack.c.b16 %v914, %v910
    %v1271 = vpack.c.b16 %v915, %v911
    %v1272 = vpack.c.b16 %v920, %v916
    %v1273 = vpack.c.b16 %v921, %v917
    %v1274 = vpack.c.b16 %v922, %v918
    %v1275 = vpack.c.b16 %v923, %v919
    %v1276 = vpack.c.b16 %v928, %v924
    %v1277 = vpack.c.b16 %v929, %v925
    %v1278 = vpack.c.b16 %v930, %v926
    %v1279 = vpack.c.b16 %v931, %v927
    %v1280 = vpack.c.b16 %v936, %v932
    %v1281 = vpack.c.b16 %v937, %v933
    %v1282 = vpack.c.b16 %v938, %v934
    %v1283 = vpack.c.b16 %v939, %v935
    %v1284 = vpack.c.b16 %v944, %v940
    %v1285 = vpack.c.b16 %v945, %v941
    %v1286 = vpack.c.b16 %v946, %v942
    %v1287 = vpack.c.b16 %v947, %v943
    %v1288 = vpack.c.b16 %v952, %v948
    %v1289 = vpack.c.b16 %v953, %v949
    %v1290 = vpack.c.b16 %v954, %v950
    %v1291 = vpack.c.b16 %v955, %v951
    %v1292 = vpack.c.b16 %v960, %v956
    %v1293 = vpack.c.b16 %v961, %v957
    %v1294 = vpack.c.b16 %v962, %v958
    %v1295 = vpack.c.b16 %v963, %v959
    %v1296 = vpack.c.b16 %v968, %v964
    %v1297 = vpack.c.b16 %v969, %v965
    %v1298 = vpack.c.b16 %v970, %v966
    %v1299 = vpack.c.b16 %v971, %v967
    %v1300 = vpack.c.b16 %v976, %v972
    %v1301 = vpack.c.b16 %v977, %v973
    %v1302 = vpack.c.b16 %v978, %v974
    %v1303 = vpack.c.b16 %v979, %v975
    %v1304 = vpack.c.b16 %v984, %v980
    %v1305 = vpack.c.b16 %v985, %v981
    %v1306 = vpack.c.b16 %v986, %v982
    %v1307 = vpack.c.b16 %v987, %v983
    %v1308 = vpack.c.b16 %v992, %v988
    %v1309 = vpack.c.b16 %v993, %v989
    %v1310 = vpack.c.b16 %v994, %v990
    %v1311 = vpack.c.b16 %v995, %v991
    %v1312 = vpack.c.b16 %v1000, %v996
    %v1313 = vpack.c.b16 %v1001, %v997
    %v1314 = vpack.c.b16 %v1002, %v998
    %v1315 = vpack.c.b16 %v1003, %v999
    %v1316 = vpack.c.b16 %v1008, %v1004
    %v1317 = vpack.c.b16 %v1009, %v1005
    %v1318 = vpack.c.b16 %v1010, %v1006
    %v1319 = vpack.c.b16 %v1011, %v1007
    %v1320 = vpack.c.b16 %v1016, %v1012
    %v1321 = vpack.c.b16 %v1017, %v1013
    %v1322 = vpack.c.b16 %v1018, %v1014
    %v1323 = vpack.c.b16 %v1019, %v1015
    %v1324 = vpack.c.b16 %v1024, %v1020
    %v1325 = vpack.c.b16 %v1025, %v1021
    %v1326 = vpack.c.b16 %v1026, %v1022
    %v1327 = vpack.c.b16 %v1027, %v1023
    %v1328 = vpack.c.b16 %v1032, %v1028
    %v1329 = vpack.c.b16 %v1033, %v1029
    %v1330 = vpack.c.b16 %v1034, %v1030
    %v1331 = vpack.c.b16 %v1035, %v1031
    %v1332 = vpack.c.b16 %v1040, %v1036
    %v1333 = vpack.c.b16 %v1041, %v1037
    %v1334 = vpack.c.b16 %v1042, %v1038
    %v1335 = vpack.c.b16 %v1043, %v1039
    %v1336 = vpack.c.b16 %v1048, %v1044
    %v1337 = vpack.c.b16 %v1049, %v1045
    %v1338 = vpack.c.b16 %v1050, %v1046
    %v1339 = vpack.c.b16 %v1051, %v1047
    %v1340 = vpack.c.b16 %v1056, %v1052
    %v1341 = vpack.c.b16 %v1057, %v1053
    %v1342 = vpack.c.b16 %v1058, %v1054
    %v1343 = vpack.c.b16 %v1059, %v1055
    %v1344 = vpack.c.b16 %v1064, %v1060
    %v1345 = vpack.c.b16 %v1065, %v1061
    %v1346 = vpack.c.b16 %v1066, %v1062
    %v1347 = vpack.c.b16 %v1067, %v1063
    %v1348 = vpack.c.b16 %v1072, %v1068
    %v1349 = vpack.c.b16 %v1073, %v1069
    %v1350 = vpack.c.b16 %v1074, %v1070
    %v1351 = vpack.c.b16 %v1075, %v1071
    %v1352 = vpack.c.b16 %v1080, %v1076
    %v1353 = vpack.c.b16 %v1081, %v1077
    %v1354 = vpack.c.b16 %v1082, %v1078
    %v1355 = vpack.c.b16 %v1083, %v1079
    %v1356 = vpack.c.b16 %v1088, %v1084
    %v1357 = vpack.c.b16 %v1089, %v1085
    %v1358 = vpack.c.b16 %v1090, %v1086
    %v1359 = vpack.c.b16 %v1091, %v1087
    %v1360 = vpack.c.b16 %v1096, %v1092
    %v1361 = vpack.c.b16 %v1097, %v1093
    %v1362 = vpack.c.b16 %v1098, %v1094
    %v1363 = vpack.c.b16 %v1099, %v1095
    %v1364 = vpack.c.b16 %v1104, %v1100
    %v1365 = vpack.c.b16 %v1105, %v1101
    %v1366 = vpack.c.b16 %v1106, %v1102
    %v1367 = vpack.c.b16 %v1107, %v1103
    %v1368 = vpack.c.b16 %v1112, %v1108
    %v1369 = vpack.c.b16 %v1113, %v1109
    %v1370 = vpack.c.b16 %v1114, %v1110
    %v1371 = vpack.c.b16 %v1115, %v1111
    %v1372 = vpack.c.b16 %v1120, %v1116
    %v1373 = vpack.c.b16 %v1121, %v1117
    %v1374 = vpack.c.b16 %v1122, %v1118
    %v1375 = vpack.c.b16 %v1123, %v1119
    %v1376 = vpack.c.b16 %v1128, %v1124
    %v1377 = vpack.c.b16 %v1129, %v1125
    %v1378 = vpack.c.b16 %v1130, %v1126
    %v1379 = vpack.c.b16 %v1131, %v1127
    %v1380 = vpack.c.b16 %v1136, %v1132
    %v1381 = vpack.c.b16 %v1137, %v1133
    %v1382 = vpack.c.b16 %v1138, %v1134
    %v1383 = vpack.c.b16 %v1139, %v1135
    %v1384 = vpack.c.b16 %v1144, %v1140
    %v1385 = vpack.c.b16 %v1145, %v1141
    %v1386 = vpack.c.b16 %v1146, %v1142
    %v1387 = vpack.c.b16 %v1147, %v1143
    %v1388 = vpack.c.b16 %v1152, %v1148
    %v1389 = vpack.c.b16 %v1153, %v1149
    %v1390 = vpack.c.b16 %v1154, %v1150
    %v1391 = vpack.c.b16 %v1155, %v1151
    %v1392 = vpack.c.b16 %v1160, %v1156
    %v1393 = vpack.c.b16 %v1161, %v1157
    %v1394 = vpack.c.b16 %v1162, %v1158
    %v1395 = vpack.c.b16 %v1163, %v1159
    %v1396 = vpack.c.b16 %v1168, %v1164
    %v1397 = vpack.c.b16 %v1169, %v1165
    %v1398 = vpack.c.b16 %v1170, %v1166
    %v1399 = vpack.c.b16 %v1171, %v1167
    %v1400 = vpack.c.b16 %v1176, %v1172
    %v1401 = vpack.c.b16 %v1177, %v1173
    %v1402 = vpack.c.b16 %v1178, %v1174
    %v1403 = vpack.c.b16 %v1179, %v1175
    %v1404 = vpack.c.b16 %v1184, %v1180
    %v1405 = vpack.c.b16 %v1185, %v1181
    %v1406 = vpack.c.b16 %v1186, %v1182
    %v1407 = vpack.c.b16 %v1187, %v1183
    %v1408 = vpack.c.b16 %v1192, %v1188
    %v1409 = vpack.c.b16 %v1193, %v1189
    %v1410 = vpack.c.b16 %v1194, %v1190
    %v1411 = vpack.c.b16 %v1195, %v1191
    %v1412 = vpack.c.b16 %v1200, %v1196
    %v1413 = vpack.c.b16 %v1201, %v1197
    %v1414 = vpack.c.b16 %v1202, %v1198
    %v1415 = vpack.c.b16 %v1203, %v1199
    %v1416 = vpack.c.b16 %v1208, %v1204
    %v1417 = vpack.c.b16 %v1209, %v1205
    %v1418 = vpack.c.b16 %v1210, %v1206
    %v1419 = vpack.c.b16 %v1211, %v1207
    %v1420 = vpack.c.b16 %v1216, %v1212
    %v1421 = vpack.c.b16 %v1217, %v1213
    %v1422 = vpack.c.b16 %v1218, %v1214
    %v1423 = vpack.c.b16 %v1219, %v1215
    %v1424 = vpack.c.b16 %v1224, %v1220
    %v1425 = vpack.c.b16 %v1225, %v1221
    %v1426 = vpack.c.b16 %v1226, %v1222
    %v1427 = vpack.c.b16 %v1227, %v1223
    %v1428 = vpack.c.b16 %v1232, %v1228
    %v1429 = vpack.c.b16 %v1233, %v1229
    %v1430 = vpack.c.b16 %v1234, %v1230
    %v1431 = vpack.c.b16 %v1235, %v1231
    %vm1628 = vcmask 130048
    %v1630 = vsel %vm1628, %v641, 0
    %1632 = vmatprep.subr.bf16.mxu0 %v1237
    %1633 = vmatpush1.bf16.msra.mxu0 %v1236
    %1634 = vmatprep.subr.bf16.mxu0 %v1241
    %1635 = vmatpush1.bf16.msra.mxu0 %v1240
    %1636 = vmatprep.subr.bf16.mxu0 %v1245
    %1637 = vmatpush1.bf16.msra.mxu0 %v1244
    %1638 = vmatprep.subr.bf16.mxu0 %v1249
    %1639 = vmatpush1.bf16.msra.mxu0 %v1248
    %1640 = vmatprep.subr.bf16.mxu0 %v1253
    %1641 = vmatpush1.bf16.msra.mxu0 %v1252
    %1642 = vmatprep.subr.bf16.mxu0 %v1257
    %1643 = vmatpush1.bf16.msra.mxu0 %v1256
    %1644 = vmatprep.subr.bf16.mxu0 %v1261
    %1645 = vmatpush1.bf16.msra.mxu0 %v1260
    %1646 = vmatprep.subr.bf16.mxu0 %v1265
    %1647 = vmatpush1.bf16.msra.mxu0 %v1264
    %1648 = vmatprep.subr.bf16.mxu0 %v1269
    %1649 = vmatpush1.bf16.msra.mxu0 %v1268
    %1650 = vmatprep.subr.bf16.mxu0 %v1273
    %1651 = vmatpush1.bf16.msra.mxu0 %v1272
    %1652 = vmatprep.subr.bf16.mxu0 %v1277
    %1653 = vmatpush1.bf16.msra.mxu0 %v1276
    %1654 = vmatprep.subr.bf16.mxu0 %v1281
    %1655 = vmatpush1.bf16.msra.mxu0 %v1280
    %1656 = vmatprep.subr.bf16.mxu0 %v1285
    %1657 = vmatpush1.bf16.msra.mxu0 %v1284
    %1658 = vmatprep.subr.bf16.mxu0 %v1289
    %1659 = vmatpush1.bf16.msra.mxu0 %v1288
    %1660 = vmatprep.subr.bf16.mxu0 %v1293
    %1661 = vmatpush1.bf16.msra.mxu0 %v1292
    %1662 = vmatprep.subr.bf16.mxu0 %v1297
    %1663 = vmatpush1.bf16.msra.mxu0 %v1296
    %1664 = vmatprep.mubr.bf16.mxu0 %v636
    %1665 = vmatmul.mubr.bf16.gmra.mrb[0].mxu0 %v635
    %v1666 = vpop.f32.mrb[0].mxu0
    %v1667 = vadd.f32 0.0, %v1666
    %v1668 = vpop.f32.mrb[0].mxu0
    %v1669 = vadd.f32 0.0, %v1668
    %v1670 = vpop.f32.mrb[0].mxu0
    %v1671 = vpop.f32.mrb[0].mxu0
    %1672 = vdwg.mxu0
    %1673 = vmatprep.subr.bf16.mxu0 %v1301
    %1674 = vmatpush1.bf16.msra.mxu0 %v1300
    %1675 = vmatprep.subr.bf16.mxu0 %v1305
    %1676 = vmatpush1.bf16.msra.mxu0 %v1304
    %1677 = vmatprep.subr.bf16.mxu0 %v1309
    %1678 = vmatpush1.bf16.msra.mxu0 %v1308
    %1679 = vmatprep.subr.bf16.mxu0 %v1313
    %1680 = vmatpush1.bf16.msra.mxu0 %v1312
    %1681 = vmatprep.subr.bf16.mxu0 %v1317
    %1682 = vmatpush1.bf16.msra.mxu0 %v1316
    %1683 = vmatprep.subr.bf16.mxu0 %v1321
    %1684 = vmatpush1.bf16.msra.mxu0 %v1320
    %1685 = vmatprep.subr.bf16.mxu0 %v1325
    %1686 = vmatpush1.bf16.msra.mxu0 %v1324
    %1687 = vmatprep.subr.bf16.mxu0 %v1329
    %1688 = vmatpush1.bf16.msra.mxu0 %v1328
    %1689 = vmatprep.subr.bf16.mxu0 %v1333
    %1690 = vmatpush1.bf16.msra.mxu0 %v1332
    %1691 = vmatprep.subr.bf16.mxu0 %v1337
    %1692 = vmatpush1.bf16.msra.mxu0 %v1336
    %1693 = vmatprep.subr.bf16.mxu0 %v1341
    %1694 = vmatpush1.bf16.msra.mxu0 %v1340
    %1695 = vmatprep.subr.bf16.mxu0 %v1345
    %1696 = vmatpush1.bf16.msra.mxu0 %v1344
    %1697 = vmatprep.subr.bf16.mxu0 %v1349
    %1698 = vmatpush1.bf16.msra.mxu0 %v1348
    %1699 = vmatprep.subr.bf16.mxu0 %v1353
    %1700 = vmatpush1.bf16.msra.mxu0 %v1352
    %1701 = vmatprep.subr.bf16.mxu0 %v1357
    %1702 = vmatpush1.bf16.msra.mxu0 %v1356
    %1703 = vmatprep.subr.bf16.mxu0 %v1361
    %1704 = vmatpush1.bf16.msra.mxu0 %v1360
    %1705 = vmatprep.mubr.bf16.mxu0 %v638
    %1706 = vmatmul.mubr.bf16.gmra.mrb[0].mxu0 %v637
    %v1707 = vpop.f32.mrb[0].mxu0
    %v1708 = vadd.f32 %v1667, %v1707
    %v1709 = vpop.f32.mrb[0].mxu0
    %v1710 = vadd.f32 %v1669, %v1709
    %v1711 = vpop.f32.mrb[0].mxu0
    %v1712 = vpop.f32.mrb[0].mxu0
    %1713 = vdwg.mxu0
    %1714 = vmatprep.subr.bf16.mxu0 %v1365
    %1715 = vmatpush1.bf16.msra.mxu0 %v1364
    %1716 = vmatprep.subr.bf16.mxu0 %v1369
    %1717 = vmatpush1.bf16.msra.mxu0 %v1368
    %1718 = vmatprep.subr.bf16.mxu0 %v1373
    %1719 = vmatpush1.bf16.msra.mxu0 %v1372
    %1720 = vmatprep.subr.bf16.mxu0 %v1377
    %1721 = vmatpush1.bf16.msra.mxu0 %v1376
    %1722 = vmatprep.subr.bf16.mxu0 %v1381
    %1723 = vmatpush1.bf16.msra.mxu0 %v1380
    %1724 = vmatprep.subr.bf16.mxu0 %v1385
    %1725 = vmatpush1.bf16.msra.mxu0 %v1384
    %1726 = vmatprep.subr.bf16.mxu0 %v1389
    %1727 = vmatpush1.bf16.msra.mxu0 %v1388
    %1728 = vmatprep.subr.bf16.mxu0 %v1393
    %1729 = vmatpush1.bf16.msra.mxu0 %v1392
    %1730 = vmatprep.subr.bf16.mxu0 %v1397
    %1731 = vmatpush1.bf16.msra.mxu0 %v1396
    %1732 = vmatprep.subr.bf16.mxu0 %v1401
    %1733 = vmatpush1.bf16.msra.mxu0 %v1400
    %1734 = vmatprep.subr.bf16.mxu0 %v1405
    %1735 = vmatpush1.bf16.msra.mxu0 %v1404
    %1736 = vmatprep.subr.bf16.mxu0 %v1409
    %1737 = vmatpush1.bf16.msra.mxu0 %v1408
    %1738 = vmatprep.subr.bf16.mxu0 %v1413
    %1739 = vmatpush1.bf16.msra.mxu0 %v1412
    %1740 = vmatprep.subr.bf16.mxu0 %v1417
    %1741 = vmatpush1.bf16.msra.mxu0 %v1416
    %1742 = vmatprep.subr.bf16.mxu0 %v1421
    %1743 = vmatpush1.bf16.msra.mxu0 %v1420
    %1744 = vmatprep.subr.bf16.mxu0 %v1425
    %1745 = vmatpush1.bf16.msra.mxu0 %v1424
    %1746 = vmatprep.mubr.bf16.mxu0 %v640
    %1747 = vmatmul.mubr.bf16.gmra.mrb[0].mxu0 %v639
    %v1748 = vpop.f32.mrb[0].mxu0
    %v1749 = vadd.f32 %v1708, %v1748
    %v1750 = vpop.f32.mrb[0].mxu0
    %v1751 = vadd.f32 %v1710, %v1750
    %v1752 = vpop.f32.mrb[0].mxu0
    %v1753 = vpop.f32.mrb[0].mxu0
    %1754 = vdwg.mxu0
    %1755 = vmatprep.subr.bf16.mxu0 %v1429
    %1756 = vmatpush1.bf16.msra.mxu0 %v1428
    %1757 = vmatprep.subr.bf16.mxu0 0
    %1758 = vmatpush1.bf16.msra.mxu0 0
    %1759 = vmatprep.subr.bf16.mxu0 0
    %1760 = vmatpush1.bf16.msra.mxu0 0
    %1761 = vmatprep.subr.bf16.mxu0 0
    %1762 = vmatpush1.bf16.msra.mxu0 0
    %1763 = vmatprep.subr.bf16.mxu0 0
    %1764 = vmatpush1.bf16.msra.mxu0 0
    %1765 = vmatprep.subr.bf16.mxu0 0
    %1766 = vmatpush1.bf16.msra.mxu0 0
    %1767 = vmatprep.subr.bf16.mxu0 0
    %1768 = vmatpush1.bf16.msra.mxu0 0
    %1769 = vmatprep.subr.bf16.mxu0 0
    %1770 = vmatpush1.bf16.msra.mxu0 0
    %1771 = vmatprep.subr.bf16.mxu0 0
    %1772 = vmatpush1.bf16.msra.mxu0 0
    %1773 = vmatprep.subr.bf16.mxu0 0
    %1774 = vmatpush1.bf16.msra.mxu0 0
    %1775 = vmatprep.subr.bf16.mxu0 0
    %1776 = vmatpush1.bf16.msra.mxu0 0
    %1777 = vmatprep.subr.bf16.mxu0 0
    %1778 = vmatpush1.bf16.msra.mxu0 0
    %1779 = vmatprep.subr.bf16.mxu0 0
    %1780 = vmatpush1.bf16.msra.mxu0 0
    %1781 = vmatprep.subr.bf16.mxu0 0
    %1782 = vmatpush1.bf16.msra.mxu0 0
    %1783 = vmatprep.subr.bf16.mxu0 0
    %1784 = vmatpush1.bf16.msra.mxu0 0
    %1785 = vmatprep.subr.bf16.mxu0 0
    %1786 = vmatpush1.bf16.msra.mxu0 0
    %1787 = vmatprep.mubr.bf16.mxu0 0
    %1788 = vmatmul.mubr.bf16.gmra.mrb[0].mxu0 %v1630
    %v1789 = vpop.f32.mrb[0].mxu0
    %v1790 = vadd.f32 %v1749, %v1789
    %v1791 = vpop.f32.mrb[0].mxu0
    %v1792 = vadd.f32 %v1751, %v1791
    %v1793 = vpop.f32.mrb[0].mxu0
    %v1794 = vpop.f32.mrb[0].mxu0
    %1795 = vdwg.mxu0
    %1796 = vmatprep.subr.bf16.mxu0 %v1239
    %1797 = vmatpush1.bf16.msra.mxu0 %v1238
    %1798 = vmatprep.subr.bf16.mxu0 %v1243
    %1799 = vmatpush1.bf16.msra.mxu0 %v1242
    %1800 = vmatprep.subr.bf16.mxu0 %v1247
    %1801 = vmatpush1.bf16.msra.mxu0 %v1246
    %1802 = vmatprep.subr.bf16.mxu0 %v1251
    %1803 = vmatpush1.bf16.msra.mxu0 %v1250
    %1804 = vmatprep.subr.bf16.mxu0 %v1255
    %1805 = vmatpush1.bf16.msra.mxu0 %v1254
    %1806 = vmatprep.subr.bf16.mxu0 %v1259
    %1807 = vmatpush1.bf16.msra.mxu0 %v1258
    %1808 = vmatprep.subr.bf16.mxu0 %v1263
    %1809 = vmatpush1.bf16.msra.mxu0 %v1262
    %1810 = vmatprep.subr.bf16.mxu0 %v1267
    %1811 = vmatpush1.bf16.msra.mxu0 %v1266
    %1812 = vmatprep.subr.bf16.mxu0 %v1271
    %1813 = vmatpush1.bf16.msra.mxu0 %v1270
    %1814 = vmatprep.subr.bf16.mxu0 %v1275
    %1815 = vmatpush1.bf16.msra.mxu0 %v1274
    %1816 = vmatprep.subr.bf16.mxu0 %v1279
    %1817 = vmatpush1.bf16.msra.mxu0 %v1278
    %1818 = vmatprep.subr.bf16.mxu0 %v1283
    %1819 = vmatpush1.bf16.msra.mxu0 %v1282
    %1820 = vmatprep.subr.bf16.mxu0 %v1287
    %1821 = vmatpush1.bf16.msra.mxu0 %v1286
    %1822 = vmatprep.subr.bf16.mxu0 %v1291
    %1823 = vmatpush1.bf16.msra.mxu0 %v1290
    %1824 = vmatprep.subr.bf16.mxu0 %v1295
    %1825 = vmatpush1.bf16.msra.mxu0 %v1294
    %1826 = vmatprep.subr.bf16.mxu0 %v1299
    %1827 = vmatpush1.bf16.msra.mxu0 %v1298
    %1828 = vmatprep.mubr.bf16.mxu0 %v636
    %1829 = vmatmul.mubr.bf16.gmra.mrb[0].mxu0 %v635
    %v1830 = vpop.f32.mrb[0].mxu0
    %v1831 = vadd.f32 0.0, %v1830
    %v1832 = vpop.f32.mrb[0].mxu0
    %v1833 = vadd.f32 0.0, %v1832
    %v1834 = vpop.f32.mrb[0].mxu0
    %v1835 = vpop.f32.mrb[0].mxu0
    %1836 = vdwg.mxu0
    %1837 = vmatprep.subr.bf16.mxu0 %v1303
    %1838 = vmatpush1.bf16.msra.mxu0 %v1302
    %1839 = vmatprep.subr.bf16.mxu0 %v1307
    %1840 = vmatpush1.bf16.msra.mxu0 %v1306
    %1841 = vmatprep.subr.bf16.mxu0 %v1311
    %1842 = vmatpush1.bf16.msra.mxu0 %v1310
    %1843 = vmatprep.subr.bf16.mxu0 %v1315
    %1844 = vmatpush1.bf16.msra.mxu0 %v1314
    %1845 = vmatprep.subr.bf16.mxu0 %v1319
    %1846 = vmatpush1.bf16.msra.mxu0 %v1318
    %1847 = vmatprep.subr.bf16.mxu0 %v1323
    %1848 = vmatpush1.bf16.msra.mxu0 %v1322
    %1849 = vmatprep.subr.bf16.mxu0 %v1327
    %1850 = vmatpush1.bf16.msra.mxu0 %v1326
    %1851 = vmatprep.subr.bf16.mxu0 %v1331
    %1852 = vmatpush1.bf16.msra.mxu0 %v1330
    %1853 = vmatprep.subr.bf16.mxu0 %v1335
    %1854 = vmatpush1.bf16.msra.mxu0 %v1334
    %1855 = vmatprep.subr.bf16.mxu0 %v1339
    %1856 = vmatpush1.bf16.msra.mxu0 %v1338
    %1857 = vmatprep.subr.bf16.mxu0 %v1343
    %1858 = vmatpush1.bf16.msra.mxu0 %v1342
    %1859 = vmatprep.subr.bf16.mxu0 %v1347
    %1860 = vmatpush1.bf16.msra.mxu0 %v1346
    %1861 = vmatprep.subr.bf16.mxu0 %v1351
    %1862 = vmatpush1.bf16.msra.mxu0 %v1350
    %1863 = vmatprep.subr.bf16.mxu0 %v1355
    %1864 = vmatpush1.bf16.msra.mxu0 %v1354
    %1865 = vmatprep.subr.bf16.mxu0 %v1359
    %1866 = vmatpush1.bf16.msra.mxu0 %v1358
    %1867 = vmatprep.subr.bf16.mxu0 %v1363
    %1868 = vmatpush1.bf16.msra.mxu0 %v1362
    %1869 = vmatprep.mubr.bf16.mxu0 %v638
    %1870 = vmatmul.mubr.bf16.gmra.mrb[0].mxu0 %v637
    %v1871 = vpop.f32.mrb[0].mxu0
    %v1872 = vadd.f32 %v1831, %v1871
    %v1873 = vpop.f32.mrb[0].mxu0
    %v1874 = vadd.f32 %v1833, %v1873
    %v1875 = vpop.f32.mrb[0].mxu0
    %v1876 = vpop.f32.mrb[0].mxu0
    %1877 = vdwg.mxu0
    %1878 = vmatprep.subr.bf16.mxu0 %v1367
    %1879 = vmatpush1.bf16.msra.mxu0 %v1366
    %1880 = vmatprep.subr.bf16.mxu0 %v1371
    %1881 = vmatpush1.bf16.msra.mxu0 %v1370
    %1882 = vmatprep.subr.bf16.mxu0 %v1375
    %1883 = vmatpush1.bf16.msra.mxu0 %v1374
    %1884 = vmatprep.subr.bf16.mxu0 %v1379
    %1885 = vmatpush1.bf16.msra.mxu0 %v1378
    %1886 = vmatprep.subr.bf16.mxu0 %v1383
    %1887 = vmatpush1.bf16.msra.mxu0 %v1382
    %1888 = vmatprep.subr.bf16.mxu0 %v1387
    %1889 = vmatpush1.bf16.msra.mxu0 %v1386
    %1890 = vmatprep.subr.bf16.mxu0 %v1391
    %1891 = vmatpush1.bf16.msra.mxu0 %v1390
    %1892 = vmatprep.subr.bf16.mxu0 %v1395
    %1893 = vmatpush1.bf16.msra.mxu0 %v1394
    %1894 = vmatprep.subr.bf16.mxu0 %v1399
    %1895 = vmatpush1.bf16.msra.mxu0 %v1398
    %1896 = vmatprep.subr.bf16.mxu0 %v1403
    %1897 = vmatpush1.bf16.msra.mxu0 %v1402
    %1898 = vmatprep.subr.bf16.mxu0 %v1407
    %1899 = vmatpush1.bf16.msra.mxu0 %v1406
    %1900 = vmatprep.subr.bf16.mxu0 %v1411
    %1901 = vmatpush1.bf16.msra.mxu0 %v1410
    %1902 = vmatprep.subr.bf16.mxu0 %v1415
    %1903 = vmatpush1.bf16.msra.mxu0 %v1414
    %1904 = vmatprep.subr.bf16.mxu0 %v1419
    %1905 = vmatpush1.bf16.msra.mxu0 %v1418
    %1906 = vmatprep.subr.bf16.mxu0 %v1423
    %1907 = vmatpush1.bf16.msra.mxu0 %v1422
    %1908 = vmatprep.subr.bf16.mxu0 %v1427
    %1909 = vmatpush1.bf16.msra.mxu0 %v1426
    %1910 = vmatprep.mubr.bf16.mxu0 %v640
    %1911 = vmatmul.mubr.bf16.gmra.mrb[0].mxu0 %v639
    %v1912 = vpop.f32.mrb[0].mxu0
    %v1913 = vadd.f32 %v1872, %v1912
    %v1914 = vpop.f32.mrb[0].mxu0
    %v1915 = vadd.f32 %v1874, %v1914
    %v1916 = vpop.f32.mrb[0].mxu0
    %v1917 = vpop.f32.mrb[0].mxu0
    %1918 = vdwg.mxu0
    %1919 = vmatprep.subr.bf16.mxu0 %v1431
    %1920 = vmatpush1.bf16.msra.mxu0 %v1430
    %1921 = vmatprep.subr.bf16.mxu0 0
    %1922 = vmatpush1.bf16.msra.mxu0 0
    %1923 = vmatprep.subr.bf16.mxu0 0
    %1924 = vmatpush1.bf16.msra.mxu0 0
    %1925 = vmatprep.subr.bf16.mxu0 0
    %1926 = vmatpush1.bf16.msra.mxu0 0
    %1927 = vmatprep.subr.bf16.mxu0 0
    %1928 = vmatpush1.bf16.msra.mxu0 0
    %1929 = vmatprep.subr.bf16.mxu0 0
    %1930 = vmatpush1.bf16.msra.mxu0 0
    %1931 = vmatprep.subr.bf16.mxu0 0
    %1932 = vmatpush1.bf16.msra.mxu0 0
    %1933 = vmatprep.subr.bf16.mxu0 0
    %1934 = vmatpush1.bf16.msra.mxu0 0
    %1935 = vmatprep.subr.bf16.mxu0 0
    %1936 = vmatpush1.bf16.msra.mxu0 0
    %1937 = vmatprep.subr.bf16.mxu0 0
    %1938 = vmatpush1.bf16.msra.mxu0 0
    %1939 = vmatprep.subr.bf16.mxu0 0
    %1940 = vmatpush1.bf16.msra.mxu0 0
    %1941 = vmatprep.subr.bf16.mxu0 0
    %1942 = vmatpush1.bf16.msra.mxu0 0
    %1943 = vmatprep.subr.bf16.mxu0 0
    %1944 = vmatpush1.bf16.msra.mxu0 0
    %1945 = vmatprep.subr.bf16.mxu0 0
    %1946 = vmatpush1.bf16.msra.mxu0 0
    %1947 = vmatprep.subr.bf16.mxu0 0
    %1948 = vmatpush1.bf16.msra.mxu0 0
    %1949 = vmatprep.subr.bf16.mxu0 0
    %1950 = vmatpush1.bf16.msra.mxu0 0
    %1951 = vmatprep.mubr.bf16.mxu0 0
    %1952 = vmatmul.mubr.bf16.gmra.mrb[0].mxu0 %v1630
    %v1953 = vpop.f32.mrb[0].mxu0
    %v1954 = vadd.f32 %v1913, %v1953
    %v1955 = vpop.f32.mrb[0].mxu0
    %v1956 = vadd.f32 %v1915, %v1955
    %v1957 = vpop.f32.mrb[0].mxu0
    %v1958 = vpop.f32.mrb[0].mxu0
    %1959 = vdwg.mxu0
    %v1960 = vld [vmem:[#allocation5] sm:$0xf]
    %v1961 = vld [vmem:[#allocation7] sm:$0xf]
    %v1962 = vrot.slane %v1790, 4
    %v1963 = vadd.f32 %v1790, %v1962
    %v1964 = vrot.slane %v1963, 2
    %v1965 = vadd.f32 %v1963, %v1964
    %v1966 = vrot.slane %v1965, 1
    %v1967 = vadd.f32 %v1965, %v1966
    %v1968 = vrot.slane %v1792, 4
    %v1969 = vadd.f32 %v1792, %v1968
    %v1970 = vrot.slane %v1969, 2
    %v1971 = vadd.f32 %v1969, %v1970
    %v1972 = vrot.slane %v1971, 1
    %v1973 = vadd.f32 %v1971, %v1972
    %v1974 = vrot.slane %v1954, 4
    %v1975 = vadd.f32 %v1954, %v1974
    %v1976 = vrot.slane %v1975, 2
    %v1977 = vadd.f32 %v1975, %v1976
    %v1978 = vrot.slane %v1977, 1
    %v1979 = vadd.f32 %v1977, %v1978
    %v1980 = vrot.slane %v1956, 4
    %v1981 = vadd.f32 %v1956, %v1980
    %v1982 = vrot.slane %v1981, 2
    %v1983 = vadd.f32 %v1981, %v1982
    %v1984 = vrot.slane %v1983, 1
    %v1985 = vadd.f32 %v1983, %v1984
    %v1986 = vrcp.pop 8.0
    %v1987 = vmul.f32 %v1967, %v1986
    %v1988 = vmul.f32 %v1973, %v1986
    %v1989 = vmul.f32 %v1979, %v1986
    %v1990 = vmul.f32 %v1985, %v1986
    %v1991 = vsub.f32 %v1790, %v1987
    %v1992 = vsub.f32 %v1792, %v1988
    %v1993 = vsub.f32 %v1954, %v1989
    %v1994 = vsub.f32 %v1956, %v1990
    %v1995 = vmul.f32 %v1991, %v1991
    %v1996 = vmul.f32 %v1992, %v1992
    %v1997 = vmul.f32 %v1993, %v1993
    %v1998 = vmul.f32 %v1994, %v1994
    %v1999 = vrot.slane %v1995, 4
    %v2000 = vadd.f32 %v1995, %v1999
    %v2001 = vrot.slane %v2000, 2
    %v2002 = vadd.f32 %v2000, %v2001
    %v2003 = vrot.slane %v2002, 1
    %v2004 = vadd.f32 %v2002, %v2003
    %v2005 = vrot.slane %v1996, 4
    %v2006 = vadd.f32 %v1996, %v2005
    %v2007 = vrot.slane %v2006, 2
    %v2008 = vadd.f32 %v2006, %v2007
    %v2009 = vrot.slane %v2008, 1
    %v2010 = vadd.f32 %v2008, %v2009
    %v2011 = vrot.slane %v1997, 4
    %v2012 = vadd.f32 %v1997, %v2011
    %v2013 = vrot.slane %v2012, 2
    %v2014 = vadd.f32 %v2012, %v2013
    %v2015 = vrot.slane %v2014, 1
    %v2016 = vadd.f32 %v2014, %v2015
    %v2017 = vrot.slane %v1998, 4
    %v2018 = vadd.f32 %v1998, %v2017
    %v2019 = vrot.slane %v2018, 2
    %v2020 = vadd.f32 %v2018, %v2019
    %v2021 = vrot.slane %v2020, 1
    %v2022 = vadd.f32 %v2020, %v2021
    %v2023 = vmul.f32 %v2004, %v1986
    %v2024 = vmul.f32 %v2010, %v1986
    %v2025 = vmul.f32 %v2016, %v1986
    %v2026 = vmul.f32 %v2022, %v1986
    %v2027 = vadd.f32 %v2023, 1e-05
    %v2028 = vadd.f32 %v2024, 1e-05
    %v2029 = vadd.f32 %v2025, 1e-05
    %v2030 = vadd.f32 %v2026, 1e-05
    %v2031 = vrsqrt.pop %v2027
    %v2032 = vrsqrt.pop %v2028
    %v2033 = vrsqrt.pop %v2029
    %v2034 = vrsqrt.pop %v2030
    %v2035 = vmul.f32 %v1991, %v2031
    %v2036 = vmul.f32 %v1992, %v2032
    %v2037 = vmul.f32 %v1993, %v2033
    %v2038 = vmul.f32 %v1994, %v2034
    %v2040 = vlaneseq
    %v2041 = vshrl.u32 %v2040, 7
    %v2042 = vsub.s32 0, %v2041
    %v2043 = vrot.slane %v1960, %v2042
    %v2044 = vlaneseq
    %v2045 = vshrl.u32 %v2044, 7
    %v2046 = vsub.s32 1, %v2045
    %v2047 = vrot.slane %v1960, %v2046
    %v2048 = vlaneseq
    %v2049 = vshrl.u32 %v2048, 7
    %v2050 = vsub.s32 2, %v2049
    %v2051 = vrot.slane %v1960, %v2050
    %v2052 = vlaneseq
    %v2053 = vshrl.u32 %v2052, 7
    %v2054 = vsub.s32 3, %v2053
    %v2055 = vrot.slane %v1960, %v2054
    %v2060 = vmul.f32 %v2035, %v2043
    %v2061 = vmul.f32 %v2036, %v2047
    %v2062 = vmul.f32 %v2037, %v2051
    %v2063 = vmul.f32 %v2038, %v2055
    %v2065 = vlaneseq
    %v2066 = vshrl.u32 %v2065, 7
    %v2067 = vsub.s32 0, %v2066
    %v2068 = vrot.slane %v1961, %v2067
    %v2069 = vlaneseq
    %v2070 = vshrl.u32 %v2069, 7
    %v2071 = vsub.s32 1, %v2070
    %v2072 = vrot.slane %v1961, %v2071
    %v2073 = vlaneseq
    %v2074 = vshrl.u32 %v2073, 7
    %v2075 = vsub.s32 2, %v2074
    %v2076 = vrot.slane %v1961, %v2075
    %v2077 = vlaneseq
    %v2078 = vshrl.u32 %v2077, 7
    %v2079 = vsub.s32 3, %v2078
    %v2080 = vrot.slane %v1961, %v2079
    %v2085 = vadd.f32 %v2060, %v2068
    %v2086 = vadd.f32 %v2061, %v2072
    %v2087 = vadd.f32 %v2062, %v2076
    %v2088 = vadd.f32 %v2063, %v2080
    %v2089 = vmax.f32 %v2085, 0.0
    %v2090 = vmax.f32 %v2086, 0.0
    %v2091 = vmax.f32 %v2087, 0.0
    %v2092 = vmax.f32 %v2088, 0.0
    %v2093 = vpack.c.bf16 %v2089, %v2089
    %v2094 = vpack.c.bf16 %v2090, %v2090
    %v2095 = vpack.c.bf16 %v2091, %v2091
    %v2096 = vpack.c.bf16 %v2092, %v2092
    %v2097 = vld [vmem:[#allocation8] sm:$0xff]
    %v2098 = vld [vmem:[#allocation8 + $0x8] sm:$0xff]
    %v2099 = vld [vmem:[#allocation8 + $0x10] sm:$0xff]
    %v2100 = vld [vmem:[#allocation8 + $0x18] sm:$0xff]
    %v2101 = vld [vmem:[#allocation8 + $0x20] sm:$0xff]
    %v2102 = vld [vmem:[#allocation8 + $0x28] sm:$0xff]
    %v2103 = vld [vmem:[#allocation8 + $0x30] sm:$0xff]
    %v2104 = vld [vmem:[#allocation8 + $0x38] sm:$0xff]
    %v2105 = vld [vmem:[#allocation8 + $0x40] sm:$0xff]
    %v2106 = vld [vmem:[#allocation8 + $0x48] sm:$0xff]
    %v2107 = vld [vmem:[#allocation8 + $0x50] sm:$0xff]
    %v2108 = vld [vmem:[#allocation8 + $0x58] sm:$0xff]
    %v2109 = vld [vmem:[#allocation8 + $0x60] sm:$0xff]
    %v2110 = vld [vmem:[#allocation8 + $0x68] sm:$0xff]
    %v2111 = vld [vmem:[#allocation8 + $0x70] sm:$0xff]
    %v2112 = vld [vmem:[#allocation8 + $0x78] sm:$0xff]
    %v2113 = vld [vmem:[#allocation8 + $0x80] sm:$0xff]
    %v2114 = vld [vmem:[#allocation8 + $0x88] sm:$0xff]
    %v2115 = vld [vmem:[#allocation8 + $0x90] sm:$0xff]
    %v2116 = vld [vmem:[#allocation8 + $0x98] sm:$0xff]
    %v2117 = vld [vmem:[#allocation8 + $0xa0] sm:$0xff]
    %v2118 = vld [vmem:[#allocation8 + $0xa8] sm:$0xff]
    %v2119 = vld [vmem:[#allocation8 + $0xb0] sm:$0xff]
    %v2120 = vld [vmem:[#allocation8 + $0xb8] sm:$0xff]
    %v2121 = vld [vmem:[#allocation8 + $0xc0] sm:$0xff]
    %v2122 = vld [vmem:[#allocation8 + $0xc8] sm:$0xff]
    %v2123 = vld [vmem:[#allocation8 + $0xd0] sm:$0xff]
    %v2124 = vld [vmem:[#allocation8 + $0xd8] sm:$0xff]
    %v2125 = vld [vmem:[#allocation8 + $0xe0] sm:$0xff]
    %v2126 = vld [vmem:[#allocation8 + $0xe8] sm:$0xff]
    %v2127 = vld [vmem:[#allocation8 + $0xf0] sm:$0xff]
    %v2128 = vld [vmem:[#allocation8 + $0xf8] sm:$0xff]
    %v2129 = vld [vmem:[#allocation8 + $0x100] sm:$0xff]
    %v2130 = vld [vmem:[#allocation8 + $0x108] sm:$0xff]
    %v2131 = vld [vmem:[#allocation8 + $0x110] sm:$0xff]
    %v2132 = vld [vmem:[#allocation8 + $0x118] sm:$0xff]
    %v2133 = vld [vmem:[#allocation8 + $0x120] sm:$0xff]
    %v2134 = vld [vmem:[#allocation8 + $0x128] sm:$0xff]
    %v2135 = vld [vmem:[#allocation8 + $0x130] sm:$0xff]
    %v2136 = vld [vmem:[#allocation8 + $0x138] sm:$0xff]
    %v2137 = vld [vmem:[#allocation8 + $0x140] sm:$0xff]
    %v2138 = vld [vmem:[#allocation8 + $0x148] sm:$0xff]
    %v2139 = vld [vmem:[#allocation8 + $0x150] sm:$0xff]
    %v2140 = vld [vmem:[#allocation8 + $0x158] sm:$0xff]
    %v2141 = vld [vmem:[#allocation8 + $0x160] sm:$0xff]
    %v2142 = vld [vmem:[#allocation8 + $0x168] sm:$0xff]
    %v2143 = vld [vmem:[#allocation8 + $0x170] sm:$0xff]
    %v2144 = vld [vmem:[#allocation8 + $0x178] sm:$0xff]
    %v2145 = vld [vmem:[#allocation8 + $0x180] sm:$0xff]
    %v2146 = vld [vmem:[#allocation8 + $0x188] sm:$0xff]
    %v2147 = vld [vmem:[#allocation8 + $0x190] sm:$0xff]
    %v2148 = vld [vmem:[#allocation8 + $0x198] sm:$0xff]
    %v2149 = vld [vmem:[#allocation8 + $0x1a0] sm:$0xff]
    %v2150 = vld [vmem:[#allocation8 + $0x1a8] sm:$0xff]
    %v2151 = vld [vmem:[#allocation8 + $0x1b0] sm:$0xff]
    %v2152 = vld [vmem:[#allocation8 + $0x1b8] sm:$0xff]
    %v2153 = vld [vmem:[#allocation8 + $0x1c0] sm:$0xff]
    %v2154 = vld [vmem:[#allocation8 + $0x1c8] sm:$0xff]
    %v2155 = vld [vmem:[#allocation8 + $0x1d0] sm:$0xff]
    %v2156 = vld [vmem:[#allocation8 + $0x1d8] sm:$0xff]
    %v2157 = vld [vmem:[#allocation8 + $0x1e0] sm:$0xff]
    %v2158 = vld [vmem:[#allocation8 + $0x1e8] sm:$0xff]
    %v2159 = vld [vmem:[#allocation8 + $0x1f0] sm:$0xff]
    %v2160 = vld [vmem:[#allocation8 + $0x1f8] sm:$0xff]
    %v2225 = vunpack.c.l.b16 %v2097
    %v2226 = vunpack.c.h.b16 %v2097
    %v2227 = vunpack.c.l.b16 %v2098
    %v2228 = vunpack.c.h.b16 %v2098
    %v2229 = vunpack.c.l.b16 %v2099
    %v2230 = vunpack.c.h.b16 %v2099
    %v2231 = vunpack.c.l.b16 %v2100
    %v2232 = vunpack.c.h.b16 %v2100
    %v2233 = vunpack.c.l.b16 %v2101
    %v2234 = vunpack.c.h.b16 %v2101
    %v2235 = vunpack.c.l.b16 %v2102
    %v2236 = vunpack.c.h.b16 %v2102
    %v2237 = vunpack.c.l.b16 %v2103
    %v2238 = vunpack.c.h.b16 %v2103
    %v2239 = vunpack.c.l.b16 %v2104
    %v2240 = vunpack.c.h.b16 %v2104
    %v2241 = vunpack.c.l.b16 %v2105
    %v2242 = vunpack.c.h.b16 %v2105
    %v2243 = vunpack.c.l.b16 %v2106
    %v2244 = vunpack.c.h.b16 %v2106
    %v2245 = vunpack.c.l.b16 %v2107
    %v2246 = vunpack.c.h.b16 %v2107
    %v2247 = vunpack.c.l.b16 %v2108
    %v2248 = vunpack.c.h.b16 %v2108
    %v2249 = vunpack.c.l.b16 %v2109
    %v2250 = vunpack.c.h.b16 %v2109
    %v2251 = vunpack.c.l.b16 %v2110
    %v2252 = vunpack.c.h.b16 %v2110
    %v2253 = vunpack.c.l.b16 %v2111
    %v2254 = vunpack.c.h.b16 %v2111
    %v2255 = vunpack.c.l.b16 %v2112
    %v2256 = vunpack.c.h.b16 %v2112
    %v2257 = vunpack.c.l.b16 %v2113
    %v2258 = vunpack.c.h.b16 %v2113
    %v2259 = vunpack.c.l.b16 %v2114
    %v2260 = vunpack.c.h.b16 %v2114
    %v2261 = vunpack.c.l.b16 %v2115
    %v2262 = vunpack.c.h.b16 %v2115
    %v2263 = vunpack.c.l.b16 %v2116
    %v2264 = vunpack.c.h.b16 %v2116
    %v2265 = vunpack.c.l.b16 %v2117
    %v2266 = vunpack.c.h.b16 %v2117
    %v2267 = vunpack.c.l.b16 %v2118
    %v2268 = vunpack.c.h.b16 %v2118
    %v2269 = vunpack.c.l.b16 %v2119
    %v2270 = vunpack.c.h.b16 %v2119
    %v2271 = vunpack.c.l.b16 %v2120
    %v2272 = vunpack.c.h.b16 %v2120
    %v2273 = vunpack.c.l.b16 %v2121
    %v2274 = vunpack.c.h.b16 %v2121
    %v2275 = vunpack.c.l.b16 %v2122
    %v2276 = vunpack.c.h.b16 %v2122
    %v2277 = vunpack.c.l.b16 %v2123
    %v2278 = vunpack.c.h.b16 %v2123
    %v2279 = vunpack.c.l.b16 %v2124
    %v2280 = vunpack.c.h.b16 %v2124
    %v2281 = vunpack.c.l.b16 %v2125
    %v2282 = vunpack.c.h.b16 %v2125
    %v2283 = vunpack.c.l.b16 %v2126
    %v2284 = vunpack.c.h.b16 %v2126
    %v2285 = vunpack.c.l.b16 %v2127
    %v2286 = vunpack.c.h.b16 %v2127
    %v2287 = vunpack.c.l.b16 %v2128
    %v2288 = vunpack.c.h.b16 %v2128
    %v2289 = vunpack.c.l.b16 %v2129
    %v2290 = vunpack.c.h.b16 %v2129
    %v2291 = vunpack.c.l.b16 %v2130
    %v2292 = vunpack.c.h.b16 %v2130
    %v2293 = vunpack.c.l.b16 %v2131
    %v2294 = vunpack.c.h.b16 %v2131
    %v2295 = vunpack.c.l.b16 %v2132
    %v2296 = vunpack.c.h.b16 %v2132
    %v2297 = vunpack.c.l.b16 %v2133
    %v2298 = vunpack.c.h.b16 %v2133
    %v2299 = vunpack.c.l.b16 %v2134
    %v2300 = vunpack.c.h.b16 %v2134
    %v2301 = vunpack.c.l.b16 %v2135
    %v2302 = vunpack.c.h.b16 %v2135
    %v2303 = vunpack.c.l.b16 %v2136
    %v2304 = vunpack.c.h.b16 %v2136
    %v2305 = vunpack.c.l.b16 %v2137
    %v2306 = vunpack.c.h.b16 %v2137
    %v2307 = vunpack.c.l.b16 %v2138
    %v2308 = vunpack.c.h.b16 %v2138
    %v2309 = vunpack.c.l.b16 %v2139
    %v2310 = vunpack.c.h.b16 %v2139
    %v2311 = vunpack.c.l.b16 %v2140
    %v2312 = vunpack.c.h.b16 %v2140
    %v2313 = vunpack.c.l.b16 %v2141
    %v2314 = vunpack.c.h.b16 %v2141
    %v2315 = vunpack.c.l.b16 %v2142
    %v2316 = vunpack.c.h.b16 %v2142
    %v2317 = vunpack.c.l.b16 %v2143
    %v2318 = vunpack.c.h.b16 %v2143
    %v2319 = vunpack.c.l.b16 %v2144
    %v2320 = vunpack.c.h.b16 %v2144
    %v2321 = vunpack.c.l.b16 %v2145
    %v2322 = vunpack.c.h.b16 %v2145
    %v2323 = vunpack.c.l.b16 %v2146
    %v2324 = vunpack.c.h.b16 %v2146
    %v2325 = vunpack.c.l.b16 %v2147
    %v2326 = vunpack.c.h.b16 %v2147
    %v2327 = vunpack.c.l.b16 %v2148
    %v2328 = vunpack.c.h.b16 %v2148
    %v2329 = vunpack.c.l.b16 %v2149
    %v2330 = vunpack.c.h.b16 %v2149
    %v2331 = vunpack.c.l.b16 %v2150
    %v2332 = vunpack.c.h.b16 %v2150
    %v2333 = vunpack.c.l.b16 %v2151
    %v2334 = vunpack.c.h.b16 %v2151
    %v2335 = vunpack.c.l.b16 %v2152
    %v2336 = vunpack.c.h.b16 %v2152
    %v2337 = vunpack.c.l.b16 %v2153
    %v2338 = vunpack.c.h.b16 %v2153
    %v2339 = vunpack.c.l.b16 %v2154
    %v2340 = vunpack.c.h.b16 %v2154
    %v2341 = vunpack.c.l.b16 %v2155
    %v2342 = vunpack.c.h.b16 %v2155
    %v2343 = vunpack.c.l.b16 %v2156
    %v2344 = vunpack.c.h.b16 %v2156
    %v2345 = vunpack.c.l.b16 %v2157
    %v2346 = vunpack.c.h.b16 %v2157
    %v2347 = vunpack.c.l.b16 %v2158
    %v2348 = vunpack.c.h.b16 %v2158
    %v2349 = vunpack.c.l.b16 %v2159
    %v2350 = vunpack.c.h.b16 %v2159
    %v2351 = vunpack.c.l.b16 %v2160
    %v2352 = vunpack.c.h.b16 %v2160
    %v2353 = vpack.c.b16 %v2227, %v2225
    %v2354 = vpack.c.b16 %v2228, %v2226
    %v2355 = vpack.c.b16 %v2231, %v2229
    %v2356 = vpack.c.b16 %v2232, %v2230
    %v2357 = vpack.c.b16 %v2235, %v2233
    %v2358 = vpack.c.b16 %v2236, %v2234
    %v2359 = vpack.c.b16 %v2239, %v2237
    %v2360 = vpack.c.b16 %v2240, %v2238
    %v2361 = vpack.c.b16 %v2243, %v2241
    %v2362 = vpack.c.b16 %v2244, %v2242
    %v2363 = vpack.c.b16 %v2247, %v2245
    %v2364 = vpack.c.b16 %v2248, %v2246
    %v2365 = vpack.c.b16 %v2251, %v2249
    %v2366 = vpack.c.b16 %v2252, %v2250
    %v2367 = vpack.c.b16 %v2255, %v2253
    %v2368 = vpack.c.b16 %v2256, %v2254
    %v2369 = vpack.c.b16 %v2259, %v2257
    %v2370 = vpack.c.b16 %v2260, %v2258
    %v2371 = vpack.c.b16 %v2263, %v2261
    %v2372 = vpack.c.b16 %v2264, %v2262
    %v2373 = vpack.c.b16 %v2267, %v2265
    %v2374 = vpack.c.b16 %v2268, %v2266
    %v2375 = vpack.c.b16 %v2271, %v2269
    %v2376 = vpack.c.b16 %v2272, %v2270
    %v2377 = vpack.c.b16 %v2275, %v2273
    %v2378 = vpack.c.b16 %v2276, %v2274
    %v2379 = vpack.c.b16 %v2279, %v2277
    %v2380 = vpack.c.b16 %v2280, %v2278
    %v2381 = vpack.c.b16 %v2283, %v2281
    %v2382 = vpack.c.b16 %v2284, %v2282
    %v2383 = vpack.c.b16 %v2287, %v2285
    %v2384 = vpack.c.b16 %v2288, %v2286
    %v2385 = vpack.c.b16 %v2291, %v2289
    %v2386 = vpack.c.b16 %v2292, %v2290
    %v2387 = vpack.c.b16 %v2295, %v2293
    %v2388 = vpack.c.b16 %v2296, %v2294
    %v2389 = vpack.c.b16 %v2299, %v2297
    %v2390 = vpack.c.b16 %v2300, %v2298
    %v2391 = vpack.c.b16 %v2303, %v2301
    %v2392 = vpack.c.b16 %v2304, %v2302
    %v2393 = vpack.c.b16 %v2307, %v2305
    %v2394 = vpack.c.b16 %v2308, %v2306
    %v2395 = vpack.c.b16 %v2311, %v2309
    %v2396 = vpack.c.b16 %v2312, %v2310
    %v2397 = vpack.c.b16 %v2315, %v2313
    %v2398 = vpack.c.b16 %v2316, %v2314
    %v2399 = vpack.c.b16 %v2319, %v2317
    %v2400 = vpack.c.b16 %v2320, %v2318
    %v2401 = vpack.c.b16 %v2323, %v2321
    %v2402 = vpack.c.b16 %v2324, %v2322
    %v2403 = vpack.c.b16 %v2327, %v2325
    %v2404 = vpack.c.b16 %v2328, %v2326
    %v2405 = vpack.c.b16 %v2331, %v2329
    %v2406 = vpack.c.b16 %v2332, %v2330
    %v2407 = vpack.c.b16 %v2335, %v2333
    %v2408 = vpack.c.b16 %v2336, %v2334
    %v2409 = vpack.c.b16 %v2339, %v2337
    %v2410 = vpack.c.b16 %v2340, %v2338
    %v2411 = vpack.c.b16 %v2343, %v2341
    %v2412 = vpack.c.b16 %v2344, %v2342
    %v2413 = vpack.c.b16 %v2347, %v2345
    %v2414 = vpack.c.b16 %v2348, %v2346
    %v2415 = vpack.c.b16 %v2351, %v2349
    %v2416 = vpack.c.b16 %v2352, %v2350
    %2481 = vmatprep.subr.bf16.mxu0 %v2354
    %2482 = vmatpush1.bf16.msra.mxu0 %v2353
    %2483 = vmatprep.subr.bf16.mxu0 %v2356
    %2484 = vmatpush1.bf16.msra.mxu0 %v2355
    %2485 = vmatprep.subr.bf16.mxu0 %v2358
    %2486 = vmatpush1.bf16.msra.mxu0 %v2357
    %2487 = vmatprep.subr.bf16.mxu0 %v2360
    %2488 = vmatpush1.bf16.msra.mxu0 %v2359
    %2489 = vmatprep.subr.bf16.mxu0 %v2362
    %2490 = vmatpush1.bf16.msra.mxu0 %v2361
    %2491 = vmatprep.subr.bf16.mxu0 %v2364
    %2492 = vmatpush1.bf16.msra.mxu0 %v2363
    %2493 = vmatprep.subr.bf16.mxu0 %v2366
    %2494 = vmatpush1.bf16.msra.mxu0 %v2365
    %2495 = vmatprep.subr.bf16.mxu0 %v2368
    %2496 = vmatpush1.bf16.msra.mxu0 %v2367
    %2497 = vmatprep.subr.bf16.mxu0 %v2370
    %2498 = vmatpush1.bf16.msra.mxu0 %v2369
    %2499 = vmatprep.subr.bf16.mxu0 %v2372
    %2500 = vmatpush1.bf16.msra.mxu0 %v2371
    %2501 = vmatprep.subr.bf16.mxu0 %v2374
    %2502 = vmatpush1.bf16.msra.mxu0 %v2373
    %2503 = vmatprep.subr.bf16.mxu0 %v2376
    %2504 = vmatpush1.bf16.msra.mxu0 %v2375
    %2505 = vmatprep.subr.bf16.mxu0 %v2378
    %2506 = vmatpush1.bf16.msra.mxu0 %v2377
    %2507 = vmatprep.subr.bf16.mxu0 %v2380
    %2508 = vmatpush1.bf16.msra.mxu0 %v2379
    %2509 = vmatprep.subr.bf16.mxu0 %v2382
    %2510 = vmatpush1.bf16.msra.mxu0 %v2381
    %2511 = vmatprep.subr.bf16.mxu0 %v2384
    %2512 = vmatpush1.bf16.msra.mxu0 %v2383
    %2513 = vmatprep.mubr.bf16.mxu0 %v2094
    %2514 = vmatmul.mubr.bf16.gmra.mrb[0].mxu0 %v2093
    %v2515 = vpop.f32.mrb[0].mxu0
    %v2516 = vadd.f32 0.0, %v2515
    %v2517 = vpop.f32.mrb[0].mxu0
    %v2518 = vadd.f32 0.0, %v2517
    %v2519 = vpop.f32.mrb[0].mxu0
    %v2520 = vpop.f32.mrb[0].mxu0
    %2521 = vdwg.mxu0
    %2522 = vmatprep.subr.bf16.mxu0 %v2386
    %2523 = vmatpush1.bf16.msra.mxu0 %v2385
    %2524 = vmatprep.subr.bf16.mxu0 %v2388
    %2525 = vmatpush1.bf16.msra.mxu0 %v2387
    %2526 = vmatprep.subr.bf16.mxu0 %v2390
    %2527 = vmatpush1.bf16.msra.mxu0 %v2389
    %2528 = vmatprep.subr.bf16.mxu0 %v2392
    %2529 = vmatpush1.bf16.msra.mxu0 %v2391
    %2530 = vmatprep.subr.bf16.mxu0 %v2394
    %2531 = vmatpush1.bf16.msra.mxu0 %v2393
    %2532 = vmatprep.subr.bf16.mxu0 %v2396
    %2533 = vmatpush1.bf16.msra.mxu0 %v2395
    %2534 = vmatprep.subr.bf16.mxu0 %v2398
    %2535 = vmatpush1.bf16.msra.mxu0 %v2397
    %2536 = vmatprep.subr.bf16.mxu0 %v2400
    %2537 = vmatpush1.bf16.msra.mxu0 %v2399
    %2538 = vmatprep.subr.bf16.mxu0 %v2402
    %2539 = vmatpush1.bf16.msra.mxu0 %v2401
    %2540 = vmatprep.subr.bf16.mxu0 %v2404
    %2541 = vmatpush1.bf16.msra.mxu0 %v2403
    %2542 = vmatprep.subr.bf16.mxu0 %v2406
    %2543 = vmatpush1.bf16.msra.mxu0 %v2405
    %2544 = vmatprep.subr.bf16.mxu0 %v2408
    %2545 = vmatpush1.bf16.msra.mxu0 %v2407
    %2546 = vmatprep.subr.bf16.mxu0 %v2410
    %2547 = vmatpush1.bf16.msra.mxu0 %v2409
    %2548 = vmatprep.subr.bf16.mxu0 %v2412
    %2549 = vmatpush1.bf16.msra.mxu0 %v2411
    %2550 = vmatprep.subr.bf16.mxu0 %v2414
    %2551 = vmatpush1.bf16.msra.mxu0 %v2413
    %2552 = vmatprep.subr.bf16.mxu0 %v2416
    %2553 = vmatpush1.bf16.msra.mxu0 %v2415
    %2554 = vmatprep.mubr.bf16.mxu0 %v2096
    %2555 = vmatmul.mubr.bf16.gmra.mrb[0].mxu0 %v2095
    %v2556 = vpop.f32.mrb[0].mxu0
    %v2557 = vadd.f32 %v2516, %v2556
    %v2558 = vpop.f32.mrb[0].mxu0
    %v2559 = vadd.f32 %v2518, %v2558
    %v2560 = vpop.f32.mrb[0].mxu0
    %v2561 = vpop.f32.mrb[0].mxu0
    %2562 = vdwg.mxu0
    %v2563 = vld [vmem:[#allocation10] sm:$0x3]
    %v2564 = vld [vmem:[#allocation11] sm:$0x3]
    %v2565 = vrot.slane %v2557, 4
    %v2566 = vadd.f32 %v2557, %v2565
    %v2567 = vrot.slane %v2566, 2
    %v2568 = vadd.f32 %v2566, %v2567
    %v2569 = vrot.slane %v2568, 1
    %v2570 = vadd.f32 %v2568, %v2569
    %v2571 = vrot.slane %v2559, 4
    %v2572 = vadd.f32 %v2559, %v2571
    %v2573 = vrot.slane %v2572, 2
    %v2574 = vadd.f32 %v2572, %v2573
    %v2575 = vrot.slane %v2574, 1
    %v2576 = vadd.f32 %v2574, %v2575
    %v2577 = vmul.f32 %v2570, %v1986
    %v2578 = vmul.f32 %v2576, %v1986
    %v2579 = vsub.f32 %v2557, %v2577
    %v2580 = vsub.f32 %v2559, %v2578
    %v2581 = vmul.f32 %v2579, %v2579
    %v2582 = vmul.f32 %v2580, %v2580
    %v2583 = vrot.slane %v2581, 4
    %v2584 = vadd.f32 %v2581, %v2583
    %v2585 = vrot.slane %v2584, 2
    %v2586 = vadd.f32 %v2584, %v2585
    %v2587 = vrot.slane %v2586, 1
    %v2588 = vadd.f32 %v2586, %v2587
    %v2589 = vrot.slane %v2582, 4
    %v2590 = vadd.f32 %v2582, %v2589
    %v2591 = vrot.slane %v2590, 2
    %v2592 = vadd.f32 %v2590, %v2591
    %v2593 = vrot.slane %v2592, 1
    %v2594 = vadd.f32 %v2592, %v2593
    %v2595 = vmul.f32 %v2588, %v1986
    %v2596 = vmul.f32 %v2594, %v1986
    %v2597 = vadd.f32 %v2595, 1e-05
    %v2598 = vadd.f32 %v2596, 1e-05
    %v2599 = vrsqrt.pop %v2597
    %v2600 = vrsqrt.pop %v2598
    %v2601 = vmul.f32 %v2579, %v2599
    %v2602 = vmul.f32 %v2580, %v2600
    %v2604 = vlaneseq
    %v2605 = vshrl.u32 %v2604, 7
    %v2606 = vsub.s32 0, %v2605
    %v2607 = vrot.slane %v2563, %v2606
    %v2608 = vlaneseq
    %v2609 = vshrl.u32 %v2608, 7
    %v2610 = vsub.s32 1, %v2609
    %v2611 = vrot.slane %v2563, %v2610
    %v2614 = vmul.f32 %v2601, %v2607
    %v2615 = vmul.f32 %v2602, %v2611
    %v2617 = vlaneseq
    %v2618 = vshrl.u32 %v2617, 7
    %v2619 = vsub.s32 0, %v2618
    %v2620 = vrot.slane %v2564, %v2619
    %v2621 = vlaneseq
    %v2622 = vshrl.u32 %v2621, 7
    %v2623 = vsub.s32 1, %v2622
    %v2624 = vrot.slane %v2564, %v2623
    %v2627 = vadd.f32 %v2614, %v2620
    %v2628 = vadd.f32 %v2615, %v2624
    %v2629 = vmax.f32 %v2627, 0.0
    %v2630 = vmax.f32 %v2628, 0.0
    %v2631 = vpack.c.bf16 %v2629, %v2629
    %v2632 = vpack.c.bf16 %v2630, %v2630
    %v2633 = vld [vmem:[%s15] sm:$0xf]
    %v2634 = vld [vmem:[%s15 + $0x4] sm:$0xf]
    %v2635 = vld [vmem:[%s15 + $0x8] sm:$0xf]
    %v2636 = vld [vmem:[%s15 + $0xc] sm:$0xf]
    %v2637 = vld [vmem:[%s15 + $0x10] sm:$0xf]
    %v2638 = vld [vmem:[%s15 + $0x14] sm:$0xf]
    %v2639 = vld [vmem:[%s15 + $0x18] sm:$0xf]
    %v2640 = vld [vmem:[%s15 + $0x1c] sm:$0xf]
    %v2641 = vld [vmem:[%s15 + $0x20] sm:$0xf]
    %v2642 = vld [vmem:[%s15 + $0x24] sm:$0xf]
    %v2643 = vld [vmem:[%s15 + $0x28] sm:$0xf]
    %v2644 = vld [vmem:[%s15 + $0x2c] sm:$0xf]
    %v2645 = vld [vmem:[%s15 + $0x30] sm:$0xf]
    %v2646 = vld [vmem:[%s15 + $0x34] sm:$0xf]
    %v2647 = vld [vmem:[%s15 + $0x38] sm:$0xf]
    %v2648 = vld [vmem:[%s15 + $0x3c] sm:$0xf]
    %v2649 = vld [vmem:[%s15 + $0x40] sm:$0xf]
    %v2650 = vld [vmem:[%s15 + $0x44] sm:$0xf]
    %v2651 = vld [vmem:[%s15 + $0x48] sm:$0xf]
    %v2652 = vld [vmem:[%s15 + $0x4c] sm:$0xf]
    %v2653 = vld [vmem:[%s15 + $0x50] sm:$0xf]
    %v2654 = vld [vmem:[%s15 + $0x54] sm:$0xf]
    %v2655 = vld [vmem:[%s15 + $0x58] sm:$0xf]
    %v2656 = vld [vmem:[%s15 + $0x5c] sm:$0xf]
    %v2657 = vld [vmem:[%s15 + $0x60] sm:$0xf]
    %v2658 = vld [vmem:[%s15 + $0x64] sm:$0xf]
    %v2659 = vld [vmem:[%s15 + $0x68] sm:$0xf]
    %v2660 = vld [vmem:[%s15 + $0x6c] sm:$0xf]
    %v2661 = vld [vmem:[%s15 + $0x70] sm:$0xf]
    %v2662 = vld [vmem:[%s15 + $0x74] sm:$0xf]
    %v2663 = vld [vmem:[%s15 + $0x78] sm:$0xf]
    %v2664 = vld [vmem:[%s15 + $0x7c] sm:$0xf]
    %v2697 = vunpack.c.l.b16 %v2633
    %v2698 = vunpack.c.l.b16 %v2634
    %v2699 = vunpack.c.l.b16 %v2635
    %v2700 = vunpack.c.l.b16 %v2636
    %v2701 = vunpack.c.l.b16 %v2637
    %v2702 = vunpack.c.l.b16 %v2638
    %v2703 = vunpack.c.l.b16 %v2639
    %v2704 = vunpack.c.l.b16 %v2640
    %v2705 = vunpack.c.l.b16 %v2641
    %v2706 = vunpack.c.l.b16 %v2642
    %v2707 = vunpack.c.l.b16 %v2643
    %v2708 = vunpack.c.l.b16 %v2644
    %v2709 = vunpack.c.l.b16 %v2645
    %v2710 = vunpack.c.l.b16 %v2646
    %v2711 = vunpack.c.l.b16 %v2647
    %v2712 = vunpack.c.l.b16 %v2648
    %v2713 = vunpack.c.l.b16 %v2649
    %v2714 = vunpack.c.l.b16 %v2650
    %v2715 = vunpack.c.l.b16 %v2651
    %v2716 = vunpack.c.l.b16 %v2652
    %v2717 = vunpack.c.l.b16 %v2653
    %v2718 = vunpack.c.l.b16 %v2654
    %v2719 = vunpack.c.l.b16 %v2655
    %v2720 = vunpack.c.l.b16 %v2656
    %v2721 = vunpack.c.l.b16 %v2657
    %v2722 = vunpack.c.l.b16 %v2658
    %v2723 = vunpack.c.l.b16 %v2659
    %v2724 = vunpack.c.l.b16 %v2660
    %v2725 = vunpack.c.l.b16 %v2661
    %v2726 = vunpack.c.l.b16 %v2662
    %v2727 = vunpack.c.l.b16 %v2663
    %v2728 = vunpack.c.l.b16 %v2664
    %v2729 = vpack.c.b16 %v2698, %v2697
    %v2730 = vpack.c.b16 %v2700, %v2699
    %v2731 = vpack.c.b16 %v2702, %v2701
    %v2732 = vpack.c.b16 %v2704, %v2703
    %v2733 = vpack.c.b16 %v2706, %v2705
    %v2734 = vpack.c.b16 %v2708, %v2707
    %v2735 = vpack.c.b16 %v2710, %v2709
    %v2736 = vpack.c.b16 %v2712, %v2711
    %v2737 = vpack.c.b16 %v2714, %v2713
    %v2738 = vpack.c.b16 %v2716, %v2715
    %v2739 = vpack.c.b16 %v2718, %v2717
    %v2740 = vpack.c.b16 %v2720, %v2719
    %v2741 = vpack.c.b16 %v2722, %v2721
    %v2742 = vpack.c.b16 %v2724, %v2723
    %v2743 = vpack.c.b16 %v2726, %v2725
    %v2744 = vpack.c.b16 %v2728, %v2727
    %2761 = vmatprep.subr.bf16.mxu0 0
    %2762 = vmatpush1.bf16.msra.mxu0 %v2729
    %2763 = vmatprep.subr.bf16.mxu0 0
    %2764 = vmatpush1.bf16.msra.mxu0 %v2730
    %2765 = vmatprep.subr.bf16.mxu0 0
    %2766 = vmatpush1.bf16.msra.mxu0 %v2731
    %2767 = vmatprep.subr.bf16.mxu0 0
    %2768 = vmatpush1.bf16.msra.mxu0 %v2732
    %2769 = vmatprep.subr.bf16.mxu0 0
    %2770 = vmatpush1.bf16.msra.mxu0 %v2733
    %2771 = vmatprep.subr.bf16.mxu0 0
    %2772 = vmatpush1.bf16.msra.mxu0 %v2734
    %2773 = vmatprep.subr.bf16.mxu0 0
    %2774 = vmatpush1.bf16.msra.mxu0 %v2735
    %2775 = vmatprep.subr.bf16.mxu0 0
    %2776 = vmatpush1.bf16.msra.mxu0 %v2736
    %2777 = vmatprep.subr.bf16.mxu0 0
    %2778 = vmatpush1.bf16.msra.mxu0 %v2737
    %2779 = vmatprep.subr.bf16.mxu0 0
    %2780 = vmatpush1.bf16.msra.mxu0 %v2738
    %2781 = vmatprep.subr.bf16.mxu0 0
    %2782 = vmatpush1.bf16.msra.mxu0 %v2739
    %2783 = vmatprep.subr.bf16.mxu0 0
    %2784 = vmatpush1.bf16.msra.mxu0 %v2740
    %2785 = vmatprep.subr.bf16.mxu0 0
    %2786 = vmatpush1.bf16.msra.mxu0 %v2741
    %2787 = vmatprep.subr.bf16.mxu0 0
    %2788 = vmatpush1.bf16.msra.mxu0 %v2742
    %2789 = vmatprep.subr.bf16.mxu0 0
    %2790 = vmatpush1.bf16.msra.mxu0 %v2743
    %2791 = vmatprep.subr.bf16.mxu0 0
    %2792 = vmatpush1.bf16.msra.mxu0 %v2744
    %2793 = vmatprep.mubr.bf16.mxu0 %v2632
    %2794 = vmatmul.mubr.bf16.gmra.mrb[0].mxu0 %v2631
    %v2795 = vpop.f32.mrb[0].mxu0
    %v2796 = vadd.f32 0.0, %v2795
    %v2797 = vpop.f32.mrb[0].mxu0
    %v2798 = vpop.f32.mrb[0].mxu0
    %v2799 = vpop.f32.mrb[0].mxu0
    %2800 = vdwg.mxu0
    %v2801 = vld [vmem:[%s17] sm:$0x1]
    %v2802 = vld [vmem:[#allocation13] sm:$0x1]
    %v2803 = vrot.slane %v2796, 4
    %v2804 = vadd.f32 %v2796, %v2803
    %v2805 = vrot.slane %v2804, 2
    %v2806 = vadd.f32 %v2804, %v2805
    %v2807 = vrot.slane %v2806, 1
    %v2808 = vadd.f32 %v2806, %v2807
    %v2809 = vmul.f32 %v2808, %v1986
    %v2810 = vsub.f32 %v2796, %v2809
    %v2811 = vmul.f32 %v2810, %v2810
    %v2812 = vrot.slane %v2811, 4
    %v2813 = vadd.f32 %v2811, %v2812
    %v2814 = vrot.slane %v2813, 2
    %v2815 = vadd.f32 %v2813, %v2814
    %v2816 = vrot.slane %v2815, 1
    %v2817 = vadd.f32 %v2815, %v2816
    %v2818 = vmul.f32 %v2817, %v1986
    %v2819 = vadd.f32 %v2818, 1e-05
    %v2820 = vrsqrt.pop %v2819
    %v2821 = vmul.f32 %v2810, %v2820
    %v2823 = vlaneseq
    %v2824 = vshrl.u32 %v2823, 7
    %v2825 = vsub.s32 0, %v2824
    %v2826 = vrot.slane %v2801, %v2825
    %v2828 = vmul.f32 %v2821, %v2826
    %v2830 = vlaneseq
    %v2831 = vshrl.u32 %v2830, 7
    %v2832 = vsub.s32 0, %v2831
    %v2833 = vrot.slane %v2802, %v2832
    %v2835 = vadd.f32 %v2828, %v2833
    %v2836 = vmax.f32 %v2835, 0.0
    %v2837 = vpack.c.bf16 %v2836, %v2836
    %v2838 = vld [vmem:[%s21] sm:$0xf]
    %v2839 = vld [vmem:[%s21 + $0x4] sm:$0xf]
    %v2840 = vld [vmem:[%s21 + $0x8] sm:$0xf]
    %v2841 = vld [vmem:[%s21 + $0xc] sm:$0xf]
    %v2842 = vld [vmem:[%s21 + $0x10] sm:$0xf]
    %v2843 = vld [vmem:[%s21 + $0x14] sm:$0xf]
    %v2844 = vld [vmem:[%s21 + $0x18] sm:$0xf]
    %v2845 = vld [vmem:[%s21 + $0x1c] sm:$0xf]
    %v2846 = vld [vmem:[%s21 + $0x20] sm:$0xf]
    %v2847 = vld [vmem:[%s21 + $0x24] sm:$0xf]
    %v2848 = vld [vmem:[%s21 + $0x28] sm:$0xf]
    %v2849 = vld [vmem:[%s21 + $0x2c] sm:$0xf]
    %v2850 = vld [vmem:[%s21 + $0x30] sm:$0xf]
    %v2851 = vld [vmem:[%s21 + $0x34] sm:$0xf]
    %v2852 = vld [vmem:[%s21 + $0x38] sm:$0xf]
    %v2853 = vld [vmem:[%s21 + $0x3c] sm:$0xf]
    %v2870 = vunpack.c.l.b16 %v2838
    %v2871 = vunpack.c.l.b16 %v2839
    %v2872 = vunpack.c.l.b16 %v2840
    %v2873 = vunpack.c.l.b16 %v2841
    %v2874 = vunpack.c.l.b16 %v2842
    %v2875 = vunpack.c.l.b16 %v2843
    %v2876 = vunpack.c.l.b16 %v2844
    %v2877 = vunpack.c.l.b16 %v2845
    %v2878 = vunpack.c.l.b16 %v2846
    %v2879 = vunpack.c.l.b16 %v2847
    %v2880 = vunpack.c.l.b16 %v2848
    %v2881 = vunpack.c.l.b16 %v2849
    %v2882 = vunpack.c.l.b16 %v2850
    %v2883 = vunpack.c.l.b16 %v2851
    %v2884 = vunpack.c.l.b16 %v2852
    %v2885 = vunpack.c.l.b16 %v2853
    %v2886 = vpack.c.b16 %v2871, %v2870
    %v2887 = vpack.c.b16 %v2873, %v2872
    %v2888 = vpack.c.b16 %v2875, %v2874
    %v2889 = vpack.c.b16 %v2877, %v2876
    %v2890 = vpack.c.b16 %v2879, %v2878
    %v2891 = vpack.c.b16 %v2881, %v2880
    %v2892 = vpack.c.b16 %v2883, %v2882
    %v2893 = vpack.c.b16 %v2885, %v2884
    %2902 = vmatprep.subr.bf16.mxu0 0
    %2903 = vmatpush1.bf16.msra.mxu0 %v2886
    %2904 = vmatprep.subr.bf16.mxu0 0
    %2905 = vmatpush1.bf16.msra.mxu0 %v2887
    %2906 = vmatprep.subr.bf16.mxu0 0
    %2907 = vmatpush1.bf16.msra.mxu0 %v2888
    %2908 = vmatprep.subr.bf16.mxu0 0
    %2909 = vmatpush1.bf16.msra.mxu0 %v2889
    %2910 = vmatprep.subr.bf16.mxu0 0
    %2911 = vmatpush1.bf16.msra.mxu0 %v2890
    %2912 = vmatprep.subr.bf16.mxu0 0
    %2913 = vmatpush1.bf16.msra.mxu0 %v2891
    %2914 = vmatprep.subr.bf16.mxu0 0
    %2915 = vmatpush1.bf16.msra.mxu0 %v2892
    %2916 = vmatprep.subr.bf16.mxu0 0
    %2917 = vmatpush1.bf16.msra.mxu0 %v2893
    %2918 = vmatprep.subr.bf16.mxu0 0
    %2919 = vmatpush1.bf16.msra.mxu0 0
    %2920 = vmatprep.subr.bf16.mxu0 0
    %2921 = vmatpush1.bf16.msra.mxu0 0
    %2922 = vmatprep.subr.bf16.mxu0 0
    %2923 = vmatpush1.bf16.msra.mxu0 0
    %2924 = vmatprep.subr.bf16.mxu0 0
    %2925 = vmatpush1.bf16.msra.mxu0 0
    %2926 = vmatprep.subr.bf16.mxu0 0
    %2927 = vmatpush1.bf16.msra.mxu0 0
    %2928 = vmatprep.subr.bf16.mxu0 0
    %2929 = vmatpush1.bf16.msra.mxu0 0
    %2930 = vmatprep.subr.bf16.mxu0 0
    %2931 = vmatpush1.bf16.msra.mxu0 0
    %2932 = vmatprep.subr.bf16.mxu0 0
    %2933 = vmatpush1.bf16.msra.mxu0 0
    %2934 = vmatprep.mubr.bf16.mxu0 0
    %2935 = vmatmul.mubr.bf16.gmra.mrb[0].mxu0 %v2837
    %v2936 = vpop.f32.mrb[0].mxu0
    %v2937 = vadd.f32 0.0, %v2936
    %v2938 = vpop.f32.mrb[0].mxu0
    %v2939 = vpop.f32.mrb[0].mxu0
    %v2940 = vpop.f32.mrb[0].mxu0
    %2941 = vdwg.mxu0
    %v2942 = vld [vmem:[#allocation14] sm:$0x1]
    %v2943 = vld [vmem:[#allocation16] sm:$0x1]
    %vm2944 = vcmask 523264
    %v2945 = vsel %vm2944, %v2937, 0.0
    %v2946 = vrot.slane %v2945, 4
    %v2947 = vadd.f32 %v2945, %v2946
    %v2948 = vrot.slane %v2947, 2
    %v2949 = vadd.f32 %v2947, %v2948
    %v2950 = vrot.slane %v2949, 1
    %v2951 = vadd.f32 %v2949, %v2950
    %v2952 = vmul.f32 %v2951, %v1986
    %v2953 = vsub.f32 %v2937, %v2952
    %v2954 = vmul.f32 %v2953, %v2953
    %v2955 = vsel %vm2944, %v2954, 0.0
    %v2956 = vrot.slane %v2955, 4
    %v2957 = vadd.f32 %v2955, %v2956
    %v2958 = vrot.slane %v2957, 2
    %v2959 = vadd.f32 %v2957, %v2958
    %v2960 = vrot.slane %v2959, 1
    %v2961 = vadd.f32 %v2959, %v2960
    %v2962 = vmul.f32 %v2961, %v1986
    %v2963 = vadd.f32 %v2962, 1e-05
    %v2964 = vrsqrt.pop %v2963
    %v2965 = vmul.f32 %v2953, %v2964
    %v2967 = vlaneseq
    %v2968 = vshrl.u32 %v2967, 7
    %v2969 = vsub.s32 0, %v2968
    %v2970 = vrot.slane %v2942, %v2969
    %v2972 = vmul.f32 %v2965, %v2970
    %v2974 = vlaneseq
    %v2975 = vshrl.u32 %v2974, 7
    %v2976 = vsub.s32 0, %v2975
    %v2977 = vrot.slane %v2943, %v2976
    %v2979 = vadd.f32 %v2972, %v2977
    %v2980 = vmax.f32 %v2979, 0.0
    %v2981 = vpack.c.bf16 %v2980, %v2980
    %v2982 = vld [vmem:[%s27] sm:$0xf]
    %v2983 = vld [vmem:[%s27 + $0x4] sm:$0xf]
    %v2984 = vld [vmem:[%s27 + $0x8] sm:$0xf]
    %v2985 = vld [vmem:[%s27 + $0xc] sm:$0xf]
    %v2986 = vld [vmem:[%s27 + $0x10] sm:$0xf]
    %v2987 = vld [vmem:[%s27 + $0x14] sm:$0xf]
    %v2988 = vld [vmem:[%s27 + $0x18] sm:$0xf]
    %v2989 = vld [vmem:[%s27 + $0x1c] sm:$0xf]
    %v2998 = vunpack.c.l.b16 %v2982
    %v2999 = vunpack.c.l.b16 %v2983
    %v3000 = vunpack.c.l.b16 %v2984
    %v3001 = vunpack.c.l.b16 %v2985
    %v3002 = vunpack.c.l.b16 %v2986
    %v3003 = vunpack.c.l.b16 %v2987
    %v3004 = vunpack.c.l.b16 %v2988
    %v3005 = vunpack.c.l.b16 %v2989
    %v3006 = vpack.c.b16 %v2999, %v2998
    %v3007 = vpack.c.b16 %v3001, %v3000
    %v3008 = vpack.c.b16 %v3003, %v3002
    %v3009 = vpack.c.b16 %v3005, %v3004
    %v3015 = vsel %vm2944, %v2981, 0
    %3017 = vmatprep.subr.bf16.mxu0 0
    %3018 = vmatpush1.bf16.msra.mxu0 %v3006
    %3019 = vmatprep.subr.bf16.mxu0 0
    %3020 = vmatpush1.bf16.msra.mxu0 %v3007
    %3021 = vmatprep.subr.bf16.mxu0 0
    %3022 = vmatpush1.bf16.msra.mxu0 %v3008
    %3023 = vmatprep.subr.bf16.mxu0 0
    %3024 = vmatpush1.bf16.msra.mxu0 %v3009
    %3025 = vmatprep.subr.bf16.mxu0 0
    %3026 = vmatpush1.bf16.msra.mxu0 0
    %3027 = vmatprep.subr.bf16.mxu0 0
    %3028 = vmatpush1.bf16.msra.mxu0 0
    %3029 = vmatprep.subr.bf16.mxu0 0
    %3030 = vmatpush1.bf16.msra.mxu0 0
    %3031 = vmatprep.subr.bf16.mxu0 0
    %3032 = vmatpush1.bf16.msra.mxu0 0
    %3033 = vmatprep.subr.bf16.mxu0 0
    %3034 = vmatpush1.bf16.msra.mxu0 0
    %3035 = vmatprep.subr.bf16.mxu0 0
    %3036 = vmatpush1.bf16.msra.mxu0 0
    %3037 = vmatprep.subr.bf16.mxu0 0
    %3038 = vmatpush1.bf16.msra.mxu0 0
    %3039 = vmatprep.subr.bf16.mxu0 0
    %3040 = vmatpush1.bf16.msra.mxu0 0
    %3041 = vmatprep.subr.bf16.mxu0 0
    %3042 = vmatpush1.bf16.msra.mxu0 0
    %3043 = vmatprep.subr.bf16.mxu0 0
    %3044 = vmatpush1.bf16.msra.mxu0 0
    %3045 = vmatprep.subr.bf16.mxu0 0
    %3046 = vmatpush1.bf16.msra.mxu0 0
    %3047 = vmatprep.subr.bf16.mxu0 0
    %3048 = vmatpush1.bf16.msra.mxu0 0
    %3049 = vmatprep.mubr.bf16.mxu0 0
    %3050 = vmatmul.mubr.bf16.gmra.mrb[0].mxu0 %v3015
    %v3051 = vpop.f32.mrb[0].mxu0
    %v3052 = vadd.f32 0.0, %v3051
    %v3053 = vpop.f32.mrb[0].mxu0
    %v3054 = vpop.f32.mrb[0].mxu0
    %v3055 = vpop.f32.mrb[0].mxu0
    %3056 = vdwg.mxu0
    %v3057 = vld [vmem:[#allocation17] sm:$0x1]
    %v3058 = vld [vmem:[#allocation19] sm:$0x1]
    %v3059 = vsel %vm1628, %v3052, 0.0
    %v3060 = vrot.slane %v3059, 4
    %v3061 = vadd.f32 %v3059, %v3060
    %v3062 = vrot.slane %v3061, 2
    %v3063 = vadd.f32 %v3061, %v3062
    %v3064 = vrot.slane %v3063, 1
    %v3065 = vadd.f32 %v3063, %v3064
    %v3066 = vmul.f32 %v3065, %v1986
    %v3067 = vsub.f32 %v3052, %v3066
    %v3068 = vmul.f32 %v3067, %v3067
    %v3069 = vsel %vm1628, %v3068, 0.0
    %v3070 = vrot.slane %v3069, 4
    %v3071 = vadd.f32 %v3069, %v3070
    %v3072 = vrot.slane %v3071, 2
    %v3073 = vadd.f32 %v3071, %v3072
    %v3074 = vrot.slane %v3073, 1
    %v3075 = vadd.f32 %v3073, %v3074
    %v3076 = vmul.f32 %v3075, %v1986
    %v3077 = vadd.f32 %v3076, 1e-05
    %v3078 = vrsqrt.pop %v3077
    %v3079 = vmul.f32 %v3067, %v3078
    %v3081 = vlaneseq
    %v3082 = vshrl.u32 %v3081, 7
    %v3083 = vsub.s32 0, %v3082
    %v3084 = vrot.slane %v3057, %v3083
    %v3086 = vmul.f32 %v3079, %v3084
    %v3088 = vlaneseq
    %v3089 = vshrl.u32 %v3088, 7
    %v3090 = vsub.s32 0, %v3089
    %v3091 = vrot.slane %v3058, %v3090
    %v3093 = vadd.f32 %v3086, %v3091
    %v3094 = vmax.f32 %v3093, 0.0
    %v3095 = vpack.c.bf16 %v3094, %v3094
    %v3096 = vld [vmem:[%s33] sm:$0xf]
    %v3097 = vld [vmem:[%s33 + $0x4] sm:$0xf]
    %v3098 = vld [vmem:[#allocation20] sm:$0x1]
    %v3100 = vlaneseq
    %v3101 = vshrl.u32 %v3100, 7
    %v3102 = vsub.s32 0, %v3101
    %v3103 = vrot.slane %v3098, %v3102
    %v3107 = vunpack.c.l.b16 %v3096
    %v3108 = vunpack.c.l.b16 %v3097
    %v3109 = vpack.c.b16 %v3108, %v3107
    %v3112 = vsel %vm1628, %v3095, 0
    %3114 = vmatprep.subr.bf16.mxu0 0
    %3115 = vmatpush1.bf16.msra.mxu0 %v3109
    %3116 = vmatprep.subr.bf16.mxu0 0
    %3117 = vmatpush1.bf16.msra.mxu0 0
    %3118 = vmatprep.subr.bf16.mxu0 0
    %3119 = vmatpush1.bf16.msra.mxu0 0
    %3120 = vmatprep.subr.bf16.mxu0 0
    %3121 = vmatpush1.bf16.msra.mxu0 0
    %3122 = vmatprep.subr.bf16.mxu0 0
    %3123 = vmatpush1.bf16.msra.mxu0 0
    %3124 = vmatprep.subr.bf16.mxu0 0
    %3125 = vmatpush1.bf16.msra.mxu0 0
    %3126 = vmatprep.subr.bf16.mxu0 0
    %3127 = vmatpush1.bf16.msra.mxu0 0
    %3128 = vmatprep.subr.bf16.mxu0 0
    %3129 = vmatpush1.bf16.msra.mxu0 0
    %3130 = vmatprep.subr.bf16.mxu0 0
    %3131 = vmatpush1.bf16.msra.mxu0 0
    %3132 = vmatprep.subr.bf16.mxu0 0
    %3133 = vmatpush1.bf16.msra.mxu0 0
    %3134 = vmatprep.subr.bf16.mxu0 0
    %3135 = vmatpush1.bf16.msra.mxu0 0
    %3136 = vmatprep.subr.bf16.mxu0 0
    %3137 = vmatpush1.bf16.msra.mxu0 0
    %3138 = vmatprep.subr.bf16.mxu0 0
    %3139 = vmatpush1.bf16.msra.mxu0 0
    %3140 = vmatprep.subr.bf16.mxu0 0
    %3141 = vmatpush1.bf16.msra.mxu0 0
    %3142 = vmatprep.subr.bf16.mxu0 0
    %3143 = vmatpush1.bf16.msra.mxu0 0
    %3144 = vmatprep.subr.bf16.mxu0 0
    %3145 = vmatpush1.bf16.msra.mxu0 0
    %3146 = vmatprep.mubr.bf16.mxu0 0
    %3147 = vmatmul.mubr.bf16.gmra.mrb[0].mxu0 %v3112
    %v3148 = vpop.f32.mrb[0].mxu0
    %v3149 = vadd.f32 %v3103, %v3148
    %v3150 = vpop.f32.mrb[0].mxu0
    %v3151 = vpop.f32.mrb[0].mxu0
    %v3152 = vpop.f32.mrb[0].mxu0
    %3153 = vdwg.mxu0
    %v3154 = vtanh.pop %v3149
    %3155 = vst [vmem:[%s71] sm:$0xff] %v3154
    %v3156 = vpack.c.bf16 %v3154, %v3154
    %v3157 = vld [vmem:[%s37] sm:$0xf]
    %v3158 = vld [vmem:[%s37 + $0x4] sm:$0xf]
    %v3159 = vld [vmem:[%s37 + $0x8] sm:$0xf]
    %v3160 = vld [vmem:[%s37 + $0xc] sm:$0xf]
    %v3161 = vld [vmem:[%s37 + $0x10] sm:$0xf]
    %v3162 = vld [vmem:[%s37 + $0x14] sm:$0xf]
    %v3163 = vld [vmem:[%s37 + $0x18] sm:$0xf]
    %v3164 = vld [vmem:[%s37 + $0x1c] sm:$0xf]
    %v3165 = vld [vmem:[%s37 + $0x20] sm:$0xf]
    %v3166 = vld [vmem:[%s37 + $0x24] sm:$0xf]
    %v3167 = vld [vmem:[%s37 + $0x28] sm:$0xf]
    %v3168 = vld [vmem:[%s37 + $0x2c] sm:$0xf]
    %v3169 = vld [vmem:[%s37 + $0x30] sm:$0xf]
    %v3170 = vld [vmem:[%s37 + $0x34] sm:$0xf]
    %v3171 = vld [vmem:[%s37 + $0x38] sm:$0xf]
    %v3172 = vld [vmem:[%s37 + $0x3c] sm:$0xf]
    %v3189 = vunpack.c.l.b16 %v3157
    %v3190 = vunpack.c.l.b16 %v3158
    %v3191 = vunpack.c.l.b16 %v3159
    %v3192 = vunpack.c.l.b16 %v3160
    %v3193 = vunpack.c.l.b16 %v3161
    %v3194 = vunpack.c.l.b16 %v3162
    %v3195 = vunpack.c.l.b16 %v3163
    %v3196 = vunpack.c.l.b16 %v3164
    %v3197 = vunpack.c.l.b16 %v3165
    %v3198 = vunpack.c.l.b16 %v3166
    %v3199 = vunpack.c.l.b16 %v3167
    %v3200 = vunpack.c.l.b16 %v3168
    %v3201 = vunpack.c.l.b16 %v3169
    %v3202 = vunpack.c.l.b16 %v3170
    %v3203 = vunpack.c.l.b16 %v3171
    %v3204 = vunpack.c.l.b16 %v3172
    %v3205 = vpack.c.b16 %v3190, %v3189
    %v3206 = vpack.c.b16 %v3192, %v3191
    %v3207 = vpack.c.b16 %v3194, %v3193
    %v3208 = vpack.c.b16 %v3196, %v3195
    %v3209 = vpack.c.b16 %v3198, %v3197
    %v3210 = vpack.c.b16 %v3200, %v3199
    %v3211 = vpack.c.b16 %v3202, %v3201
    %v3212 = vpack.c.b16 %v3204, %v3203
    %3221 = vmatprep.subr.bf16.mxu0 0
    %3222 = vmatpush1.bf16.msra.mxu0 %v3205
    %3223 = vmatprep.subr.bf16.mxu0 0
    %3224 = vmatpush1.bf16.msra.mxu0 %v3206
    %3225 = vmatprep.subr.bf16.mxu0 0
    %3226 = vmatpush1.bf16.msra.mxu0 %v3207
    %3227 = vmatprep.subr.bf16.mxu0 0
    %3228 = vmatpush1.bf16.msra.mxu0 %v3208
    %3229 = vmatprep.subr.bf16.mxu0 0
    %3230 = vmatpush1.bf16.msra.mxu0 %v3209
    %3231 = vmatprep.subr.bf16.mxu0 0
    %3232 = vmatpush1.bf16.msra.mxu0 %v3210
    %3233 = vmatprep.subr.bf16.mxu0 0
    %3234 = vmatpush1.bf16.msra.mxu0 %v3211
    %3235 = vmatprep.subr.bf16.mxu0 0
    %3236 = vmatpush1.bf16.msra.mxu0 %v3212
    %3237 = vmatprep.subr.bf16.mxu0 0
    %3238 = vmatpush1.bf16.msra.mxu0 0
    %3239 = vmatprep.subr.bf16.mxu0 0
    %3240 = vmatpush1.bf16.msra.mxu0 0
    %3241 = vmatprep.subr.bf16.mxu0 0
    %3242 = vmatpush1.bf16.msra.mxu0 0
    %3243 = vmatprep.subr.bf16.mxu0 0
    %3244 = vmatpush1.bf16.msra.mxu0 0
    %3245 = vmatprep.subr.bf16.mxu0 0
    %3246 = vmatpush1.bf16.msra.mxu0 0
    %3247 = vmatprep.subr.bf16.mxu0 0
    %3248 = vmatpush1.bf16.msra.mxu0 0
    %3249 = vmatprep.subr.bf16.mxu0 0
    %3250 = vmatpush1.bf16.msra.mxu0 0
    %3251 = vmatprep.subr.bf16.mxu0 0
    %3252 = vmatpush1.bf16.msra.mxu0 0
    %3253 = vmatprep.mubr.bf16.mxu0 0
    %3254 = vmatmul.mubr.bf16.gmra.mrb[0].mxu0 %v3156
    %v3255 = vpop.f32.mrb[0].mxu0
    %v3256 = vadd.f32 0.0, %v3255
    %v3257 = vpop.f32.mrb[0].mxu0
    %v3258 = vpop.f32.mrb[0].mxu0
    %v3259 = vpop.f32.mrb[0].mxu0
    %3260 = vdwg.mxu0
    %v3261 = vld [vmem:[#allocation22] sm:$0x1]
    %v3262 = vld [vmem:[#allocation23] sm:$0x1]
    %v3263 = vsel %vm1628, %v3256, 0.0
    %v3264 = vrot.slane %v3263, 4
    %v3265 = vadd.f32 %v3263, %v3264
    %v3266 = vrot.slane %v3265, 2
    %v3267 = vadd.f32 %v3265, %v3266
    %v3268 = vrot.slane %v3267, 1
    %v3269 = vadd.f32 %v3267, %v3268
    %v3270 = vmul.f32 %v3269, %v1986
    %v3271 = vsub.f32 %v3256, %v3270
    %v3272 = vmul.f32 %v3271, %v3271
    %v3273 = vsel %vm1628, %v3272, 0.0
    %v3274 = vrot.slane %v3273, 4
    %v3275 = vadd.f32 %v3273, %v3274
    %v3276 = vrot.slane %v3275, 2
    %v3277 = vadd.f32 %v3275, %v3276
    %v3278 = vrot.slane %v3277, 1
    %v3279 = vadd.f32 %v3277, %v3278
    %v3280 = vmul.f32 %v3279, %v1986
    %v3281 = vadd.f32 %v3280, 1e-05
    %v3282 = vrsqrt.pop %v3281
    %v3283 = vmul.f32 %v3271, %v3282
    %v3285 = vlaneseq
    %v3286 = vshrl.u32 %v3285, 7
    %v3287 = vsub.s32 0, %v3286
    %v3288 = vrot.slane %v3261, %v3287
    %v3290 = vmul.f32 %v3283, %v3288
    %v3292 = vlaneseq
    %v3293 = vshrl.u32 %v3292, 7
    %v3294 = vsub.s32 0, %v3293
    %v3295 = vrot.slane %v3262, %v3294
    %v3297 = vadd.f32 %v3290, %v3295
    %v3298 = vmax.f32 %v3297, 0.0
    %v3299 = vpack.c.bf16 %v3298, %v3298
    %v3300 = vld [vmem:[%s43] sm:$0xf]
    %v3301 = vld [vmem:[%s43 + $0x4] sm:$0xf]
    %v3304 = vunpack.c.l.b16 %v3300
    %v3305 = vunpack.c.l.b16 %v3301
    %v3306 = vpack.c.b16 %v3305, %v3304
    %v3309 = vsel %vm1628, %v3299, 0
    %3311 = vmatprep.subr.bf16.mxu0 0
    %3312 = vmatpush1.bf16.msra.mxu0 %v3306
    %3313 = vmatprep.subr.bf16.mxu0 0
    %3314 = vmatpush1.bf16.msra.mxu0 0
    %3315 = vmatprep.subr.bf16.mxu0 0
    %3316 = vmatpush1.bf16.msra.mxu0 0
    %3317 = vmatprep.subr.bf16.mxu0 0
    %3318 = vmatpush1.bf16.msra.mxu0 0
    %3319 = vmatprep.subr.bf16.mxu0 0
    %3320 = vmatpush1.bf16.msra.mxu0 0
    %3321 = vmatprep.subr.bf16.mxu0 0
    %3322 = vmatpush1.bf16.msra.mxu0 0
    %3323 = vmatprep.subr.bf16.mxu0 0
    %3324 = vmatpush1.bf16.msra.mxu0 0
    %3325 = vmatprep.subr.bf16.mxu0 0
    %3326 = vmatpush1.bf16.msra.mxu0 0
    %3327 = vmatprep.subr.bf16.mxu0 0
    %3328 = vmatpush1.bf16.msra.mxu0 0
    %3329 = vmatprep.subr.bf16.mxu0 0
    %3330 = vmatpush1.bf16.msra.mxu0 0
    %3331 = vmatprep.subr.bf16.mxu0 0
    %3332 = vmatpush1.bf16.msra.mxu0 0
    %3333 = vmatprep.subr.bf16.mxu0 0
    %3334 = vmatpush1.bf16.msra.mxu0 0
    %3335 = vmatprep.subr.bf16.mxu0 0
    %3336 = vmatpush1.bf16.msra.mxu0 0
    %3337 = vmatprep.subr.bf16.mxu0 0
    %3338 = vmatpush1.bf16.msra.mxu0 0
    %3339 = vmatprep.subr.bf16.mxu0 0
    %3340 = vmatpush1.bf16.msra.mxu0 0
    %3341 = vmatprep.subr.bf16.mxu0 0
    %3342 = vmatpush1.bf16.msra.mxu0 0
    %3343 = vmatprep.mubr.bf16.mxu0 0
    %3344 = vmatmul.mubr.bf16.gmra.mrb[0].mxu0 %v3309
    %v3345 = vpop.f32.mrb[0].mxu0
    %v3346 = vadd.f32 0.0, %v3345
    %v3347 = vpop.f32.mrb[0].mxu0
    %v3348 = vpop.f32.mrb[0].mxu0
    %v3349 = vpop.f32.mrb[0].mxu0
    %3350 = vdwg.mxu0
    %v3351 = vld [vmem:[#allocation25] sm:$0x1]
    %v3352 = vld [vmem:[#allocation26] sm:$0x1]
    %v3353 = vsel %vm2944, %v3346, 0.0
    %v3354 = vrot.slane %v3353, 4
    %v3355 = vadd.f32 %v3353, %v3354
    %v3356 = vrot.slane %v3355, 2
    %v3357 = vadd.f32 %v3355, %v3356
    %v3358 = vrot.slane %v3357, 1
    %v3359 = vadd.f32 %v3357, %v3358
    %v3360 = vmul.f32 %v3359, %v1986
    %v3361 = vsub.f32 %v3346, %v3360
    %v3362 = vmul.f32 %v3361, %v3361
    %v3363 = vsel %vm2944, %v3362, 0.0
    %v3364 = vrot.slane %v3363, 4
    %v3365 = vadd.f32 %v3363, %v3364
    %v3366 = vrot.slane %v3365, 2
    %v3367 = vadd.f32 %v3365, %v3366
    %v3368 = vrot.slane %v3367, 1
    %v3369 = vadd.f32 %v3367, %v3368
    %v3370 = vmul.f32 %v3369, %v1986
    %v3371 = vadd.f32 %v3370, 1e-05
    %v3372 = vrsqrt.pop %v3371
    %v3373 = vmul.f32 %v3361, %v3372
    %v3375 = vlaneseq
    %v3376 = vshrl.u32 %v3375, 7
    %v3377 = vsub.s32 0, %v3376
    %v3378 = vrot.slane %v3351, %v3377
    %v3380 = vmul.f32 %v3373, %v3378
    %v3382 = vlaneseq
    %v3383 = vshrl.u32 %v3382, 7
    %v3384 = vsub.s32 0, %v3383
    %v3385 = vrot.slane %v3352, %v3384
    %v3387 = vadd.f32 %v3380, %v3385
    %v3388 = vmax.f32 %v3387, 0.0
    %v3389 = vpack.c.bf16 %v3388, %v3388
    %v3390 = vld [vmem:[%s49] sm:$0xf]
    %v3391 = vld [vmem:[%s49 + $0x4] sm:$0xf]
    %v3392 = vld [vmem:[%s49 + $0x8] sm:$0xf]
    %v3393 = vld [vmem:[%s49 + $0xc] sm:$0xf]
    %v3394 = vld [vmem:[%s49 + $0x10] sm:$0xf]
    %v3395 = vld [vmem:[%s49 + $0x14] sm:$0xf]
    %v3396 = vld [vmem:[%s49 + $0x18] sm:$0xf]
    %v3397 = vld [vmem:[%s49 + $0x1c] sm:$0xf]
    %v3406 = vunpack.c.l.b16 %v3390
    %v3407 = vunpack.c.l.b16 %v3391
    %v3408 = vunpack.c.l.b16 %v3392
    %v3409 = vunpack.c.l.b16 %v3393
    %v3410 = vunpack.c.l.b16 %v3394
    %v3411 = vunpack.c.l.b16 %v3395
    %v3412 = vunpack.c.l.b16 %v3396
    %v3413 = vunpack.c.l.b16 %v3397
    %v3414 = vpack.c.b16 %v3407, %v3406
    %v3415 = vpack.c.b16 %v3409, %v3408
    %v3416 = vpack.c.b16 %v3411, %v3410
    %v3417 = vpack.c.b16 %v3413, %v3412
    %v3423 = vsel %vm2944, %v3389, 0
    %3425 = vmatprep.subr.bf16.mxu0 0
    %3426 = vmatpush1.bf16.msra.mxu0 %v3414
    %3427 = vmatprep.subr.bf16.mxu0 0
    %3428 = vmatpush1.bf16.msra.mxu0 %v3415
    %3429 = vmatprep.subr.bf16.mxu0 0
    %3430 = vmatpush1.bf16.msra.mxu0 %v3416
    %3431 = vmatprep.subr.bf16.mxu0 0
    %3432 = vmatpush1.bf16.msra.mxu0 %v3417
    %3433 = vmatprep.subr.bf16.mxu0 0
    %3434 = vmatpush1.bf16.msra.mxu0 0
    %3435 = vmatprep.subr.bf16.mxu0 0
    %3436 = vmatpush1.bf16.msra.mxu0 0
    %3437 = vmatprep.subr.bf16.mxu0 0
    %3438 = vmatpush1.bf16.msra.mxu0 0
    %3439 = vmatprep.subr.bf16.mxu0 0
    %3440 = vmatpush1.bf16.msra.mxu0 0
    %3441 = vmatprep.subr.bf16.mxu0 0
    %3442 = vmatpush1.bf16.msra.mxu0 0
    %3443 = vmatprep.subr.bf16.mxu0 0
    %3444 = vmatpush1.bf16.msra.mxu0 0
    %3445 = vmatprep.subr.bf16.mxu0 0
    %3446 = vmatpush1.bf16.msra.mxu0 0
    %3447 = vmatprep.subr.bf16.mxu0 0
    %3448 = vmatpush1.bf16.msra.mxu0 0
    %3449 = vmatprep.subr.bf16.mxu0 0
    %3450 = vmatpush1.bf16.msra.mxu0 0
    %3451 = vmatprep.subr.bf16.mxu0 0
    %3452 = vmatpush1.bf16.msra.mxu0 0
    %3453 = vmatprep.subr.bf16.mxu0 0
    %3454 = vmatpush1.bf16.msra.mxu0 0
    %3455 = vmatprep.subr.bf16.mxu0 0
    %3456 = vmatpush1.bf16.msra.mxu0 0
    %3457 = vmatprep.mubr.bf16.mxu0 0
    %3458 = vmatmul.mubr.bf16.gmra.mrb[0].mxu0 %v3423
    %v3459 = vpop.f32.mrb[0].mxu0
    %v3460 = vadd.f32 0.0, %v3459
    %v3461 = vpop.f32.mrb[0].mxu0
    %v3462 = vpop.f32.mrb[0].mxu0
    %v3463 = vpop.f32.mrb[0].mxu0
    %3464 = vdwg.mxu0
    %v3465 = vld [vmem:[#allocation28] sm:$0x1]
    %v3466 = vld [vmem:[#allocation29] sm:$0x1]
    %v3467 = vrot.slane %v3460, 4
    %v3468 = vadd.f32 %v3460, %v3467
    %v3469 = vrot.slane %v3468, 2
    %v3470 = vadd.f32 %v3468, %v3469
    %v3471 = vrot.slane %v3470, 1
    %v3472 = vadd.f32 %v3470, %v3471
    %v3473 = vmul.f32 %v3472, %v1986
    %v3474 = vsub.f32 %v3460, %v3473
    %v3475 = vmul.f32 %v3474, %v3474
    %v3476 = vrot.slane %v3475, 4
    %v3477 = vadd.f32 %v3475, %v3476
    %v3478 = vrot.slane %v3477, 2
    %v3479 = vadd.f32 %v3477, %v3478
    %v3480 = vrot.slane %v3479, 1
    %v3481 = vadd.f32 %v3479, %v3480
    %v3482 = vmul.f32 %v3481, %v1986
    %v3483 = vadd.f32 %v3482, 1e-05
    %v3484 = vrsqrt.pop %v3483
    %v3485 = vmul.f32 %v3474, %v3484
    %v3487 = vlaneseq
    %v3488 = vshrl.u32 %v3487, 7
    %v3489 = vsub.s32 0, %v3488
    %v3490 = vrot.slane %v3465, %v3489
    %v3492 = vmul.f32 %v3485, %v3490
    %v3494 = vlaneseq
    %v3495 = vshrl.u32 %v3494, 7
    %v3496 = vsub.s32 0, %v3495
    %v3497 = vrot.slane %v3466, %v3496
    %v3499 = vadd.f32 %v3492, %v3497
    %v3500 = vmax.f32 %v3499, 0.0
    %v3501 = vpack.c.bf16 %v3500, %v3500
    %v3502 = vld [vmem:[%s55] sm:$0xff]
    %v3503 = vld [vmem:[%s55 + $0x8] sm:$0xff]
    %v3504 = vld [vmem:[%s55 + $0x10] sm:$0xff]
    %v3505 = vld [vmem:[%s55 + $0x18] sm:$0xff]
    %v3506 = vld [vmem:[%s55 + $0x20] sm:$0xff]
    %v3507 = vld [vmem:[%s55 + $0x28] sm:$0xff]
    %v3508 = vld [vmem:[%s55 + $0x30] sm:$0xff]
    %v3509 = vld [vmem:[%s55 + $0x38] sm:$0xff]
    %v3510 = vld [vmem:[%s55 + $0x40] sm:$0xff]
    %v3511 = vld [vmem:[%s55 + $0x48] sm:$0xff]
    %v3512 = vld [vmem:[%s55 + $0x50] sm:$0xff]
    %v3513 = vld [vmem:[%s55 + $0x58] sm:$0xff]
    %v3514 = vld [vmem:[%s55 + $0x60] sm:$0xff]
    %v3515 = vld [vmem:[%s55 + $0x68] sm:$0xff]
    %v3516 = vld [vmem:[%s55 + $0x70] sm:$0xff]
    %v3517 = vld [vmem:[%s55 + $0x78] sm:$0xff]
    %v3534 = vunpack.c.l.b16 %v3502
    %v3535 = vunpack.c.h.b16 %v3502
    %v3536 = vunpack.c.l.b16 %v3503
    %v3537 = vunpack.c.h.b16 %v3503
    %v3538 = vunpack.c.l.b16 %v3504
    %v3539 = vunpack.c.h.b16 %v3504
    %v3540 = vunpack.c.l.b16 %v3505
    %v3541 = vunpack.c.h.b16 %v3505
    %v3542 = vunpack.c.l.b16 %v3506
    %v3543 = vunpack.c.h.b16 %v3506
    %v3544 = vunpack.c.l.b16 %v3507
    %v3545 = vunpack.c.h.b16 %v3507
    %v3546 = vunpack.c.l.b16 %v3508
    %v3547 = vunpack.c.h.b16 %v3508
    %v3548 = vunpack.c.l.b16 %v3509
    %v3549 = vunpack.c.h.b16 %v3509
    %v3550 = vunpack.c.l.b16 %v3510
    %v3551 = vunpack.c.h.b16 %v3510
    %v3552 = vunpack.c.l.b16 %v3511
    %v3553 = vunpack.c.h.b16 %v3511
    %v3554 = vunpack.c.l.b16 %v3512
    %v3555 = vunpack.c.h.b16 %v3512
    %v3556 = vunpack.c.l.b16 %v3513
    %v3557 = vunpack.c.h.b16 %v3513
    %v3558 = vunpack.c.l.b16 %v3514
    %v3559 = vunpack.c.h.b16 %v3514
    %v3560 = vunpack.c.l.b16 %v3515
    %v3561 = vunpack.c.h.b16 %v3515
    %v3562 = vunpack.c.l.b16 %v3516
    %v3563 = vunpack.c.h.b16 %v3516
    %v3564 = vunpack.c.l.b16 %v3517
    %v3565 = vunpack.c.h.b16 %v3517
    %v3566 = vpack.c.b16 %v3536, %v3534
    %v3567 = vpack.c.b16 %v3537, %v3535
    %v3568 = vpack.c.b16 %v3540, %v3538
    %v3569 = vpack.c.b16 %v3541, %v3539
    %v3570 = vpack.c.b16 %v3544, %v3542
    %v3571 = vpack.c.b16 %v3545, %v3543
    %v3572 = vpack.c.b16 %v3548, %v3546
    %v3573 = vpack.c.b16 %v3549, %v3547
    %v3574 = vpack.c.b16 %v3552, %v3550
    %v3575 = vpack.c.b16 %v3553, %v3551
    %v3576 = vpack.c.b16 %v3556, %v3554
    %v3577 = vpack.c.b16 %v3557, %v3555
    %v3578 = vpack.c.b16 %v3560, %v3558
    %v3579 = vpack.c.b16 %v3561, %v3559
    %v3580 = vpack.c.b16 %v3564, %v3562
    %v3581 = vpack.c.b16 %v3565, %v3563
    %3598 = vmatprep.subr.bf16.mxu0 %v3567
    %3599 = vmatpush1.bf16.msra.mxu0 %v3566
    %3600 = vmatprep.subr.bf16.mxu0 %v3569
    %3601 = vmatpush1.bf16.msra.mxu0 %v3568
    %3602 = vmatprep.subr.bf16.mxu0 %v3571
    %3603 = vmatpush1.bf16.msra.mxu0 %v3570
    %3604 = vmatprep.subr.bf16.mxu0 %v3573
    %3605 = vmatpush1.bf16.msra.mxu0 %v3572
    %3606 = vmatprep.subr.bf16.mxu0 %v3575
    %3607 = vmatpush1.bf16.msra.mxu0 %v3574
    %3608 = vmatprep.subr.bf16.mxu0 %v3577
    %3609 = vmatpush1.bf16.msra.mxu0 %v3576
    %3610 = vmatprep.subr.bf16.mxu0 %v3579
    %3611 = vmatpush1.bf16.msra.mxu0 %v3578
    %3612 = vmatprep.subr.bf16.mxu0 %v3581
    %3613 = vmatpush1.bf16.msra.mxu0 %v3580
    %3614 = vmatprep.subr.bf16.mxu0 0
    %3615 = vmatpush1.bf16.msra.mxu0 0
    %3616 = vmatprep.subr.bf16.mxu0 0
    %3617 = vmatpush1.bf16.msra.mxu0 0
    %3618 = vmatprep.subr.bf16.mxu0 0
    %3619 = vmatpush1.bf16.msra.mxu0 0
    %3620 = vmatprep.subr.bf16.mxu0 0
    %3621 = vmatpush1.bf16.msra.mxu0 0
    %3622 = vmatprep.subr.bf16.mxu0 0
    %3623 = vmatpush1.bf16.msra.mxu0 0
    %3624 = vmatprep.subr.bf16.mxu0 0
    %3625 = vmatpush1.bf16.msra.mxu0 0
    %3626 = vmatprep.subr.bf16.mxu0 0
    %3627 = vmatpush1.bf16.msra.mxu0 0
    %3628 = vmatprep.subr.bf16.mxu0 0
    %3629 = vmatpush1.bf16.msra.mxu0 0
    %3630 = vmatprep.mubr.bf16.mxu0 0
    %3631 = vmatmul.mubr.bf16.gmra.mrb[0].mxu0 %v3501
    %v3632 = vpop.f32.mrb[0].mxu0
    %v3633 = vadd.f32 0.0, %v3632
    %v3634 = vpop.f32.mrb[0].mxu0
    %v3635 = vadd.f32 0.0, %v3634
    %v3636 = vpop.f32.mrb[0].mxu0
    %v3637 = vpop.f32.mrb[0].mxu0
    %3638 = vdwg.mxu0
    %v3639 = vld [vmem:[#allocation31] sm:$0x3]
    %v3640 = vld [vmem:[#allocation32] sm:$0x3]
    %v3641 = vrot.slane %v3633, 4
    %v3642 = vadd.f32 %v3633, %v3641
    %v3643 = vrot.slane %v3642, 2
    %v3644 = vadd.f32 %v3642, %v3643
    %v3645 = vrot.slane %v3644, 1
    %v3646 = vadd.f32 %v3644, %v3645
    %v3647 = vrot.slane %v3635, 4
    %v3648 = vadd.f32 %v3635, %v3647
    %v3649 = vrot.slane %v3648, 2
    %v3650 = vadd.f32 %v3648, %v3649
    %v3651 = vrot.slane %v3650, 1
    %v3652 = vadd.f32 %v3650, %v3651
    %v3653 = vmul.f32 %v3646, %v1986
    %v3654 = vmul.f32 %v3652, %v1986
    %v3655 = vsub.f32 %v3633, %v3653
    %v3656 = vsub.f32 %v3635, %v3654
    %v3657 = vmul.f32 %v3655, %v3655
    %v3658 = vmul.f32 %v3656, %v3656
    %v3659 = vrot.slane %v3657, 4
    %v3660 = vadd.f32 %v3657, %v3659
    %v3661 = vrot.slane %v3660, 2
    %v3662 = vadd.f32 %v3660, %v3661
    %v3663 = vrot.slane %v3662, 1
    %v3664 = vadd.f32 %v3662, %v3663
    %v3665 = vrot.slane %v3658, 4
    %v3666 = vadd.f32 %v3658, %v3665
    %v3667 = vrot.slane %v3666, 2
    %v3668 = vadd.f32 %v3666, %v3667
    %v3669 = vrot.slane %v3668, 1
    %v3670 = vadd.f32 %v3668, %v3669
    %v3671 = vmul.f32 %v3664, %v1986
    %v3672 = vmul.f32 %v3670, %v1986
    %v3673 = vadd.f32 %v3671, 1e-05
    %v3674 = vadd.f32 %v3672, 1e-05
    %v3675 = vrsqrt.pop %v3673
    %v3676 = vrsqrt.pop %v3674
    %v3677 = vmul.f32 %v3655, %v3675
    %v3678 = vmul.f32 %v3656, %v3676
    %v3680 = vlaneseq
    %v3681 = vshrl.u32 %v3680, 7
    %v3682 = vsub.s32 0, %v3681
    %v3683 = vrot.slane %v3639, %v3682
    %v3684 = vlaneseq
    %v3685 = vshrl.u32 %v3684, 7
    %v3686 = vsub.s32 1, %v3685
    %v3687 = vrot.slane %v3639, %v3686
    %v3690 = vmul.f32 %v3677, %v3683
    %v3691 = vmul.f32 %v3678, %v3687
    %v3693 = vlaneseq
    %v3694 = vshrl.u32 %v3693, 7
    %v3695 = vsub.s32 0, %v3694
    %v3696 = vrot.slane %v3640, %v3695
    %v3697 = vlaneseq
    %v3698 = vshrl.u32 %v3697, 7
    %v3699 = vsub.s32 1, %v3698
    %v3700 = vrot.slane %v3640, %v3699
    %v3703 = vadd.f32 %v3690, %v3696
    %v3704 = vadd.f32 %v3691, %v3700
    %v3705 = vmax.f32 %v3703, 0.0
    %v3706 = vmax.f32 %v3704, 0.0
    %v3707 = vpack.c.bf16 %v3705, %v3705
    %v3708 = vpack.c.bf16 %v3706, %v3706
    %v3709 = vld [vmem:[#allocation34] sm:$0xff]
    %v3710 = vld [vmem:[#allocation34 + $0x8] sm:$0xff]
    %v3711 = vld [vmem:[#allocation34 + $0x10] sm:$0xff]
    %v3712 = vld [vmem:[#allocation34 + $0x18] sm:$0xff]
    %v3713 = vld [vmem:[#allocation34 + $0x20] sm:$0xff]
    %v3714 = vld [vmem:[#allocation34 + $0x28] sm:$0xff]
    %v3715 = vld [vmem:[#allocation34 + $0x30] sm:$0xff]
    %v3716 = vld [vmem:[#allocation34 + $0x38] sm:$0xff]
    %v3717 = vld [vmem:[#allocation34 + $0x40] sm:$0xff]
    %v3718 = vld [vmem:[#allocation34 + $0x48] sm:$0xff]
    %v3719 = vld [vmem:[#allocation34 + $0x50] sm:$0xff]
    %v3720 = vld [vmem:[#allocation34 + $0x58] sm:$0xff]
    %v3721 = vld [vmem:[#allocation34 + $0x60] sm:$0xff]
    %v3722 = vld [vmem:[#allocation34 + $0x68] sm:$0xff]
    %v3723 = vld [vmem:[#allocation34 + $0x70] sm:$0xff]
    %v3724 = vld [vmem:[#allocation34 + $0x78] sm:$0xff]
    %v3725 = vld [vmem:[#allocation34 + $0x80] sm:$0xff]
    %v3726 = vld [vmem:[#allocation34 + $0x88] sm:$0xff]
    %v3727 = vld [vmem:[#allocation34 + $0x90] sm:$0xff]
    %v3728 = vld [vmem:[#allocation34 + $0x98] sm:$0xff]
    %v3729 = vld [vmem:[#allocation34 + $0xa0] sm:$0xff]
    %v3730 = vld [vmem:[#allocation34 + $0xa8] sm:$0xff]
    %v3731 = vld [vmem:[#allocation34 + $0xb0] sm:$0xff]
    %v3732 = vld [vmem:[#allocation34 + $0xb8] sm:$0xff]
    %v3733 = vld [vmem:[#allocation34 + $0xc0] sm:$0xff]
    %v3734 = vld [vmem:[#allocation34 + $0xc8] sm:$0xff]
    %v3735 = vld [vmem:[#allocation34 + $0xd0] sm:$0xff]
    %v3736 = vld [vmem:[#allocation34 + $0xd8] sm:$0xff]
    %v3737 = vld [vmem:[#allocation34 + $0xe0] sm:$0xff]
    %v3738 = vld [vmem:[#allocation34 + $0xe8] sm:$0xff]
    %v3739 = vld [vmem:[#allocation34 + $0xf0] sm:$0xff]
    %v3740 = vld [vmem:[#allocation34 + $0xf8] sm:$0xff]
    %v3741 = vld [vmem:[#allocation34 + $0x100] sm:$0xff]
    %v3742 = vld [vmem:[#allocation34 + $0x108] sm:$0xff]
    %v3743 = vld [vmem:[#allocation34 + $0x110] sm:$0xff]
    %v3744 = vld [vmem:[#allocation34 + $0x118] sm:$0xff]
    %v3745 = vld [vmem:[#allocation34 + $0x120] sm:$0xff]
    %v3746 = vld [vmem:[#allocation34 + $0x128] sm:$0xff]
    %v3747 = vld [vmem:[#allocation34 + $0x130] sm:$0xff]
    %v3748 = vld [vmem:[#allocation34 + $0x138] sm:$0xff]
    %v3749 = vld [vmem:[#allocation34 + $0x140] sm:$0xff]
    %v3750 = vld [vmem:[#allocation34 + $0x148] sm:$0xff]
    %v3751 = vld [vmem:[#allocation34 + $0x150] sm:$0xff]
    %v3752 = vld [vmem:[#allocation34 + $0x158] sm:$0xff]
    %v3753 = vld [vmem:[#allocation34 + $0x160] sm:$0xff]
    %v3754 = vld [vmem:[#allocation34 + $0x168] sm:$0xff]
    %v3755 = vld [vmem:[#allocation34 + $0x170] sm:$0xff]
    %v3756 = vld [vmem:[#allocation34 + $0x178] sm:$0xff]
    %v3757 = vld [vmem:[#allocation34 + $0x180] sm:$0xff]
    %v3758 = vld [vmem:[#allocation34 + $0x188] sm:$0xff]
    %v3759 = vld [vmem:[#allocation34 + $0x190] sm:$0xff]
    %v3760 = vld [vmem:[#allocation34 + $0x198] sm:$0xff]
    %v3761 = vld [vmem:[#allocation34 + $0x1a0] sm:$0xff]
    %v3762 = vld [vmem:[#allocation34 + $0x1a8] sm:$0xff]
    %v3763 = vld [vmem:[#allocation34 + $0x1b0] sm:$0xff]
    %v3764 = vld [vmem:[#allocation34 + $0x1b8] sm:$0xff]
    %v3765 = vld [vmem:[#allocation34 + $0x1c0] sm:$0xff]
    %v3766 = vld [vmem:[#allocation34 + $0x1c8] sm:$0xff]
    %v3767 = vld [vmem:[#allocation34 + $0x1d0] sm:$0xff]
    %v3768 = vld [vmem:[#allocation34 + $0x1d8] sm:$0xff]
    %v3769 = vld [vmem:[#allocation34 + $0x1e0] sm:$0xff]
    %v3770 = vld [vmem:[#allocation34 + $0x1e8] sm:$0xff]
    %v3771 = vld [vmem:[#allocation34 + $0x1f0] sm:$0xff]
    %v3772 = vld [vmem:[#allocation34 + $0x1f8] sm:$0xff]
    %v3837 = vunpack.c.l.b16 %v3709
    %v3838 = vunpack.c.h.b16 %v3709
    %v3839 = vunpack.c.l.b16 %v3710
    %v3840 = vunpack.c.h.b16 %v3710
    %v3841 = vunpack.c.l.b16 %v3711
    %v3842 = vunpack.c.h.b16 %v3711
    %v3843 = vunpack.c.l.b16 %v3712
    %v3844 = vunpack.c.h.b16 %v3712
    %v3845 = vunpack.c.l.b16 %v3713
    %v3846 = vunpack.c.h.b16 %v3713
    %v3847 = vunpack.c.l.b16 %v3714
    %v3848 = vunpack.c.h.b16 %v3714
    %v3849 = vunpack.c.l.b16 %v3715
    %v3850 = vunpack.c.h.b16 %v3715
    %v3851 = vunpack.c.l.b16 %v3716
    %v3852 = vunpack.c.h.b16 %v3716
    %v3853 = vunpack.c.l.b16 %v3717
    %v3854 = vunpack.c.h.b16 %v3717
    %v3855 = vunpack.c.l.b16 %v3718
    %v3856 = vunpack.c.h.b16 %v3718
    %v3857 = vunpack.c.l.b16 %v3719
    %v3858 = vunpack.c.h.b16 %v3719
    %v3859 = vunpack.c.l.b16 %v3720
    %v3860 = vunpack.c.h.b16 %v3720
    %v3861 = vunpack.c.l.b16 %v3721
    %v3862 = vunpack.c.h.b16 %v3721
    %v3863 = vunpack.c.l.b16 %v3722
    %v3864 = vunpack.c.h.b16 %v3722
    %v3865 = vunpack.c.l.b16 %v3723
    %v3866 = vunpack.c.h.b16 %v3723
    %v3867 = vunpack.c.l.b16 %v3724
    %v3868 = vunpack.c.h.b16 %v3724
    %v3869 = vunpack.c.l.b16 %v3725
    %v3870 = vunpack.c.h.b16 %v3725
    %v3871 = vunpack.c.l.b16 %v3726
    %v3872 = vunpack.c.h.b16 %v3726
    %v3873 = vunpack.c.l.b16 %v3727
    %v3874 = vunpack.c.h.b16 %v3727
    %v3875 = vunpack.c.l.b16 %v3728
    %v3876 = vunpack.c.h.b16 %v3728
    %v3877 = vunpack.c.l.b16 %v3729
    %v3878 = vunpack.c.h.b16 %v3729
    %v3879 = vunpack.c.l.b16 %v3730
    %v3880 = vunpack.c.h.b16 %v3730
    %v3881 = vunpack.c.l.b16 %v3731
    %v3882 = vunpack.c.h.b16 %v3731
    %v3883 = vunpack.c.l.b16 %v3732
    %v3884 = vunpack.c.h.b16 %v3732
    %v3885 = vunpack.c.l.b16 %v3733
    %v3886 = vunpack.c.h.b16 %v3733
    %v3887 = vunpack.c.l.b16 %v3734
    %v3888 = vunpack.c.h.b16 %v3734
    %v3889 = vunpack.c.l.b16 %v3735
    %v3890 = vunpack.c.h.b16 %v3735
    %v3891 = vunpack.c.l.b16 %v3736
    %v3892 = vunpack.c.h.b16 %v3736
    %v3893 = vunpack.c.l.b16 %v3737
    %v3894 = vunpack.c.h.b16 %v3737
    %v3895 = vunpack.c.l.b16 %v3738
    %v3896 = vunpack.c.h.b16 %v3738
    %v3897 = vunpack.c.l.b16 %v3739
    %v3898 = vunpack.c.h.b16 %v3739
    %v3899 = vunpack.c.l.b16 %v3740
    %v3900 = vunpack.c.h.b16 %v3740
    %v3901 = vunpack.c.l.b16 %v3741
    %v3902 = vunpack.c.h.b16 %v3741
    %v3903 = vunpack.c.l.b16 %v3742
    %v3904 = vunpack.c.h.b16 %v3742
    %v3905 = vunpack.c.l.b16 %v3743
    %v3906 = vunpack.c.h.b16 %v3743
    %v3907 = vunpack.c.l.b16 %v3744
    %v3908 = vunpack.c.h.b16 %v3744
    %v3909 = vunpack.c.l.b16 %v3745
    %v3910 = vunpack.c.h.b16 %v3745
    %v3911 = vunpack.c.l.b16 %v3746
    %v3912 = vunpack.c.h.b16 %v3746
    %v3913 = vunpack.c.l.b16 %v3747
    %v3914 = vunpack.c.h.b16 %v3747
    %v3915 = vunpack.c.l.b16 %v3748
    %v3916 = vunpack.c.h.b16 %v3748
    %v3917 = vunpack.c.l.b16 %v3749
    %v3918 = vunpack.c.h.b16 %v3749
    %v3919 = vunpack.c.l.b16 %v3750
    %v3920 = vunpack.c.h.b16 %v3750
    %v3921 = vunpack.c.l.b16 %v3751
    %v3922 = vunpack.c.h.b16 %v3751
    %v3923 = vunpack.c.l.b16 %v3752
    %v3924 = vunpack.c.h.b16 %v3752
    %v3925 = vunpack.c.l.b16 %v3753
    %v3926 = vunpack.c.h.b16 %v3753
    %v3927 = vunpack.c.l.b16 %v3754
    %v3928 = vunpack.c.h.b16 %v3754
    %v3929 = vunpack.c.l.b16 %v3755
    %v3930 = vunpack.c.h.b16 %v3755
    %v3931 = vunpack.c.l.b16 %v3756
    %v3932 = vunpack.c.h.b16 %v3756
    %v3933 = vunpack.c.l.b16 %v3757
    %v3934 = vunpack.c.h.b16 %v3757
    %v3935 = vunpack.c.l.b16 %v3758
    %v3936 = vunpack.c.h.b16 %v3758
    %v3937 = vunpack.c.l.b16 %v3759
    %v3938 = vunpack.c.h.b16 %v3759
    %v3939 = vunpack.c.l.b16 %v3760
    %v3940 = vunpack.c.h.b16 %v3760
    %v3941 = vunpack.c.l.b16 %v3761
    %v3942 = vunpack.c.h.b16 %v3761
    %v3943 = vunpack.c.l.b16 %v3762
    %v3944 = vunpack.c.h.b16 %v3762
    %v3945 = vunpack.c.l.b16 %v3763
    %v3946 = vunpack.c.h.b16 %v3763
    %v3947 = vunpack.c.l.b16 %v3764
    %v3948 = vunpack.c.h.b16 %v3764
    %v3949 = vunpack.c.l.b16 %v3765
    %v3950 = vunpack.c.h.b16 %v3765
    %v3951 = vunpack.c.l.b16 %v3766
    %v3952 = vunpack.c.h.b16 %v3766
    %v3953 = vunpack.c.l.b16 %v3767
    %v3954 = vunpack.c.h.b16 %v3767
    %v3955 = vunpack.c.l.b16 %v3768
    %v3956 = vunpack.c.h.b16 %v3768
    %v3957 = vunpack.c.l.b16 %v3769
    %v3958 = vunpack.c.h.b16 %v3769
    %v3959 = vunpack.c.l.b16 %v3770
    %v3960 = vunpack.c.h.b16 %v3770
    %v3961 = vunpack.c.l.b16 %v3771
    %v3962 = vunpack.c.h.b16 %v3771
    %v3963 = vunpack.c.l.b16 %v3772
    %v3964 = vunpack.c.h.b16 %v3772
    %v3965 = vpack.c.b16 %v3841, %v3837
    %v3966 = vpack.c.b16 %v3842, %v3838
    %v3967 = vpack.c.b16 %v3843, %v3839
    %v3968 = vpack.c.b16 %v3844, %v3840
    %v3969 = vpack.c.b16 %v3849, %v3845
    %v3970 = vpack.c.b16 %v3850, %v3846
    %v3971 = vpack.c.b16 %v3851, %v3847
    %v3972 = vpack.c.b16 %v3852, %v3848
    %v3973 = vpack.c.b16 %v3857, %v3853
    %v3974 = vpack.c.b16 %v3858, %v3854
    %v3975 = vpack.c.b16 %v3859, %v3855
    %v3976 = vpack.c.b16 %v3860, %v3856
    %v3977 = vpack.c.b16 %v3865, %v3861
    %v3978 = vpack.c.b16 %v3866, %v3862
    %v3979 = vpack.c.b16 %v3867, %v3863
    %v3980 = vpack.c.b16 %v3868, %v3864
    %v3981 = vpack.c.b16 %v3873, %v3869
    %v3982 = vpack.c.b16 %v3874, %v3870
    %v3983 = vpack.c.b16 %v3875, %v3871
    %v3984 = vpack.c.b16 %v3876, %v3872
    %v3985 = vpack.c.b16 %v3881, %v3877
    %v3986 = vpack.c.b16 %v3882, %v3878
    %v3987 = vpack.c.b16 %v3883, %v3879
    %v3988 = vpack.c.b16 %v3884, %v3880
    %v3989 = vpack.c.b16 %v3889, %v3885
    %v3990 = vpack.c.b16 %v3890, %v3886
    %v3991 = vpack.c.b16 %v3891, %v3887
    %v3992 = vpack.c.b16 %v3892, %v3888
    %v3993 = vpack.c.b16 %v3897, %v3893
    %v3994 = vpack.c.b16 %v3898, %v3894
    %v3995 = vpack.c.b16 %v3899, %v3895
    %v3996 = vpack.c.b16 %v3900, %v3896
    %v3997 = vpack.c.b16 %v3905, %v3901
    %v3998 = vpack.c.b16 %v3906, %v3902
    %v3999 = vpack.c.b16 %v3907, %v3903
    %v4000 = vpack.c.b16 %v3908, %v3904
    %v4001 = vpack.c.b16 %v3913, %v3909
    %v4002 = vpack.c.b16 %v3914, %v3910
    %v4003 = vpack.c.b16 %v3915, %v3911
    %v4004 = vpack.c.b16 %v3916, %v3912
    %v4005 = vpack.c.b16 %v3921, %v3917
    %v4006 = vpack.c.b16 %v3922, %v3918
    %v4007 = vpack.c.b16 %v3923, %v3919
    %v4008 = vpack.c.b16 %v3924, %v3920
    %v4009 = vpack.c.b16 %v3929, %v3925
    %v4010 = vpack.c.b16 %v3930, %v3926
    %v4011 = vpack.c.b16 %v3931, %v3927
    %v4012 = vpack.c.b16 %v3932, %v3928
    %v4013 = vpack.c.b16 %v3937, %v3933
    %v4014 = vpack.c.b16 %v3938, %v3934
    %v4015 = vpack.c.b16 %v3939, %v3935
    %v4016 = vpack.c.b16 %v3940, %v3936
    %v4017 = vpack.c.b16 %v3945, %v3941
    %v4018 = vpack.c.b16 %v3946, %v3942
    %v4019 = vpack.c.b16 %v3947, %v3943
    %v4020 = vpack.c.b16 %v3948, %v3944
    %v4021 = vpack.c.b16 %v3953, %v3949
    %v4022 = vpack.c.b16 %v3954, %v3950
    %v4023 = vpack.c.b16 %v3955, %v3951
    %v4024 = vpack.c.b16 %v3956, %v3952
    %v4025 = vpack.c.b16 %v3961, %v3957
    %v4026 = vpack.c.b16 %v3962, %v3958
    %v4027 = vpack.c.b16 %v3963, %v3959
    %v4028 = vpack.c.b16 %v3964, %v3960
    %4093 = vmatprep.subr.bf16.mxu0 %v3966
    %4094 = vmatpush1.bf16.msra.mxu0 %v3965
    %4095 = vmatprep.subr.bf16.mxu0 %v3970
    %4096 = vmatpush1.bf16.msra.mxu0 %v3969
    %4097 = vmatprep.subr.bf16.mxu0 %v3974
    %4098 = vmatpush1.bf16.msra.mxu0 %v3973
    %4099 = vmatprep.subr.bf16.mxu0 %v3978
    %4100 = vmatpush1.bf16.msra.mxu0 %v3977
    %4101 = vmatprep.subr.bf16.mxu0 %v3982
    %4102 = vmatpush1.bf16.msra.mxu0 %v3981
    %4103 = vmatprep.subr.bf16.mxu0 %v3986
    %4104 = vmatpush1.bf16.msra.mxu0 %v3985
    %4105 = vmatprep.subr.bf16.mxu0 %v3990
    %4106 = vmatpush1.bf16.msra.mxu0 %v3989
    %4107 = vmatprep.subr.bf16.mxu0 %v3994
    %4108 = vmatpush1.bf16.msra.mxu0 %v3993
    %4109 = vmatprep.subr.bf16.mxu0 %v3998
    %4110 = vmatpush1.bf16.msra.mxu0 %v3997
    %4111 = vmatprep.subr.bf16.mxu0 %v4002
    %4112 = vmatpush1.bf16.msra.mxu0 %v4001
    %4113 = vmatprep.subr.bf16.mxu0 %v4006
    %4114 = vmatpush1.bf16.msra.mxu0 %v4005
    %4115 = vmatprep.subr.bf16.mxu0 %v4010
    %4116 = vmatpush1.bf16.msra.mxu0 %v4009
    %4117 = vmatprep.subr.bf16.mxu0 %v4014
    %4118 = vmatpush1.bf16.msra.mxu0 %v4013
    %4119 = vmatprep.subr.bf16.mxu0 %v4018
    %4120 = vmatpush1.bf16.msra.mxu0 %v4017
    %4121 = vmatprep.subr.bf16.mxu0 %v4022
    %4122 = vmatpush1.bf16.msra.mxu0 %v4021
    %4123 = vmatprep.subr.bf16.mxu0 %v4026
    %4124 = vmatpush1.bf16.msra.mxu0 %v4025
    %4125 = vmatprep.mubr.bf16.mxu0 %v3708
    %4126 = vmatmul.mubr.bf16.gmra.mrb[0].mxu0 %v3707
    %v4127 = vpop.f32.mrb[0].mxu0
    %v4128 = vadd.f32 0.0, %v4127
    %v4129 = vpop.f32.mrb[0].mxu0
    %v4130 = vadd.f32 0.0, %v4129
    %v4131 = vpop.f32.mrb[0].mxu0
    %v4132 = vpop.f32.mrb[0].mxu0
    %4133 = vdwg.mxu0
    %4134 = vmatprep.subr.bf16.mxu0 %v3968
    %4135 = vmatpush1.bf16.msra.mxu0 %v3967
    %4136 = vmatprep.subr.bf16.mxu0 %v3972
    %4137 = vmatpush1.bf16.msra.mxu0 %v3971
    %4138 = vmatprep.subr.bf16.mxu0 %v3976
    %4139 = vmatpush1.bf16.msra.mxu0 %v3975
    %4140 = vmatprep.subr.bf16.mxu0 %v3980
    %4141 = vmatpush1.bf16.msra.mxu0 %v3979
    %4142 = vmatprep.subr.bf16.mxu0 %v3984
    %4143 = vmatpush1.bf16.msra.mxu0 %v3983
    %4144 = vmatprep.subr.bf16.mxu0 %v3988
    %4145 = vmatpush1.bf16.msra.mxu0 %v3987
    %4146 = vmatprep.subr.bf16.mxu0 %v3992
    %4147 = vmatpush1.bf16.msra.mxu0 %v3991
    %4148 = vmatprep.subr.bf16.mxu0 %v3996
    %4149 = vmatpush1.bf16.msra.mxu0 %v3995
    %4150 = vmatprep.subr.bf16.mxu0 %v4000
    %4151 = vmatpush1.bf16.msra.mxu0 %v3999
    %4152 = vmatprep.subr.bf16.mxu0 %v4004
    %4153 = vmatpush1.bf16.msra.mxu0 %v4003
    %4154 = vmatprep.subr.bf16.mxu0 %v4008
    %4155 = vmatpush1.bf16.msra.mxu0 %v4007
    %4156 = vmatprep.subr.bf16.mxu0 %v4012
    %4157 = vmatpush1.bf16.msra.mxu0 %v4011
    %4158 = vmatprep.subr.bf16.mxu0 %v4016
    %4159 = vmatpush1.bf16.msra.mxu0 %v4015
    %4160 = vmatprep.subr.bf16.mxu0 %v4020
    %4161 = vmatpush1.bf16.msra.mxu0 %v4019
    %4162 = vmatprep.subr.bf16.mxu0 %v4024
    %4163 = vmatpush1.bf16.msra.mxu0 %v4023
    %4164 = vmatprep.subr.bf16.mxu0 %v4028
    %4165 = vmatpush1.bf16.msra.mxu0 %v4027
    %4166 = vmatprep.mubr.bf16.mxu0 %v3708
    %4167 = vmatmul.mubr.bf16.gmra.mrb[0].mxu0 %v3707
    %v4168 = vpop.f32.mrb[0].mxu0
    %v4169 = vadd.f32 0.0, %v4168
    %v4170 = vpop.f32.mrb[0].mxu0
    %v4171 = vadd.f32 0.0, %v4170
    %v4172 = vpop.f32.mrb[0].mxu0
    %v4173 = vpop.f32.mrb[0].mxu0
    %4174 = vdwg.mxu0
    %v4175 = vld [vmem:[%s63] sm:$0xf]
    %v4176 = vld [vmem:[#allocation35] sm:$0xf]
    %v4177 = vrot.slane %v4128, 4
    %v4178 = vadd.f32 %v4128, %v4177
    %v4179 = vrot.slane %v4178, 2
    %v4180 = vadd.f32 %v4178, %v4179
    %v4181 = vrot.slane %v4180, 1
    %v4182 = vadd.f32 %v4180, %v4181
    %v4183 = vrot.slane %v4130, 4
    %v4184 = vadd.f32 %v4130, %v4183
    %v4185 = vrot.slane %v4184, 2
    %v4186 = vadd.f32 %v4184, %v4185
    %v4187 = vrot.slane %v4186, 1
    %v4188 = vadd.f32 %v4186, %v4187
    %v4189 = vrot.slane %v4169, 4
    %v4190 = vadd.f32 %v4169, %v4189
    %v4191 = vrot.slane %v4190, 2
    %v4192 = vadd.f32 %v4190, %v4191
    %v4193 = vrot.slane %v4192, 1
    %v4194 = vadd.f32 %v4192, %v4193
    %v4195 = vrot.slane %v4171, 4
    %v4196 = vadd.f32 %v4171, %v4195
    %v4197 = vrot.slane %v4196, 2
    %v4198 = vadd.f32 %v4196, %v4197
    %v4199 = vrot.slane %v4198, 1
    %v4200 = vadd.f32 %v4198, %v4199
    %v4201 = vmul.f32 %v4182, %v1986
    %v4202 = vmul.f32 %v4188, %v1986
    %v4203 = vmul.f32 %v4194, %v1986
    %v4204 = vmul.f32 %v4200, %v1986
    %v4205 = vsub.f32 %v4128, %v4201
    %v4206 = vsub.f32 %v4130, %v4202
    %v4207 = vsub.f32 %v4169, %v4203
    %v4208 = vsub.f32 %v4171, %v4204
    %v4209 = vmul.f32 %v4205, %v4205
    %v4210 = vmul.f32 %v4206, %v4206
    %v4211 = vmul.f32 %v4207, %v4207
    %v4212 = vmul.f32 %v4208, %v4208
    %v4213 = vrot.slane %v4209, 4
    %v4214 = vadd.f32 %v4209, %v4213
    %v4215 = vrot.slane %v4214, 2
    %v4216 = vadd.f32 %v4214, %v4215
    %v4217 = vrot.slane %v4216, 1
    %v4218 = vadd.f32 %v4216, %v4217
    %v4219 = vrot.slane %v4210, 4
    %v4220 = vadd.f32 %v4210, %v4219
    %v4221 = vrot.slane %v4220, 2
    %v4222 = vadd.f32 %v4220, %v4221
    %v4223 = vrot.slane %v4222, 1
    %v4224 = vadd.f32 %v4222, %v4223
    %v4225 = vrot.slane %v4211, 4
    %v4226 = vadd.f32 %v4211, %v4225
    %v4227 = vrot.slane %v4226, 2
    %v4228 = vadd.f32 %v4226, %v4227
    %v4229 = vrot.slane %v4228, 1
    %v4230 = vadd.f32 %v4228, %v4229
    %v4231 = vrot.slane %v4212, 4
    %v4232 = vadd.f32 %v4212, %v4231
    %v4233 = vrot.slane %v4232, 2
    %v4234 = vadd.f32 %v4232, %v4233
    %v4235 = vrot.slane %v4234, 1
    %v4236 = vadd.f32 %v4234, %v4235
    %v4237 = vmul.f32 %v4218, %v1986
    %v4238 = vmul.f32 %v4224, %v1986
    %v4239 = vmul.f32 %v4230, %v1986
    %v4240 = vmul.f32 %v4236, %v1986
    %v4241 = vadd.f32 %v4237, 1e-05
    %v4242 = vadd.f32 %v4238, 1e-05
    %v4243 = vadd.f32 %v4239, 1e-05
    %v4244 = vadd.f32 %v4240, 1e-05
    %v4245 = vrsqrt.pop %v4241
    %v4246 = vrsqrt.pop %v4242
    %v4247 = vrsqrt.pop %v4243
    %v4248 = vrsqrt.pop %v4244
    %v4249 = vmul.f32 %v4205, %v4245
    %v4250 = vmul.f32 %v4206, %v4246
    %v4251 = vmul.f32 %v4207, %v4247
    %v4252 = vmul.f32 %v4208, %v4248
    %v4254 = vlaneseq
    %v4255 = vshrl.u32 %v4254, 7
    %v4256 = vsub.s32 0, %v4255
    %v4257 = vrot.slane %v4175, %v4256
    %v4258 = vlaneseq
    %v4259 = vshrl.u32 %v4258, 7
    %v4260 = vsub.s32 1, %v4259
    %v4261 = vrot.slane %v4175, %v4260
    %v4262 = vlaneseq
    %v4263 = vshrl.u32 %v4262, 7
    %v4264 = vsub.s32 2, %v4263
    %v4265 = vrot.slane %v4175, %v4264
    %v4266 = vlaneseq
    %v4267 = vshrl.u32 %v4266, 7
    %v4268 = vsub.s32 3, %v4267
    %v4269 = vrot.slane %v4175, %v4268
    %v4274 = vmul.f32 %v4249, %v4257
    %v4275 = vmul.f32 %v4250, %v4261
    %v4276 = vmul.f32 %v4251, %v4265
    %v4277 = vmul.f32 %v4252, %v4269
    %v4279 = vlaneseq
    %v4280 = vshrl.u32 %v4279, 7
    %v4281 = vsub.s32 0, %v4280
    %v4282 = vrot.slane %v4176, %v4281
    %v4283 = vlaneseq
    %v4284 = vshrl.u32 %v4283, 7
    %v4285 = vsub.s32 1, %v4284
    %v4286 = vrot.slane %v4176, %v4285
    %v4287 = vlaneseq
    %v4288 = vshrl.u32 %v4287, 7
    %v4289 = vsub.s32 2, %v4288
    %v4290 = vrot.slane %v4176, %v4289
    %v4291 = vlaneseq
    %v4292 = vshrl.u32 %v4291, 7
    %v4293 = vsub.s32 3, %v4292
    %v4294 = vrot.slane %v4176, %v4293
    %v4299 = vadd.f32 %v4274, %v4282
    %v4300 = vadd.f32 %v4275, %v4286
    %v4301 = vadd.f32 %v4276, %v4290
    %v4302 = vadd.f32 %v4277, %v4294
    %v4303 = vmax.f32 %v4299, 0.0
    %v4304 = vmax.f32 %v4300, 0.0
    %v4305 = vmax.f32 %v4301, 0.0
    %v4306 = vmax.f32 %v4302, 0.0
    %v4307 = vpack.c.bf16 %v4303, %v4303
    %v4308 = vpack.c.bf16 %v4304, %v4304
    %v4309 = vpack.c.bf16 %v4305, %v4305
    %v4310 = vpack.c.bf16 %v4306, %v4306
    %v4311 = vld [vmem:[#allocation37] sm:$0xff]
    %v4312 = vld [vmem:[#allocation37 + $0x8] sm:$0xff]
    %v4313 = vld [vmem:[#allocation37 + $0x10] sm:$0xff]
    %v4314 = vld [vmem:[#allocation37 + $0x18] sm:$0xf]
    %v4315 = vld [vmem:[#allocation37 + $0x1c] sm:$0xff]
    %v4316 = vld [vmem:[#allocation37 + $0x24] sm:$0xff]
    %v4317 = vld [vmem:[#allocation37 + $0x2c] sm:$0xff]
    %v4318 = vld [vmem:[#allocation37 + $0x34] sm:$0xf]
    %v4319 = vld [vmem:[#allocation37 + $0x38] sm:$0xff]
    %v4320 = vld [vmem:[#allocation37 + $0x40] sm:$0xff]
    %v4321 = vld [vmem:[#allocation37 + $0x48] sm:$0xff]
    %v4322 = vld [vmem:[#allocation37 + $0x50] sm:$0xf]
    %v4323 = vld [vmem:[#allocation37 + $0x54] sm:$0xff]
    %v4324 = vld [vmem:[#allocation37 + $0x5c] sm:$0xff]
    %v4325 = vld [vmem:[#allocation37 + $0x64] sm:$0xff]
    %v4326 = vld [vmem:[#allocation37 + $0x6c] sm:$0xf]
    %v4327 = vld [vmem:[#allocation37 + $0x70] sm:$0xff]
    %v4328 = vld [vmem:[#allocation37 + $0x78] sm:$0xff]
    %v4329 = vld [vmem:[#allocation37 + $0x80] sm:$0xff]
    %v4330 = vld [vmem:[#allocation37 + $0x88] sm:$0xf]
    %v4331 = vld [vmem:[#allocation37 + $0x8c] sm:$0xff]
    %v4332 = vld [vmem:[#allocation37 + $0x94] sm:$0xff]
    %v4333 = vld [vmem:[#allocation37 + $0x9c] sm:$0xff]
    %v4334 = vld [vmem:[#allocation37 + $0xa4] sm:$0xf]
    %v4335 = vld [vmem:[#allocation37 + $0xa8] sm:$0xff]
    %v4336 = vld [vmem:[#allocation37 + $0xb0] sm:$0xff]
    %v4337 = vld [vmem:[#allocation37 + $0xb8] sm:$0xff]
    %v4338 = vld [vmem:[#allocation37 + $0xc0] sm:$0xf]
    %v4339 = vld [vmem:[#allocation37 + $0xc4] sm:$0xff]
    %v4340 = vld [vmem:[#allocation37 + $0xcc] sm:$0xff]
    %v4341 = vld [vmem:[#allocation37 + $0xd4] sm:$0xff]
    %v4342 = vld [vmem:[#allocation37 + $0xdc] sm:$0xf]
    %v4343 = vld [vmem:[#allocation37 + $0xe0] sm:$0xff]
    %v4344 = vld [vmem:[#allocation37 + $0xe8] sm:$0xff]
    %v4345 = vld [vmem:[#allocation37 + $0xf0] sm:$0xff]
    %v4346 = vld [vmem:[#allocation37 + $0xf8] sm:$0xf]
    %v4347 = vld [vmem:[#allocation37 + $0xfc] sm:$0xff]
    %v4348 = vld [vmem:[#allocation37 + $0x104] sm:$0xff]
    %v4349 = vld [vmem:[#allocation37 + $0x10c] sm:$0xff]
    %v4350 = vld [vmem:[#allocation37 + $0x114] sm:$0xf]
    %v4351 = vld [vmem:[#allocation37 + $0x118] sm:$0xff]
    %v4352 = vld [vmem:[#allocation37 + $0x120] sm:$0xff]
    %v4353 = vld [vmem:[#allocation37 + $0x128] sm:$0xff]
    %v4354 = vld [vmem:[#allocation37 + $0x130] sm:$0xf]
    %v4355 = vld [vmem:[#allocation37 + $0x134] sm:$0xff]
    %v4356 = vld [vmem:[#allocation37 + $0x13c] sm:$0xff]
    %v4357 = vld [vmem:[#allocation37 + $0x144] sm:$0xff]
    %v4358 = vld [vmem:[#allocation37 + $0x14c] sm:$0xf]
    %v4359 = vld [vmem:[#allocation37 + $0x150] sm:$0xff]
    %v4360 = vld [vmem:[#allocation37 + $0x158] sm:$0xff]
    %v4361 = vld [vmem:[#allocation37 + $0x160] sm:$0xff]
    %v4362 = vld [vmem:[#allocation37 + $0x168] sm:$0xf]
    %v4363 = vld [vmem:[#allocation37 + $0x16c] sm:$0xff]
    %v4364 = vld [vmem:[#allocation37 + $0x174] sm:$0xff]
    %v4365 = vld [vmem:[#allocation37 + $0x17c] sm:$0xff]
    %v4366 = vld [vmem:[#allocation37 + $0x184] sm:$0xf]
    %v4367 = vld [vmem:[#allocation37 + $0x188] sm:$0xff]
    %v4368 = vld [vmem:[#allocation37 + $0x190] sm:$0xff]
    %v4369 = vld [vmem:[#allocation37 + $0x198] sm:$0xff]
    %v4370 = vld [vmem:[#allocation37 + $0x1a0] sm:$0xf]
    %v4371 = vld [vmem:[#allocation37 + $0x1a4] sm:$0xff]
    %v4372 = vld [vmem:[#allocation37 + $0x1ac] sm:$0xff]
    %v4373 = vld [vmem:[#allocation37 + $0x1b4] sm:$0xff]
    %v4374 = vld [vmem:[#allocation37 + $0x1bc] sm:$0xf]
    %v4375 = vld [vmem:[#allocation37 + $0x1c0] sm:$0xff]
    %v4376 = vld [vmem:[#allocation37 + $0x1c8] sm:$0xff]
    %v4377 = vld [vmem:[#allocation37 + $0x1d0] sm:$0xff]
    %v4378 = vld [vmem:[#allocation37 + $0x1d8] sm:$0xf]
    %v4379 = vld [vmem:[#allocation37 + $0x1dc] sm:$0xff]
    %v4380 = vld [vmem:[#allocation37 + $0x1e4] sm:$0xff]
    %v4381 = vld [vmem:[#allocation37 + $0x1ec] sm:$0xff]
    %v4382 = vld [vmem:[#allocation37 + $0x1f4] sm:$0xf]
    %v4383 = vld [vmem:[#allocation37 + $0x1f8] sm:$0xff]
    %v4384 = vld [vmem:[#allocation37 + $0x200] sm:$0xff]
    %v4385 = vld [vmem:[#allocation37 + $0x208] sm:$0xff]
    %v4386 = vld [vmem:[#allocation37 + $0x210] sm:$0xf]
    %v4387 = vld [vmem:[#allocation37 + $0x214] sm:$0xff]
    %v4388 = vld [vmem:[#allocation37 + $0x21c] sm:$0xff]
    %v4389 = vld [vmem:[#allocation37 + $0x224] sm:$0xff]
    %v4390 = vld [vmem:[#allocation37 + $0x22c] sm:$0xf]
    %v4391 = vld [vmem:[#allocation37 + $0x230] sm:$0xff]
    %v4392 = vld [vmem:[#allocation37 + $0x238] sm:$0xff]
    %v4393 = vld [vmem:[#allocation37 + $0x240] sm:$0xff]
    %v4394 = vld [vmem:[#allocation37 + $0x248] sm:$0xf]
    %v4395 = vld [vmem:[#allocation37 + $0x24c] sm:$0xff]
    %v4396 = vld [vmem:[#allocation37 + $0x254] sm:$0xff]
    %v4397 = vld [vmem:[#allocation37 + $0x25c] sm:$0xff]
    %v4398 = vld [vmem:[#allocation37 + $0x264] sm:$0xf]
    %v4399 = vld [vmem:[#allocation37 + $0x268] sm:$0xff]
    %v4400 = vld [vmem:[#allocation37 + $0x270] sm:$0xff]
    %v4401 = vld [vmem:[#allocation37 + $0x278] sm:$0xff]
    %v4402 = vld [vmem:[#allocation37 + $0x280] sm:$0xf]
    %v4403 = vld [vmem:[#allocation37 + $0x284] sm:$0xff]
    %v4404 = vld [vmem:[#allocation37 + $0x28c] sm:$0xff]
    %v4405 = vld [vmem:[#allocation37 + $0x294] sm:$0xff]
    %v4406 = vld [vmem:[#allocation37 + $0x29c] sm:$0xf]
    %v4407 = vld [vmem:[#allocation37 + $0x2a0] sm:$0xff]
    %v4408 = vld [vmem:[#allocation37 + $0x2a8] sm:$0xff]
    %v4409 = vld [vmem:[#allocation37 + $0x2b0] sm:$0xff]
    %v4410 = vld [vmem:[#allocation37 + $0x2b8] sm:$0xf]
    %v4411 = vld [vmem:[#allocation37 + $0x2bc] sm:$0xff]
    %v4412 = vld [vmem:[#allocation37 + $0x2c4] sm:$0xff]
    %v4413 = vld [vmem:[#allocation37 + $0x2cc] sm:$0xff]
    %v4414 = vld [vmem:[#allocation37 + $0x2d4] sm:$0xf]
    %v4415 = vld [vmem:[#allocation37 + $0x2d8] sm:$0xff]
    %v4416 = vld [vmem:[#allocation37 + $0x2e0] sm:$0xff]
    %v4417 = vld [vmem:[#allocation37 + $0x2e8] sm:$0xff]
    %v4418 = vld [vmem:[#allocation37 + $0x2f0] sm:$0xf]
    %v4419 = vld [vmem:[#allocation37 + $0x2f4] sm:$0xff]
    %v4420 = vld [vmem:[#allocation37 + $0x2fc] sm:$0xff]
    %v4421 = vld [vmem:[#allocation37 + $0x304] sm:$0xff]
    %v4422 = vld [vmem:[#allocation37 + $0x30c] sm:$0xf]
    %v4423 = vld [vmem:[#allocation37 + $0x310] sm:$0xff]
    %v4424 = vld [vmem:[#allocation37 + $0x318] sm:$0xff]
    %v4425 = vld [vmem:[#allocation37 + $0x320] sm:$0xff]
    %v4426 = vld [vmem:[#allocation37 + $0x328] sm:$0xf]
    %v4427 = vld [vmem:[#allocation37 + $0x32c] sm:$0xff]
    %v4428 = vld [vmem:[#allocation37 + $0x334] sm:$0xff]
    %v4429 = vld [vmem:[#allocation37 + $0x33c] sm:$0xff]
    %v4430 = vld [vmem:[#allocation37 + $0x344] sm:$0xf]
    %v4431 = vld [vmem:[#allocation37 + $0x348] sm:$0xff]
    %v4432 = vld [vmem:[#allocation37 + $0x350] sm:$0xff]
    %v4433 = vld [vmem:[#allocation37 + $0x358] sm:$0xff]
    %v4434 = vld [vmem:[#allocation37 + $0x360] sm:$0xf]
    %v4435 = vld [vmem:[#allocation37 + $0x364] sm:$0xff]
    %v4436 = vld [vmem:[#allocation37 + $0x36c] sm:$0xff]
    %v4437 = vld [vmem:[#allocation37 + $0x374] sm:$0xff]
    %v4438 = vld [vmem:[#allocation37 + $0x37c] sm:$0xf]
    %v4439 = vld [vmem:[#allocation37 + $0x380] sm:$0xff]
    %v4440 = vld [vmem:[#allocation37 + $0x388] sm:$0xff]
    %v4441 = vld [vmem:[#allocation37 + $0x390] sm:$0xff]
    %v4442 = vld [vmem:[#allocation37 + $0x398] sm:$0xf]
    %v4443 = vld [vmem:[#allocation37 + $0x39c] sm:$0xff]
    %v4444 = vld [vmem:[#allocation37 + $0x3a4] sm:$0xff]
    %v4445 = vld [vmem:[#allocation37 + $0x3ac] sm:$0xff]
    %v4446 = vld [vmem:[#allocation37 + $0x3b4] sm:$0xf]
    %v4447 = vld [vmem:[#allocation37 + $0x3b8] sm:$0xff]
    %v4448 = vld [vmem:[#allocation37 + $0x3c0] sm:$0xff]
    %v4449 = vld [vmem:[#allocation37 + $0x3c8] sm:$0xff]
    %v4450 = vld [vmem:[#allocation37 + $0x3d0] sm:$0xf]
    %v4451 = vld [vmem:[#allocation37 + $0x3d4] sm:$0xff]
    %v4452 = vld [vmem:[#allocation37 + $0x3dc] sm:$0xff]
    %v4453 = vld [vmem:[#allocation37 + $0x3e4] sm:$0xff]
    %v4454 = vld [vmem:[#allocation37 + $0x3ec] sm:$0xf]
    %v4455 = vld [vmem:[#allocation37 + $0x3f0] sm:$0xff]
    %v4456 = vld [vmem:[#allocation37 + $0x3f8] sm:$0xff]
    %v4457 = vld [vmem:[#allocation37 + $0x400] sm:$0xff]
    %v4458 = vld [vmem:[#allocation37 + $0x408] sm:$0xf]
    %v4459 = vld [vmem:[#allocation37 + $0x40c] sm:$0xff]
    %v4460 = vld [vmem:[#allocation37 + $0x414] sm:$0xff]
    %v4461 = vld [vmem:[#allocation37 + $0x41c] sm:$0xff]
    %v4462 = vld [vmem:[#allocation37 + $0x424] sm:$0xf]
    %v4463 = vld [vmem:[#allocation37 + $0x428] sm:$0xff]
    %v4464 = vld [vmem:[#allocation37 + $0x430] sm:$0xff]
    %v4465 = vld [vmem:[#allocation37 + $0x438] sm:$0xff]
    %v4466 = vld [vmem:[#allocation37 + $0x440] sm:$0xf]
    %v4467 = vld [vmem:[#allocation37 + $0x444] sm:$0xff]
    %v4468 = vld [vmem:[#allocation37 + $0x44c] sm:$0xff]
    %v4469 = vld [vmem:[#allocation37 + $0x454] sm:$0xff]
    %v4470 = vld [vmem:[#allocation37 + $0x45c] sm:$0xf]
    %v4471 = vld [vmem:[#allocation37 + $0x460] sm:$0xff]
    %v4472 = vld [vmem:[#allocation37 + $0x468] sm:$0xff]
    %v4473 = vld [vmem:[#allocation37 + $0x470] sm:$0xff]
    %v4474 = vld [vmem:[#allocation37 + $0x478] sm:$0xf]
    %v4475 = vld [vmem:[#allocation37 + $0x47c] sm:$0xff]
    %v4476 = vld [vmem:[#allocation37 + $0x484] sm:$0xff]
    %v4477 = vld [vmem:[#allocation37 + $0x48c] sm:$0xff]
    %v4478 = vld [vmem:[#allocation37 + $0x494] sm:$0xf]
    %v4479 = vld [vmem:[#allocation37 + $0x498] sm:$0xff]
    %v4480 = vld [vmem:[#allocation37 + $0x4a0] sm:$0xff]
    %v4481 = vld [vmem:[#allocation37 + $0x4a8] sm:$0xff]
    %v4482 = vld [vmem:[#allocation37 + $0x4b0] sm:$0xf]
    %v4483 = vld [vmem:[#allocation37 + $0x4b4] sm:$0xff]
    %v4484 = vld [vmem:[#allocation37 + $0x4bc] sm:$0xff]
    %v4485 = vld [vmem:[#allocation37 + $0x4c4] sm:$0xff]
    %v4486 = vld [vmem:[#allocation37 + $0x4cc] sm:$0xf]
    %v4487 = vld [vmem:[#allocation37 + $0x4d0] sm:$0xff]
    %v4488 = vld [vmem:[#allocation37 + $0x4d8] sm:$0xff]
    %v4489 = vld [vmem:[#allocation37 + $0x4e0] sm:$0xff]
    %v4490 = vld [vmem:[#allocation37 + $0x4e8] sm:$0xf]
    %v4491 = vld [vmem:[#allocation37 + $0x4ec] sm:$0xff]
    %v4492 = vld [vmem:[#allocation37 + $0x4f4] sm:$0xff]
    %v4493 = vld [vmem:[#allocation37 + $0x4fc] sm:$0xff]
    %v4494 = vld [vmem:[#allocation37 + $0x504] sm:$0xf]
    %v4495 = vld [vmem:[#allocation37 + $0x508] sm:$0xff]
    %v4496 = vld [vmem:[#allocation37 + $0x510] sm:$0xff]
    %v4497 = vld [vmem:[#allocation37 + $0x518] sm:$0xff]
    %v4498 = vld [vmem:[#allocation37 + $0x520] sm:$0xf]
    %v4499 = vld [vmem:[#allocation37 + $0x524] sm:$0xff]
    %v4500 = vld [vmem:[#allocation37 + $0x52c] sm:$0xff]
    %v4501 = vld [vmem:[#allocation37 + $0x534] sm:$0xff]
    %v4502 = vld [vmem:[#allocation37 + $0x53c] sm:$0xf]
    %v4503 = vld [vmem:[#allocation37 + $0x540] sm:$0xff]
    %v4504 = vld [vmem:[#allocation37 + $0x548] sm:$0xff]
    %v4505 = vld [vmem:[#allocation37 + $0x550] sm:$0xff]
    %v4506 = vld [vmem:[#allocation37 + $0x558] sm:$0xf]
    %v4507 = vld [vmem:[#allocation37 + $0x55c] sm:$0xff]
    %v4508 = vld [vmem:[#allocation37 + $0x564] sm:$0xff]
    %v4509 = vld [vmem:[#allocation37 + $0x56c] sm:$0xff]
    %v4510 = vld [vmem:[#allocation37 + $0x574] sm:$0xf]
    %v4511 = vld [vmem:[#allocation37 + $0x578] sm:$0xff]
    %v4512 = vld [vmem:[#allocation37 + $0x580] sm:$0xff]
    %v4513 = vld [vmem:[#allocation37 + $0x588] sm:$0xff]
    %v4514 = vld [vmem:[#allocation37 + $0x590] sm:$0xf]
    %v4515 = vld [vmem:[#allocation37 + $0x594] sm:$0xff]
    %v4516 = vld [vmem:[#allocation37 + $0x59c] sm:$0xff]
    %v4517 = vld [vmem:[#allocation37 + $0x5a4] sm:$0xff]
    %v4518 = vld [vmem:[#allocation37 + $0x5ac] sm:$0xf]
    %v4519 = vld [vmem:[#allocation37 + $0x5b0] sm:$0xff]
    %v4520 = vld [vmem:[#allocation37 + $0x5b8] sm:$0xff]
    %v4521 = vld [vmem:[#allocation37 + $0x5c0] sm:$0xff]
    %v4522 = vld [vmem:[#allocation37 + $0x5c8] sm:$0xf]
    %v4523 = vld [vmem:[#allocation37 + $0x5cc] sm:$0xff]
    %v4524 = vld [vmem:[#allocation37 + $0x5d4] sm:$0xff]
    %v4525 = vld [vmem:[#allocation37 + $0x5dc] sm:$0xff]
    %v4526 = vld [vmem:[#allocation37 + $0x5e4] sm:$0xf]
    %v4527 = vld [vmem:[#allocation37 + $0x5e8] sm:$0xff]
    %v4528 = vld [vmem:[#allocation37 + $0x5f0] sm:$0xff]
    %v4529 = vld [vmem:[#allocation37 + $0x5f8] sm:$0xff]
    %v4530 = vld [vmem:[#allocation37 + $0x600] sm:$0xf]
    %v4531 = vld [vmem:[#allocation37 + $0x604] sm:$0xff]
    %v4532 = vld [vmem:[#allocation37 + $0x60c] sm:$0xff]
    %v4533 = vld [vmem:[#allocation37 + $0x614] sm:$0xff]
    %v4534 = vld [vmem:[#allocation37 + $0x61c] sm:$0xf]
    %v4535 = vld [vmem:[#allocation37 + $0x620] sm:$0xff]
    %v4536 = vld [vmem:[#allocation37 + $0x628] sm:$0xff]
    %v4537 = vld [vmem:[#allocation37 + $0x630] sm:$0xff]
    %v4538 = vld [vmem:[#allocation37 + $0x638] sm:$0xf]
    %v4539 = vld [vmem:[#allocation37 + $0x63c] sm:$0xff]
    %v4540 = vld [vmem:[#allocation37 + $0x644] sm:$0xff]
    %v4541 = vld [vmem:[#allocation37 + $0x64c] sm:$0xff]
    %v4542 = vld [vmem:[#allocation37 + $0x654] sm:$0xf]
    %v4543 = vld [vmem:[#allocation37 + $0x658] sm:$0xff]
    %v4544 = vld [vmem:[#allocation37 + $0x660] sm:$0xff]
    %v4545 = vld [vmem:[#allocation37 + $0x668] sm:$0xff]
    %v4546 = vld [vmem:[#allocation37 + $0x670] sm:$0xf]
    %v4547 = vld [vmem:[#allocation37 + $0x674] sm:$0xff]
    %v4548 = vld [vmem:[#allocation37 + $0x67c] sm:$0xff]
    %v4549 = vld [vmem:[#allocation37 + $0x684] sm:$0xff]
    %v4550 = vld [vmem:[#allocation37 + $0x68c] sm:$0xf]
    %v4551 = vld [vmem:[#allocation37 + $0x690] sm:$0xff]
    %v4552 = vld [vmem:[#allocation37 + $0x698] sm:$0xff]
    %v4553 = vld [vmem:[#allocation37 + $0x6a0] sm:$0xff]
    %v4554 = vld [vmem:[#allocation37 + $0x6a8] sm:$0xf]
    %v4555 = vld [vmem:[#allocation37 + $0x6ac] sm:$0xff]
    %v4556 = vld [vmem:[#allocation37 + $0x6b4] sm:$0xff]
    %v4557 = vld [vmem:[#allocation37 + $0x6bc] sm:$0xff]
    %v4558 = vld [vmem:[#allocation37 + $0x6c4] sm:$0xf]
    %v4559 = vld [vmem:[#allocation37 + $0x6c8] sm:$0xff]
    %v4560 = vld [vmem:[#allocation37 + $0x6d0] sm:$0xff]
    %v4561 = vld [vmem:[#allocation37 + $0x6d8] sm:$0xff]
    %v4562 = vld [vmem:[#allocation37 + $0x6e0] sm:$0xf]
    %v4563 = vld [vmem:[#allocation37 + $0x6e4] sm:$0xff]
    %v4564 = vld [vmem:[#allocation37 + $0x6ec] sm:$0xff]
    %v4565 = vld [vmem:[#allocation37 + $0x6f4] sm:$0xff]
    %v4566 = vld [vmem:[#allocation37 + $0x6fc] sm:$0xf]
    %v4567 = vld [vmem:[%s69] sm:$0xff]
    %v4569 = vlaneseq
    %v4570 = vshrl.u32 %v4569, 7
    %v4571 = vsub.s32 0, %v4570
    %v4572 = vrot.slane %v4567, %v4571
    %v4573 = vlaneseq
    %v4574 = vshrl.u32 %v4573, 7
    %v4575 = vsub.s32 1, %v4574
    %v4576 = vrot.slane %v4567, %v4575
    %v4577 = vlaneseq
    %v4578 = vshrl.u32 %v4577, 7
    %v4579 = vsub.s32 2, %v4578
    %v4580 = vrot.slane %v4567, %v4579
    %v4581 = vlaneseq
    %v4582 = vshrl.u32 %v4581, 7
    %v4583 = vsub.s32 3, %v4582
    %v4584 = vrot.slane %v4567, %v4583
    %v4585 = vlaneseq
    %v4586 = vshrl.u32 %v4585, 7
    %v4587 = vsub.s32 4, %v4586
    %v4588 = vrot.slane %v4567, %v4587
    %v4589 = vlaneseq
    %v4590 = vshrl.u32 %v4589, 7
    %v4591 = vsub.s32 5, %v4590
    %v4592 = vrot.slane %v4567, %v4591
    %v4593 = vlaneseq
    %v4594 = vshrl.u32 %v4593, 7
    %v4595 = vsub.s32 6, %v4594
    %v4596 = vrot.slane %v4567, %v4595
    %v4860 = vunpack.c.l.b16 %v4311
    %v4861 = vunpack.c.h.b16 %v4311
    %v4862 = vunpack.c.l.b16 %v4312
    %v4863 = vunpack.c.h.b16 %v4312
    %v4864 = vunpack.c.l.b16 %v4313
    %v4865 = vunpack.c.h.b16 %v4313
    %v4866 = vunpack.c.l.b16 %v4314
    %v4867 = vunpack.c.l.b16 %v4315
    %v4868 = vunpack.c.h.b16 %v4315
    %v4869 = vunpack.c.l.b16 %v4316
    %v4870 = vunpack.c.h.b16 %v4316
    %v4871 = vunpack.c.l.b16 %v4317
    %v4872 = vunpack.c.h.b16 %v4317
    %v4873 = vunpack.c.l.b16 %v4318
    %v4874 = vunpack.c.l.b16 %v4319
    %v4875 = vunpack.c.h.b16 %v4319
    %v4876 = vunpack.c.l.b16 %v4320
    %v4877 = vunpack.c.h.b16 %v4320
    %v4878 = vunpack.c.l.b16 %v4321
    %v4879 = vunpack.c.h.b16 %v4321
    %v4880 = vunpack.c.l.b16 %v4322
    %v4881 = vunpack.c.l.b16 %v4323
    %v4882 = vunpack.c.h.b16 %v4323
    %v4883 = vunpack.c.l.b16 %v4324
    %v4884 = vunpack.c.h.b16 %v4324
    %v4885 = vunpack.c.l.b16 %v4325
    %v4886 = vunpack.c.h.b16 %v4325
    %v4887 = vunpack.c.l.b16 %v4326
    %v4888 = vunpack.c.l.b16 %v4327
    %v4889 = vunpack.c.h.b16 %v4327
    %v4890 = vunpack.c.l.b16 %v4328
    %v4891 = vunpack.c.h.b16 %v4328
    %v4892 = vunpack.c.l.b16 %v4329
    %v4893 = vunpack.c.h.b16 %v4329
    %v4894 = vunpack.c.l.b16 %v4330
    %v4895 = vunpack.c.l.b16 %v4331
    %v4896 = vunpack.c.h.b16 %v4331
    %v4897 = vunpack.c.l.b16 %v4332
    %v4898 = vunpack.c.h.b16 %v4332
    %v4899 = vunpack.c.l.b16 %v4333
    %v4900 = vunpack.c.h.b16 %v4333
    %v4901 = vunpack.c.l.b16 %v4334
    %v4902 = vunpack.c.l.b16 %v4335
    %v4903 = vunpack.c.h.b16 %v4335
    %v4904 = vunpack.c.l.b16 %v4336
    %v4905 = vunpack.c.h.b16 %v4336
    %v4906 = vunpack.c.l.b16 %v4337
    %v4907 = vunpack.c.h.b16 %v4337
    %v4908 = vunpack.c.l.b16 %v4338
    %v4909 = vunpack.c.l.b16 %v4339
    %v4910 = vunpack.c.h.b16 %v4339
    %v4911 = vunpack.c.l.b16 %v4340
    %v4912 = vunpack.c.h.b16 %v4340
    %v4913 = vunpack.c.l.b16 %v4341
    %v4914 = vunpack.c.h.b16 %v4341
    %v4915 = vunpack.c.l.b16 %v4342
    %v4916 = vunpack.c.l.b16 %v4343
    %v4917 = vunpack.c.h.b16 %v4343
    %v4918 = vunpack.c.l.b16 %v4344
    %v4919 = vunpack.c.h.b16 %v4344
    %v4920 = vunpack.c.l.b16 %v4345
    %v4921 = vunpack.c.h.b16 %v4345
    %v4922 = vunpack.c.l.b16 %v4346
    %v4923 = vunpack.c.l.b16 %v4347
    %v4924 = vunpack.c.h.b16 %v4347
    %v4925 = vunpack.c.l.b16 %v4348
    %v4926 = vunpack.c.h.b16 %v4348
    %v4927 = vunpack.c.l.b16 %v4349
    %v4928 = vunpack.c.h.b16 %v4349
    %v4929 = vunpack.c.l.b16 %v4350
    %v4930 = vunpack.c.l.b16 %v4351
    %v4931 = vunpack.c.h.b16 %v4351
    %v4932 = vunpack.c.l.b16 %v4352
    %v4933 = vunpack.c.h.b16 %v4352
    %v4934 = vunpack.c.l.b16 %v4353
    %v4935 = vunpack.c.h.b16 %v4353
    %v4936 = vunpack.c.l.b16 %v4354
    %v4937 = vunpack.c.l.b16 %v4355
    %v4938 = vunpack.c.h.b16 %v4355
    %v4939 = vunpack.c.l.b16 %v4356
    %v4940 = vunpack.c.h.b16 %v4356
    %v4941 = vunpack.c.l.b16 %v4357
    %v4942 = vunpack.c.h.b16 %v4357
    %v4943 = vunpack.c.l.b16 %v4358
    %v4944 = vunpack.c.l.b16 %v4359
    %v4945 = vunpack.c.h.b16 %v4359
    %v4946 = vunpack.c.l.b16 %v4360
    %v4947 = vunpack.c.h.b16 %v4360
    %v4948 = vunpack.c.l.b16 %v4361
    %v4949 = vunpack.c.h.b16 %v4361
    %v4950 = vunpack.c.l.b16 %v4362
    %v4951 = vunpack.c.l.b16 %v4363
    %v4952 = vunpack.c.h.b16 %v4363
    %v4953 = vunpack.c.l.b16 %v4364
    %v4954 = vunpack.c.h.b16 %v4364
    %v4955 = vunpack.c.l.b16 %v4365
    %v4956 = vunpack.c.h.b16 %v4365
    %v4957 = vunpack.c.l.b16 %v4366
    %v4958 = vunpack.c.l.b16 %v4367
    %v4959 = vunpack.c.h.b16 %v4367
    %v4960 = vunpack.c.l.b16 %v4368
    %v4961 = vunpack.c.h.b16 %v4368
    %v4962 = vunpack.c.l.b16 %v4369
    %v4963 = vunpack.c.h.b16 %v4369
    %v4964 = vunpack.c.l.b16 %v4370
    %v4965 = vunpack.c.l.b16 %v4371
    %v4966 = vunpack.c.h.b16 %v4371
    %v4967 = vunpack.c.l.b16 %v4372
    %v4968 = vunpack.c.h.b16 %v4372
    %v4969 = vunpack.c.l.b16 %v4373
    %v4970 = vunpack.c.h.b16 %v4373
    %v4971 = vunpack.c.l.b16 %v4374
    %v4972 = vunpack.c.l.b16 %v4375
    %v4973 = vunpack.c.h.b16 %v4375
    %v4974 = vunpack.c.l.b16 %v4376
    %v4975 = vunpack.c.h.b16 %v4376
    %v4976 = vunpack.c.l.b16 %v4377
    %v4977 = vunpack.c.h.b16 %v4377
    %v4978 = vunpack.c.l.b16 %v4378
    %v4979 = vunpack.c.l.b16 %v4379
    %v4980 = vunpack.c.h.b16 %v4379
    %v4981 = vunpack.c.l.b16 %v4380
    %v4982 = vunpack.c.h.b16 %v4380
    %v4983 = vunpack.c.l.b16 %v4381
    %v4984 = vunpack.c.h.b16 %v4381
    %v4985 = vunpack.c.l.b16 %v4382
    %v4986 = vunpack.c.l.b16 %v4383
    %v4987 = vunpack.c.h.b16 %v4383
    %v4988 = vunpack.c.l.b16 %v4384
    %v4989 = vunpack.c.h.b16 %v4384
    %v4990 = vunpack.c.l.b16 %v4385
    %v4991 = vunpack.c.h.b16 %v4385
    %v4992 = vunpack.c.l.b16 %v4386
    %v4993 = vunpack.c.l.b16 %v4387
    %v4994 = vunpack.c.h.b16 %v4387
    %v4995 = vunpack.c.l.b16 %v4388
    %v4996 = vunpack.c.h.b16 %v4388
    %v4997 = vunpack.c.l.b16 %v4389
    %v4998 = vunpack.c.h.b16 %v4389
    %v4999 = vunpack.c.l.b16 %v4390
    %v5000 = vunpack.c.l.b16 %v4391
    %v5001 = vunpack.c.h.b16 %v4391
    %v5002 = vunpack.c.l.b16 %v4392
    %v5003 = vunpack.c.h.b16 %v4392
    %v5004 = vunpack.c.l.b16 %v4393
    %v5005 = vunpack.c.h.b16 %v4393
    %v5006 = vunpack.c.l.b16 %v4394
    %v5007 = vunpack.c.l.b16 %v4395
    %v5008 = vunpack.c.h.b16 %v4395
    %v5009 = vunpack.c.l.b16 %v4396
    %v5010 = vunpack.c.h.b16 %v4396
    %v5011 = vunpack.c.l.b16 %v4397
    %v5012 = vunpack.c.h.b16 %v4397
    %v5013 = vunpack.c.l.b16 %v4398
    %v5014 = vunpack.c.l.b16 %v4399
    %v5015 = vunpack.c.h.b16 %v4399
    %v5016 = vunpack.c.l.b16 %v4400
    %v5017 = vunpack.c.h.b16 %v4400
    %v5018 = vunpack.c.l.b16 %v4401
    %v5019 = vunpack.c.h.b16 %v4401
    %v5020 = vunpack.c.l.b16 %v4402
    %v5021 = vunpack.c.l.b16 %v4403
    %v5022 = vunpack.c.h.b16 %v4403
    %v5023 = vunpack.c.l.b16 %v4404
    %v5024 = vunpack.c.h.b16 %v4404
    %v5025 = vunpack.c.l.b16 %v4405
    %v5026 = vunpack.c.h.b16 %v4405
    %v5027 = vunpack.c.l.b16 %v4406
    %v5028 = vunpack.c.l.b16 %v4407
    %v5029 = vunpack.c.h.b16 %v4407
    %v5030 = vunpack.c.l.b16 %v4408
    %v5031 = vunpack.c.h.b16 %v4408
    %v5032 = vunpack.c.l.b16 %v4409
    %v5033 = vunpack.c.h.b16 %v4409
    %v5034 = vunpack.c.l.b16 %v4410
    %v5035 = vunpack.c.l.b16 %v4411
    %v5036 = vunpack.c.h.b16 %v4411
    %v5037 = vunpack.c.l.b16 %v4412
    %v5038 = vunpack.c.h.b16 %v4412
    %v5039 = vunpack.c.l.b16 %v4413
    %v5040 = vunpack.c.h.b16 %v4413
    %v5041 = vunpack.c.l.b16 %v4414
    %v5042 = vunpack.c.l.b16 %v4415
    %v5043 = vunpack.c.h.b16 %v4415
    %v5044 = vunpack.c.l.b16 %v4416
    %v5045 = vunpack.c.h.b16 %v4416
    %v5046 = vunpack.c.l.b16 %v4417
    %v5047 = vunpack.c.h.b16 %v4417
    %v5048 = vunpack.c.l.b16 %v4418
    %v5049 = vunpack.c.l.b16 %v4419
    %v5050 = vunpack.c.h.b16 %v4419
    %v5051 = vunpack.c.l.b16 %v4420
    %v5052 = vunpack.c.h.b16 %v4420
    %v5053 = vunpack.c.l.b16 %v4421
    %v5054 = vunpack.c.h.b16 %v4421
    %v5055 = vunpack.c.l.b16 %v4422
    %v5056 = vunpack.c.l.b16 %v4423
    %v5057 = vunpack.c.h.b16 %v4423
    %v5058 = vunpack.c.l.b16 %v4424
    %v5059 = vunpack.c.h.b16 %v4424
    %v5060 = vunpack.c.l.b16 %v4425
    %v5061 = vunpack.c.h.b16 %v4425
    %v5062 = vunpack.c.l.b16 %v4426
    %v5063 = vunpack.c.l.b16 %v4427
    %v5064 = vunpack.c.h.b16 %v4427
    %v5065 = vunpack.c.l.b16 %v4428
    %v5066 = vunpack.c.h.b16 %v4428
    %v5067 = vunpack.c.l.b16 %v4429
    %v5068 = vunpack.c.h.b16 %v4429
    %v5069 = vunpack.c.l.b16 %v4430
    %v5070 = vunpack.c.l.b16 %v4431
    %v5071 = vunpack.c.h.b16 %v4431
    %v5072 = vunpack.c.l.b16 %v4432
    %v5073 = vunpack.c.h.b16 %v4432
    %v5074 = vunpack.c.l.b16 %v4433
    %v5075 = vunpack.c.h.b16 %v4433
    %v5076 = vunpack.c.l.b16 %v4434
    %v5077 = vunpack.c.l.b16 %v4435
    %v5078 = vunpack.c.h.b16 %v4435
    %v5079 = vunpack.c.l.b16 %v4436
    %v5080 = vunpack.c.h.b16 %v4436
    %v5081 = vunpack.c.l.b16 %v4437
    %v5082 = vunpack.c.h.b16 %v4437
    %v5083 = vunpack.c.l.b16 %v4438
    %v5084 = vunpack.c.l.b16 %v4439
    %v5085 = vunpack.c.h.b16 %v4439
    %v5086 = vunpack.c.l.b16 %v4440
    %v5087 = vunpack.c.h.b16 %v4440
    %v5088 = vunpack.c.l.b16 %v4441
    %v5089 = vunpack.c.h.b16 %v4441
    %v5090 = vunpack.c.l.b16 %v4442
    %v5091 = vunpack.c.l.b16 %v4443
    %v5092 = vunpack.c.h.b16 %v4443
    %v5093 = vunpack.c.l.b16 %v4444
    %v5094 = vunpack.c.h.b16 %v4444
    %v5095 = vunpack.c.l.b16 %v4445
    %v5096 = vunpack.c.h.b16 %v4445
    %v5097 = vunpack.c.l.b16 %v4446
    %v5098 = vunpack.c.l.b16 %v4447
    %v5099 = vunpack.c.h.b16 %v4447
    %v5100 = vunpack.c.l.b16 %v4448
    %v5101 = vunpack.c.h.b16 %v4448
    %v5102 = vunpack.c.l.b16 %v4449
    %v5103 = vunpack.c.h.b16 %v4449
    %v5104 = vunpack.c.l.b16 %v4450
    %v5105 = vunpack.c.l.b16 %v4451
    %v5106 = vunpack.c.h.b16 %v4451
    %v5107 = vunpack.c.l.b16 %v4452
    %v5108 = vunpack.c.h.b16 %v4452
    %v5109 = vunpack.c.l.b16 %v4453
    %v5110 = vunpack.c.h.b16 %v4453
    %v5111 = vunpack.c.l.b16 %v4454
    %v5112 = vunpack.c.l.b16 %v4455
    %v5113 = vunpack.c.h.b16 %v4455
    %v5114 = vunpack.c.l.b16 %v4456
    %v5115 = vunpack.c.h.b16 %v4456
    %v5116 = vunpack.c.l.b16 %v4457
    %v5117 = vunpack.c.h.b16 %v4457
    %v5118 = vunpack.c.l.b16 %v4458
    %v5119 = vunpack.c.l.b16 %v4459
    %v5120 = vunpack.c.h.b16 %v4459
    %v5121 = vunpack.c.l.b16 %v4460
    %v5122 = vunpack.c.h.b16 %v4460
    %v5123 = vunpack.c.l.b16 %v4461
    %v5124 = vunpack.c.h.b16 %v4461
    %v5125 = vunpack.c.l.b16 %v4462
    %v5126 = vunpack.c.l.b16 %v4463
    %v5127 = vunpack.c.h.b16 %v4463
    %v5128 = vunpack.c.l.b16 %v4464
    %v5129 = vunpack.c.h.b16 %v4464
    %v5130 = vunpack.c.l.b16 %v4465
    %v5131 = vunpack.c.h.b16 %v4465
    %v5132 = vunpack.c.l.b16 %v4466
    %v5133 = vunpack.c.l.b16 %v4467
    %v5134 = vunpack.c.h.b16 %v4467
    %v5135 = vunpack.c.l.b16 %v4468
    %v5136 = vunpack.c.h.b16 %v4468
    %v5137 = vunpack.c.l.b16 %v4469
    %v5138 = vunpack.c.h.b16 %v4469
    %v5139 = vunpack.c.l.b16 %v4470
    %v5140 = vunpack.c.l.b16 %v4471
    %v5141 = vunpack.c.h.b16 %v4471
    %v5142 = vunpack.c.l.b16 %v4472
    %v5143 = vunpack.c.h.b16 %v4472
    %v5144 = vunpack.c.l.b16 %v4473
    %v5145 = vunpack.c.h.b16 %v4473
    %v5146 = vunpack.c.l.b16 %v4474
    %v5147 = vunpack.c.l.b16 %v4475
    %v5148 = vunpack.c.h.b16 %v4475
    %v5149 = vunpack.c.l.b16 %v4476
    %v5150 = vunpack.c.h.b16 %v4476
    %v5151 = vunpack.c.l.b16 %v4477
    %v5152 = vunpack.c.h.b16 %v4477
    %v5153 = vunpack.c.l.b16 %v4478
    %v5154 = vunpack.c.l.b16 %v4479
    %v5155 = vunpack.c.h.b16 %v4479
    %v5156 = vunpack.c.l.b16 %v4480
    %v5157 = vunpack.c.h.b16 %v4480
    %v5158 = vunpack.c.l.b16 %v4481
    %v5159 = vunpack.c.h.b16 %v4481
    %v5160 = vunpack.c.l.b16 %v4482
    %v5161 = vunpack.c.l.b16 %v4483
    %v5162 = vunpack.c.h.b16 %v4483
    %v5163 = vunpack.c.l.b16 %v4484
    %v5164 = vunpack.c.h.b16 %v4484
    %v5165 = vunpack.c.l.b16 %v4485
    %v5166 = vunpack.c.h.b16 %v4485
    %v5167 = vunpack.c.l.b16 %v4486
    %v5168 = vunpack.c.l.b16 %v4487
    %v5169 = vunpack.c.h.b16 %v4487
    %v5170 = vunpack.c.l.b16 %v4488
    %v5171 = vunpack.c.h.b16 %v4488
    %v5172 = vunpack.c.l.b16 %v4489
    %v5173 = vunpack.c.h.b16 %v4489
    %v5174 = vunpack.c.l.b16 %v4490
    %v5175 = vunpack.c.l.b16 %v4491
    %v5176 = vunpack.c.h.b16 %v4491
    %v5177 = vunpack.c.l.b16 %v4492
    %v5178 = vunpack.c.h.b16 %v4492
    %v5179 = vunpack.c.l.b16 %v4493
    %v5180 = vunpack.c.h.b16 %v4493
    %v5181 = vunpack.c.l.b16 %v4494
    %v5182 = vunpack.c.l.b16 %v4495
    %v5183 = vunpack.c.h.b16 %v4495
    %v5184 = vunpack.c.l.b16 %v4496
    %v5185 = vunpack.c.h.b16 %v4496
    %v5186 = vunpack.c.l.b16 %v4497
    %v5187 = vunpack.c.h.b16 %v4497
    %v5188 = vunpack.c.l.b16 %v4498
    %v5189 = vunpack.c.l.b16 %v4499
    %v5190 = vunpack.c.h.b16 %v4499
    %v5191 = vunpack.c.l.b16 %v4500
    %v5192 = vunpack.c.h.b16 %v4500
    %v5193 = vunpack.c.l.b16 %v4501
    %v5194 = vunpack.c.h.b16 %v4501
    %v5195 = vunpack.c.l.b16 %v4502
    %v5196 = vunpack.c.l.b16 %v4503
    %v5197 = vunpack.c.h.b16 %v4503
    %v5198 = vunpack.c.l.b16 %v4504
    %v5199 = vunpack.c.h.b16 %v4504
    %v5200 = vunpack.c.l.b16 %v4505
    %v5201 = vunpack.c.h.b16 %v4505
    %v5202 = vunpack.c.l.b16 %v4506
    %v5203 = vunpack.c.l.b16 %v4507
    %v5204 = vunpack.c.h.b16 %v4507
    %v5205 = vunpack.c.l.b16 %v4508
    %v5206 = vunpack.c.h.b16 %v4508
    %v5207 = vunpack.c.l.b16 %v4509
    %v5208 = vunpack.c.h.b16 %v4509
    %v5209 = vunpack.c.l.b16 %v4510
    %v5210 = vunpack.c.l.b16 %v4511
    %v5211 = vunpack.c.h.b16 %v4511
    %v5212 = vunpack.c.l.b16 %v4512
    %v5213 = vunpack.c.h.b16 %v4512
    %v5214 = vunpack.c.l.b16 %v4513
    %v5215 = vunpack.c.h.b16 %v4513
    %v5216 = vunpack.c.l.b16 %v4514
    %v5217 = vunpack.c.l.b16 %v4515
    %v5218 = vunpack.c.h.b16 %v4515
    %v5219 = vunpack.c.l.b16 %v4516
    %v5220 = vunpack.c.h.b16 %v4516
    %v5221 = vunpack.c.l.b16 %v4517
    %v5222 = vunpack.c.h.b16 %v4517
    %v5223 = vunpack.c.l.b16 %v4518
    %v5224 = vunpack.c.l.b16 %v4519
    %v5225 = vunpack.c.h.b16 %v4519
    %v5226 = vunpack.c.l.b16 %v4520
    %v5227 = vunpack.c.h.b16 %v4520
    %v5228 = vunpack.c.l.b16 %v4521
    %v5229 = vunpack.c.h.b16 %v4521
    %v5230 = vunpack.c.l.b16 %v4522
    %v5231 = vunpack.c.l.b16 %v4523
    %v5232 = vunpack.c.h.b16 %v4523
    %v5233 = vunpack.c.l.b16 %v4524
    %v5234 = vunpack.c.h.b16 %v4524
    %v5235 = vunpack.c.l.b16 %v4525
    %v5236 = vunpack.c.h.b16 %v4525
    %v5237 = vunpack.c.l.b16 %v4526
    %v5238 = vunpack.c.l.b16 %v4527
    %v5239 = vunpack.c.h.b16 %v4527
    %v5240 = vunpack.c.l.b16 %v4528
    %v5241 = vunpack.c.h.b16 %v4528
    %v5242 = vunpack.c.l.b16 %v4529
    %v5243 = vunpack.c.h.b16 %v4529
    %v5244 = vunpack.c.l.b16 %v4530
    %v5245 = vunpack.c.l.b16 %v4531
    %v5246 = vunpack.c.h.b16 %v4531
    %v5247 = vunpack.c.l.b16 %v4532
    %v5248 = vunpack.c.h.b16 %v4532
    %v5249 = vunpack.c.l.b16 %v4533
    %v5250 = vunpack.c.h.b16 %v4533
    %v5251 = vunpack.c.l.b16 %v4534
    %v5252 = vunpack.c.l.b16 %v4535
    %v5253 = vunpack.c.h.b16 %v4535
    %v5254 = vunpack.c.l.b16 %v4536
    %v5255 = vunpack.c.h.b16 %v4536
    %v5256 = vunpack.c.l.b16 %v4537
    %v5257 = vunpack.c.h.b16 %v4537
    %v5258 = vunpack.c.l.b16 %v4538
    %v5259 = vunpack.c.l.b16 %v4539
    %v5260 = vunpack.c.h.b16 %v4539
    %v5261 = vunpack.c.l.b16 %v4540
    %v5262 = vunpack.c.h.b16 %v4540
    %v5263 = vunpack.c.l.b16 %v4541
    %v5264 = vunpack.c.h.b16 %v4541
    %v5265 = vunpack.c.l.b16 %v4542
    %v5266 = vunpack.c.l.b16 %v4543
    %v5267 = vunpack.c.h.b16 %v4543
    %v5268 = vunpack.c.l.b16 %v4544
    %v5269 = vunpack.c.h.b16 %v4544
    %v5270 = vunpack.c.l.b16 %v4545
    %v5271 = vunpack.c.h.b16 %v4545
    %v5272 = vunpack.c.l.b16 %v4546
    %v5273 = vunpack.c.l.b16 %v4547
    %v5274 = vunpack.c.h.b16 %v4547
    %v5275 = vunpack.c.l.b16 %v4548
    %v5276 = vunpack.c.h.b16 %v4548
    %v5277 = vunpack.c.l.b16 %v4549
    %v5278 = vunpack.c.h.b16 %v4549
    %v5279 = vunpack.c.l.b16 %v4550
    %v5280 = vunpack.c.l.b16 %v4551
    %v5281 = vunpack.c.h.b16 %v4551
    %v5282 = vunpack.c.l.b16 %v4552
    %v5283 = vunpack.c.h.b16 %v4552
    %v5284 = vunpack.c.l.b16 %v4553
    %v5285 = vunpack.c.h.b16 %v4553
    %v5286 = vunpack.c.l.b16 %v4554
    %v5287 = vunpack.c.l.b16 %v4555
    %v5288 = vunpack.c.h.b16 %v4555
    %v5289 = vunpack.c.l.b16 %v4556
    %v5290 = vunpack.c.h.b16 %v4556
    %v5291 = vunpack.c.l.b16 %v4557
    %v5292 = vunpack.c.h.b16 %v4557
    %v5293 = vunpack.c.l.b16 %v4558
    %v5294 = vunpack.c.l.b16 %v4559
    %v5295 = vunpack.c.h.b16 %v4559
    %v5296 = vunpack.c.l.b16 %v4560
    %v5297 = vunpack.c.h.b16 %v4560
    %v5298 = vunpack.c.l.b16 %v4561
    %v5299 = vunpack.c.h.b16 %v4561
    %v5300 = vunpack.c.l.b16 %v4562
    %v5301 = vunpack.c.l.b16 %v4563
    %v5302 = vunpack.c.h.b16 %v4563
    %v5303 = vunpack.c.l.b16 %v4564
    %v5304 = vunpack.c.h.b16 %v4564
    %v5305 = vunpack.c.l.b16 %v4565
    %v5306 = vunpack.c.h.b16 %v4565
    %v5307 = vunpack.c.l.b16 %v4566
    %v5308 = vpack.c.b16 %v4867, %v4860
    %v5309 = vpack.c.b16 %v4868, %v4861
    %v5310 = vpack.c.b16 %v4869, %v4862
    %v5311 = vpack.c.b16 %v4870, %v4863
    %v5312 = vpack.c.b16 %v4871, %v4864
    %v5313 = vpack.c.b16 %v4872, %v4865
    %v5314 = vpack.c.b16 %v4873, %v4866
    %v5315 = vpack.c.b16 %v4881, %v4874
    %v5316 = vpack.c.b16 %v4882, %v4875
    %v5317 = vpack.c.b16 %v4883, %v4876
    %v5318 = vpack.c.b16 %v4884, %v4877
    %v5319 = vpack.c.b16 %v4885, %v4878
    %v5320 = vpack.c.b16 %v4886, %v4879
    %v5321 = vpack.c.b16 %v4887, %v4880
    %v5322 = vpack.c.b16 %v4895, %v4888
    %v5323 = vpack.c.b16 %v4896, %v4889
    %v5324 = vpack.c.b16 %v4897, %v4890
    %v5325 = vpack.c.b16 %v4898, %v4891
    %v5326 = vpack.c.b16 %v4899, %v4892
    %v5327 = vpack.c.b16 %v4900, %v4893
    %v5328 = vpack.c.b16 %v4901, %v4894
    %v5329 = vpack.c.b16 %v4909, %v4902
    %v5330 = vpack.c.b16 %v4910, %v4903
    %v5331 = vpack.c.b16 %v4911, %v4904
    %v5332 = vpack.c.b16 %v4912, %v4905
    %v5333 = vpack.c.b16 %v4913, %v4906
    %v5334 = vpack.c.b16 %v4914, %v4907
    %v5335 = vpack.c.b16 %v4915, %v4908
    %v5336 = vpack.c.b16 %v4923, %v4916
    %v5337 = vpack.c.b16 %v4924, %v4917
    %v5338 = vpack.c.b16 %v4925, %v4918
    %v5339 = vpack.c.b16 %v4926, %v4919
    %v5340 = vpack.c.b16 %v4927, %v4920
    %v5341 = vpack.c.b16 %v4928, %v4921
    %v5342 = vpack.c.b16 %v4929, %v4922
    %v5343 = vpack.c.b16 %v4937, %v4930
    %v5344 = vpack.c.b16 %v4938, %v4931
    %v5345 = vpack.c.b16 %v4939, %v4932
    %v5346 = vpack.c.b16 %v4940, %v4933
    %v5347 = vpack.c.b16 %v4941, %v4934
    %v5348 = vpack.c.b16 %v4942, %v4935
    %v5349 = vpack.c.b16 %v4943, %v4936
    %v5350 = vpack.c.b16 %v4951, %v4944
    %v5351 = vpack.c.b16 %v4952, %v4945
    %v5352 = vpack.c.b16 %v4953, %v4946
    %v5353 = vpack.c.b16 %v4954, %v4947
    %v5354 = vpack.c.b16 %v4955, %v4948
    %v5355 = vpack.c.b16 %v4956, %v4949
    %v5356 = vpack.c.b16 %v4957, %v4950
    %v5357 = vpack.c.b16 %v4965, %v4958
    %v5358 = vpack.c.b16 %v4966, %v4959
    %v5359 = vpack.c.b16 %v4967, %v4960
    %v5360 = vpack.c.b16 %v4968, %v4961
    %v5361 = vpack.c.b16 %v4969, %v4962
    %v5362 = vpack.c.b16 %v4970, %v4963
    %v5363 = vpack.c.b16 %v4971, %v4964
    %v5364 = vpack.c.b16 %v4979, %v4972
    %v5365 = vpack.c.b16 %v4980, %v4973
    %v5366 = vpack.c.b16 %v4981, %v4974
    %v5367 = vpack.c.b16 %v4982, %v4975
    %v5368 = vpack.c.b16 %v4983, %v4976
    %v5369 = vpack.c.b16 %v4984, %v4977
    %v5370 = vpack.c.b16 %v4985, %v4978
    %v5371 = vpack.c.b16 %v4993, %v4986
    %v5372 = vpack.c.b16 %v4994, %v4987
    %v5373 = vpack.c.b16 %v4995, %v4988
    %v5374 = vpack.c.b16 %v4996, %v4989
    %v5375 = vpack.c.b16 %v4997, %v4990
    %v5376 = vpack.c.b16 %v4998, %v4991
    %v5377 = vpack.c.b16 %v4999, %v4992
    %v5378 = vpack.c.b16 %v5007, %v5000
    %v5379 = vpack.c.b16 %v5008, %v5001
    %v5380 = vpack.c.b16 %v5009, %v5002
    %v5381 = vpack.c.b16 %v5010, %v5003
    %v5382 = vpack.c.b16 %v5011, %v5004
    %v5383 = vpack.c.b16 %v5012, %v5005
    %v5384 = vpack.c.b16 %v5013, %v5006
    %v5385 = vpack.c.b16 %v5021, %v5014
    %v5386 = vpack.c.b16 %v5022, %v5015
    %v5387 = vpack.c.b16 %v5023, %v5016
    %v5388 = vpack.c.b16 %v5024, %v5017
    %v5389 = vpack.c.b16 %v5025, %v5018
    %v5390 = vpack.c.b16 %v5026, %v5019
    %v5391 = vpack.c.b16 %v5027, %v5020
    %v5392 = vpack.c.b16 %v5035, %v5028
    %v5393 = vpack.c.b16 %v5036, %v5029
    %v5394 = vpack.c.b16 %v5037, %v5030
    %v5395 = vpack.c.b16 %v5038, %v5031
    %v5396 = vpack.c.b16 %v5039, %v5032
    %v5397 = vpack.c.b16 %v5040, %v5033
    %v5398 = vpack.c.b16 %v5041, %v5034
    %v5399 = vpack.c.b16 %v5049, %v5042
    %v5400 = vpack.c.b16 %v5050, %v5043
    %v5401 = vpack.c.b16 %v5051, %v5044
    %v5402 = vpack.c.b16 %v5052, %v5045
    %v5403 = vpack.c.b16 %v5053, %v5046
    %v5404 = vpack.c.b16 %v5054, %v5047
    %v5405 = vpack.c.b16 %v5055, %v5048
    %v5406 = vpack.c.b16 %v5063, %v5056
    %v5407 = vpack.c.b16 %v5064, %v5057
    %v5408 = vpack.c.b16 %v5065, %v5058
    %v5409 = vpack.c.b16 %v5066, %v5059
    %v5410 = vpack.c.b16 %v5067, %v5060
    %v5411 = vpack.c.b16 %v5068, %v5061
    %v5412 = vpack.c.b16 %v5069, %v5062
    %v5413 = vpack.c.b16 %v5077, %v5070
    %v5414 = vpack.c.b16 %v5078, %v5071
    %v5415 = vpack.c.b16 %v5079, %v5072
    %v5416 = vpack.c.b16 %v5080, %v5073
    %v5417 = vpack.c.b16 %v5081, %v5074
    %v5418 = vpack.c.b16 %v5082, %v5075
    %v5419 = vpack.c.b16 %v5083, %v5076
    %v5420 = vpack.c.b16 %v5091, %v5084
    %v5421 = vpack.c.b16 %v5092, %v5085
    %v5422 = vpack.c.b16 %v5093, %v5086
    %v5423 = vpack.c.b16 %v5094, %v5087
    %v5424 = vpack.c.b16 %v5095, %v5088
    %v5425 = vpack.c.b16 %v5096, %v5089
    %v5426 = vpack.c.b16 %v5097, %v5090
    %v5427 = vpack.c.b16 %v5105, %v5098
    %v5428 = vpack.c.b16 %v5106, %v5099
    %v5429 = vpack.c.b16 %v5107, %v5100
    %v5430 = vpack.c.b16 %v5108, %v5101
    %v5431 = vpack.c.b16 %v5109, %v5102
    %v5432 = vpack.c.b16 %v5110, %v5103
    %v5433 = vpack.c.b16 %v5111, %v5104
    %v5434 = vpack.c.b16 %v5119, %v5112
    %v5435 = vpack.c.b16 %v5120, %v5113
    %v5436 = vpack.c.b16 %v5121, %v5114
    %v5437 = vpack.c.b16 %v5122, %v5115
    %v5438 = vpack.c.b16 %v5123, %v5116
    %v5439 = vpack.c.b16 %v5124, %v5117
    %v5440 = vpack.c.b16 %v5125, %v5118
    %v5441 = vpack.c.b16 %v5133, %v5126
    %v5442 = vpack.c.b16 %v5134, %v5127
    %v5443 = vpack.c.b16 %v5135, %v5128
    %v5444 = vpack.c.b16 %v5136, %v5129
    %v5445 = vpack.c.b16 %v5137, %v5130
    %v5446 = vpack.c.b16 %v5138, %v5131
    %v5447 = vpack.c.b16 %v5139, %v5132
    %v5448 = vpack.c.b16 %v5147, %v5140
    %v5449 = vpack.c.b16 %v5148, %v5141
    %v5450 = vpack.c.b16 %v5149, %v5142
    %v5451 = vpack.c.b16 %v5150, %v5143
    %v5452 = vpack.c.b16 %v5151, %v5144
    %v5453 = vpack.c.b16 %v5152, %v5145
    %v5454 = vpack.c.b16 %v5153, %v5146
    %v5455 = vpack.c.b16 %v5161, %v5154
    %v5456 = vpack.c.b16 %v5162, %v5155
    %v5457 = vpack.c.b16 %v5163, %v5156
    %v5458 = vpack.c.b16 %v5164, %v5157
    %v5459 = vpack.c.b16 %v5165, %v5158
    %v5460 = vpack.c.b16 %v5166, %v5159
    %v5461 = vpack.c.b16 %v5167, %v5160
    %v5462 = vpack.c.b16 %v5175, %v5168
    %v5463 = vpack.c.b16 %v5176, %v5169
    %v5464 = vpack.c.b16 %v5177, %v5170
    %v5465 = vpack.c.b16 %v5178, %v5171
    %v5466 = vpack.c.b16 %v5179, %v5172
    %v5467 = vpack.c.b16 %v5180, %v5173
    %v5468 = vpack.c.b16 %v5181, %v5174
    %v5469 = vpack.c.b16 %v5189, %v5182
    %v5470 = vpack.c.b16 %v5190, %v5183
    %v5471 = vpack.c.b16 %v5191, %v5184
    %v5472 = vpack.c.b16 %v5192, %v5185
    %v5473 = vpack.c.b16 %v5193, %v5186
    %v5474 = vpack.c.b16 %v5194, %v5187
    %v5475 = vpack.c.b16 %v5195, %v5188
    %v5476 = vpack.c.b16 %v5203, %v5196
    %v5477 = vpack.c.b16 %v5204, %v5197
    %v5478 = vpack.c.b16 %v5205, %v5198
    %v5479 = vpack.c.b16 %v5206, %v5199
    %v5480 = vpack.c.b16 %v5207, %v5200
    %v5481 = vpack.c.b16 %v5208, %v5201
    %v5482 = vpack.c.b16 %v5209, %v5202
    %v5483 = vpack.c.b16 %v5217, %v5210
    %v5484 = vpack.c.b16 %v5218, %v5211
    %v5485 = vpack.c.b16 %v5219, %v5212
    %v5486 = vpack.c.b16 %v5220, %v5213
    %v5487 = vpack.c.b16 %v5221, %v5214
    %v5488 = vpack.c.b16 %v5222, %v5215
    %v5489 = vpack.c.b16 %v5223, %v5216
    %v5490 = vpack.c.b16 %v5231, %v5224
    %v5491 = vpack.c.b16 %v5232, %v5225
    %v5492 = vpack.c.b16 %v5233, %v5226
    %v5493 = vpack.c.b16 %v5234, %v5227
    %v5494 = vpack.c.b16 %v5235, %v5228
    %v5495 = vpack.c.b16 %v5236, %v5229
    %v5496 = vpack.c.b16 %v5237, %v5230
    %v5497 = vpack.c.b16 %v5245, %v5238
    %v5498 = vpack.c.b16 %v5246, %v5239
    %v5499 = vpack.c.b16 %v5247, %v5240
    %v5500 = vpack.c.b16 %v5248, %v5241
    %v5501 = vpack.c.b16 %v5249, %v5242
    %v5502 = vpack.c.b16 %v5250, %v5243
    %v5503 = vpack.c.b16 %v5251, %v5244
    %v5504 = vpack.c.b16 %v5259, %v5252
    %v5505 = vpack.c.b16 %v5260, %v5253
    %v5506 = vpack.c.b16 %v5261, %v5254
    %v5507 = vpack.c.b16 %v5262, %v5255
    %v5508 = vpack.c.b16 %v5263, %v5256
    %v5509 = vpack.c.b16 %v5264, %v5257
    %v5510 = vpack.c.b16 %v5265, %v5258
    %v5511 = vpack.c.b16 %v5273, %v5266
    %v5512 = vpack.c.b16 %v5274, %v5267
    %v5513 = vpack.c.b16 %v5275, %v5268
    %v5514 = vpack.c.b16 %v5276, %v5269
    %v5515 = vpack.c.b16 %v5277, %v5270
    %v5516 = vpack.c.b16 %v5278, %v5271
    %v5517 = vpack.c.b16 %v5279, %v5272
    %v5518 = vpack.c.b16 %v5287, %v5280
    %v5519 = vpack.c.b16 %v5288, %v5281
    %v5520 = vpack.c.b16 %v5289, %v5282
    %v5521 = vpack.c.b16 %v5290, %v5283
    %v5522 = vpack.c.b16 %v5291, %v5284
    %v5523 = vpack.c.b16 %v5292, %v5285
    %v5524 = vpack.c.b16 %v5293, %v5286
    %v5525 = vpack.c.b16 %v5301, %v5294
    %v5526 = vpack.c.b16 %v5302, %v5295
    %v5527 = vpack.c.b16 %v5303, %v5296
    %v5528 = vpack.c.b16 %v5304, %v5297
    %v5529 = vpack.c.b16 %v5305, %v5298
    %v5530 = vpack.c.b16 %v5306, %v5299
    %v5531 = vpack.c.b16 %v5307, %v5300
    %5756 = vmatprep.subr.bf16.mxu0 %v5309
    %5757 = vmatpush1.bf16.msra.mxu0 %v5308
    %5758 = vmatprep.subr.bf16.mxu0 %v5316
    %5759 = vmatpush1.bf16.msra.mxu0 %v5315
    %5760 = vmatprep.subr.bf16.mxu0 %v5323
    %5761 = vmatpush1.bf16.msra.mxu0 %v5322
    %5762 = vmatprep.subr.bf16.mxu0 %v5330
    %5763 = vmatpush1.bf16.msra.mxu0 %v5329
    %5764 = vmatprep.subr.bf16.mxu0 %v5337
    %5765 = vmatpush1.bf16.msra.mxu0 %v5336
    %5766 = vmatprep.subr.bf16.mxu0 %v5344
    %5767 = vmatpush1.bf16.msra.mxu0 %v5343
    %5768 = vmatprep.subr.bf16.mxu0 %v5351
    %5769 = vmatpush1.bf16.msra.mxu0 %v5350
    %5770 = vmatprep.subr.bf16.mxu0 %v5358
    %5771 = vmatpush1.bf16.msra.mxu0 %v5357
    %5772 = vmatprep.subr.bf16.mxu0 %v5365
    %5773 = vmatpush1.bf16.msra.mxu0 %v5364
    %5774 = vmatprep.subr.bf16.mxu0 %v5372
    %5775 = vmatpush1.bf16.msra.mxu0 %v5371
    %5776 = vmatprep.subr.bf16.mxu0 %v5379
    %5777 = vmatpush1.bf16.msra.mxu0 %v5378
    %5778 = vmatprep.subr.bf16.mxu0 %v5386
    %5779 = vmatpush1.bf16.msra.mxu0 %v5385
    %5780 = vmatprep.subr.bf16.mxu0 %v5393
    %5781 = vmatpush1.bf16.msra.mxu0 %v5392
    %5782 = vmatprep.subr.bf16.mxu0 %v5400
    %5783 = vmatpush1.bf16.msra.mxu0 %v5399
    %5784 = vmatprep.subr.bf16.mxu0 %v5407
    %5785 = vmatpush1.bf16.msra.mxu0 %v5406
    %5786 = vmatprep.subr.bf16.mxu0 %v5414
    %5787 = vmatpush1.bf16.msra.mxu0 %v5413
    %5788 = vmatprep.mubr.bf16.mxu0 %v4308
    %5789 = vmatmul.mubr.bf16.gmra.mrb[0].mxu0 %v4307
    %v5790 = vpop.f32.mrb[0].mxu0
    %v5791 = vadd.f32 %v4572, %v5790
    %v5792 = vpop.f32.mrb[0].mxu0
    %v5793 = vadd.f32 %v4576, %v5792
    %v5794 = vpop.f32.mrb[0].mxu0
    %v5795 = vpop.f32.mrb[0].mxu0
    %5796 = vdwg.mxu0
    %5797 = vmatprep.subr.bf16.mxu0 %v5421
    %5798 = vmatpush1.bf16.msra.mxu0 %v5420
    %5799 = vmatprep.subr.bf16.mxu0 %v5428
    %5800 = vmatpush1.bf16.msra.mxu0 %v5427
    %5801 = vmatprep.subr.bf16.mxu0 %v5435
    %5802 = vmatpush1.bf16.msra.mxu0 %v5434
    %5803 = vmatprep.subr.bf16.mxu0 %v5442
    %5804 = vmatpush1.bf16.msra.mxu0 %v5441
    %5805 = vmatprep.subr.bf16.mxu0 %v5449
    %5806 = vmatpush1.bf16.msra.mxu0 %v5448
    %5807 = vmatprep.subr.bf16.mxu0 %v5456
    %5808 = vmatpush1.bf16.msra.mxu0 %v5455
    %5809 = vmatprep.subr.bf16.mxu0 %v5463
    %5810 = vmatpush1.bf16.msra.mxu0 %v5462
    %5811 = vmatprep.subr.bf16.mxu0 %v5470
    %5812 = vmatpush1.bf16.msra.mxu0 %v5469
    %5813 = vmatprep.subr.bf16.mxu0 %v5477
    %5814 = vmatpush1.bf16.msra.mxu0 %v5476
    %5815 = vmatprep.subr.bf16.mxu0 %v5484
    %5816 = vmatpush1.bf16.msra.mxu0 %v5483
    %5817 = vmatprep.subr.bf16.mxu0 %v5491
    %5818 = vmatpush1.bf16.msra.mxu0 %v5490
    %5819 = vmatprep.subr.bf16.mxu0 %v5498
    %5820 = vmatpush1.bf16.msra.mxu0 %v5497
    %5821 = vmatprep.subr.bf16.mxu0 %v5505
    %5822 = vmatpush1.bf16.msra.mxu0 %v5504
    %5823 = vmatprep.subr.bf16.mxu0 %v5512
    %5824 = vmatpush1.bf16.msra.mxu0 %v5511
    %5825 = vmatprep.subr.bf16.mxu0 %v5519
    %5826 = vmatpush1.bf16.msra.mxu0 %v5518
    %5827 = vmatprep.subr.bf16.mxu0 %v5526
    %5828 = vmatpush1.bf16.msra.mxu0 %v5525
    %5829 = vmatprep.mubr.bf16.mxu0 %v4310
    %5830 = vmatmul.mubr.bf16.gmra.mrb[0].mxu0 %v4309
    %v5831 = vpop.f32.mrb[0].mxu0
    %v5832 = vadd.f32 %v5791, %v5831
    %v5833 = vpop.f32.mrb[0].mxu0
    %v5834 = vadd.f32 %v5793, %v5833
    %v5835 = vpop.f32.mrb[0].mxu0
    %v5836 = vpop.f32.mrb[0].mxu0
    %5837 = vdwg.mxu0
    %5838 = vmatprep.subr.bf16.mxu0 %v5311
    %5839 = vmatpush1.bf16.msra.mxu0 %v5310
    %5840 = vmatprep.subr.bf16.mxu0 %v5318
    %5841 = vmatpush1.bf16.msra.mxu0 %v5317
    %5842 = vmatprep.subr.bf16.mxu0 %v5325
    %5843 = vmatpush1.bf16.msra.mxu0 %v5324
    %5844 = vmatprep.subr.bf16.mxu0 %v5332
    %5845 = vmatpush1.bf16.msra.mxu0 %v5331
    %5846 = vmatprep.subr.bf16.mxu0 %v5339
    %5847 = vmatpush1.bf16.msra.mxu0 %v5338
    %5848 = vmatprep.subr.bf16.mxu0 %v5346
    %5849 = vmatpush1.bf16.msra.mxu0 %v5345
    %5850 = vmatprep.subr.bf16.mxu0 %v5353
    %5851 = vmatpush1.bf16.msra.mxu0 %v5352
    %5852 = vmatprep.subr.bf16.mxu0 %v5360
    %5853 = vmatpush1.bf16.msra.mxu0 %v5359
    %5854 = vmatprep.subr.bf16.mxu0 %v5367
    %5855 = vmatpush1.bf16.msra.mxu0 %v5366
    %5856 = vmatprep.subr.bf16.mxu0 %v5374
    %5857 = vmatpush1.bf16.msra.mxu0 %v5373
    %5858 = vmatprep.subr.bf16.mxu0 %v5381
    %5859 = vmatpush1.bf16.msra.mxu0 %v5380
    %5860 = vmatprep.subr.bf16.mxu0 %v5388
    %5861 = vmatpush1.bf16.msra.mxu0 %v5387
    %5862 = vmatprep.subr.bf16.mxu0 %v5395
    %5863 = vmatpush1.bf16.msra.mxu0 %v5394
    %5864 = vmatprep.subr.bf16.mxu0 %v5402
    %5865 = vmatpush1.bf16.msra.mxu0 %v5401
    %5866 = vmatprep.subr.bf16.mxu0 %v5409
    %5867 = vmatpush1.bf16.msra.mxu0 %v5408
    %5868 = vmatprep.subr.bf16.mxu0 %v5416
    %5869 = vmatpush1.bf16.msra.mxu0 %v5415
    %5870 = vmatprep.mubr.bf16.mxu0 %v4308
    %5871 = vmatmul.mubr.bf16.gmra.mrb[0].mxu0 %v4307
    %v5872 = vpop.f32.mrb[0].mxu0
    %v5873 = vadd.f32 %v4580, %v5872
    %v5874 = vpop.f32.mrb[0].mxu0
    %v5875 = vadd.f32 %v4584, %v5874
    %v5876 = vpop.f32.mrb[0].mxu0
    %v5877 = vpop.f32.mrb[0].mxu0
    %5878 = vdwg.mxu0
    %5879 = vmatprep.subr.bf16.mxu0 %v5423
    %5880 = vmatpush1.bf16.msra.mxu0 %v5422
    %5881 = vmatprep.subr.bf16.mxu0 %v5430
    %5882 = vmatpush1.bf16.msra.mxu0 %v5429
    %5883 = vmatprep.subr.bf16.mxu0 %v5437
    %5884 = vmatpush1.bf16.msra.mxu0 %v5436
    %5885 = vmatprep.subr.bf16.mxu0 %v5444
    %5886 = vmatpush1.bf16.msra.mxu0 %v5443
    %5887 = vmatprep.subr.bf16.mxu0 %v5451
    %5888 = vmatpush1.bf16.msra.mxu0 %v5450
    %5889 = vmatprep.subr.bf16.mxu0 %v5458
    %5890 = vmatpush1.bf16.msra.mxu0 %v5457
    %5891 = vmatprep.subr.bf16.mxu0 %v5465
    %5892 = vmatpush1.bf16.msra.mxu0 %v5464
    %5893 = vmatprep.subr.bf16.mxu0 %v5472
    %5894 = vmatpush1.bf16.msra.mxu0 %v5471
    %5895 = vmatprep.subr.bf16.mxu0 %v5479
    %5896 = vmatpush1.bf16.msra.mxu0 %v5478
    %5897 = vmatprep.subr.bf16.mxu0 %v5486
    %5898 = vmatpush1.bf16.msra.mxu0 %v5485
    %5899 = vmatprep.subr.bf16.mxu0 %v5493
    %5900 = vmatpush1.bf16.msra.mxu0 %v5492
    %5901 = vmatprep.subr.bf16.mxu0 %v5500
    %5902 = vmatpush1.bf16.msra.mxu0 %v5499
    %5903 = vmatprep.subr.bf16.mxu0 %v5507
    %5904 = vmatpush1.bf16.msra.mxu0 %v5506
    %5905 = vmatprep.subr.bf16.mxu0 %v5514
    %5906 = vmatpush1.bf16.msra.mxu0 %v5513
    %5907 = vmatprep.subr.bf16.mxu0 %v5521
    %5908 = vmatpush1.bf16.msra.mxu0 %v5520
    %5909 = vmatprep.subr.bf16.mxu0 %v5528
    %5910 = vmatpush1.bf16.msra.mxu0 %v5527
    %5911 = vmatprep.mubr.bf16.mxu0 %v4310
    %5912 = vmatmul.mubr.bf16.gmra.mrb[0].mxu0 %v4309
    %v5913 = vpop.f32.mrb[0].mxu0
    %v5914 = vadd.f32 %v5873, %v5913
    %v5915 = vpop.f32.mrb[0].mxu0
    %v5916 = vadd.f32 %v5875, %v5915
    %v5917 = vpop.f32.mrb[0].mxu0
    %v5918 = vpop.f32.mrb[0].mxu0
    %5919 = vdwg.mxu0
    %5920 = vmatprep.subr.bf16.mxu0 %v5313
    %5921 = vmatpush1.bf16.msra.mxu0 %v5312
    %5922 = vmatprep.subr.bf16.mxu0 %v5320
    %5923 = vmatpush1.bf16.msra.mxu0 %v5319
    %5924 = vmatprep.subr.bf16.mxu0 %v5327
    %5925 = vmatpush1.bf16.msra.mxu0 %v5326
    %5926 = vmatprep.subr.bf16.mxu0 %v5334
    %5927 = vmatpush1.bf16.msra.mxu0 %v5333
    %5928 = vmatprep.subr.bf16.mxu0 %v5341
    %5929 = vmatpush1.bf16.msra.mxu0 %v5340
    %5930 = vmatprep.subr.bf16.mxu0 %v5348
    %5931 = vmatpush1.bf16.msra.mxu0 %v5347
    %5932 = vmatprep.subr.bf16.mxu0 %v5355
    %5933 = vmatpush1.bf16.msra.mxu0 %v5354
    %5934 = vmatprep.subr.bf16.mxu0 %v5362
    %5935 = vmatpush1.bf16.msra.mxu0 %v5361
    %5936 = vmatprep.subr.bf16.mxu0 %v5369
    %5937 = vmatpush1.bf16.msra.mxu0 %v5368
    %5938 = vmatprep.subr.bf16.mxu0 %v5376
    %5939 = vmatpush1.bf16.msra.mxu0 %v5375
    %5940 = vmatprep.subr.bf16.mxu0 %v5383
    %5941 = vmatpush1.bf16.msra.mxu0 %v5382
    %5942 = vmatprep.subr.bf16.mxu0 %v5390
    %5943 = vmatpush1.bf16.msra.mxu0 %v5389
    %5944 = vmatprep.subr.bf16.mxu0 %v5397
    %5945 = vmatpush1.bf16.msra.mxu0 %v5396
    %5946 = vmatprep.subr.bf16.mxu0 %v5404
    %5947 = vmatpush1.bf16.msra.mxu0 %v5403
    %5948 = vmatprep.subr.bf16.mxu0 %v5411
    %5949 = vmatpush1.bf16.msra.mxu0 %v5410
    %5950 = vmatprep.subr.bf16.mxu0 %v5418
    %5951 = vmatpush1.bf16.msra.mxu0 %v5417
    %5952 = vmatprep.mubr.bf16.mxu0 %v4308
    %5953 = vmatmul.mubr.bf16.gmra.mrb[0].mxu0 %v4307
    %v5954 = vpop.f32.mrb[0].mxu0
    %v5955 = vadd.f32 %v4588, %v5954
    %v5956 = vpop.f32.mrb[0].mxu0
    %v5957 = vadd.f32 %v4592, %v5956
    %v5958 = vpop.f32.mrb[0].mxu0
    %v5959 = vpop.f32.mrb[0].mxu0
    %5960 = vdwg.mxu0
    %5961 = vmatprep.subr.bf16.mxu0 %v5425
    %5962 = vmatpush1.bf16.msra.mxu0 %v5424
    %5963 = vmatprep.subr.bf16.mxu0 %v5432
    %5964 = vmatpush1.bf16.msra.mxu0 %v5431
    %5965 = vmatprep.subr.bf16.mxu0 %v5439
    %5966 = vmatpush1.bf16.msra.mxu0 %v5438
    %5967 = vmatprep.subr.bf16.mxu0 %v5446
    %5968 = vmatpush1.bf16.msra.mxu0 %v5445
    %5969 = vmatprep.subr.bf16.mxu0 %v5453
    %5970 = vmatpush1.bf16.msra.mxu0 %v5452
    %5971 = vmatprep.subr.bf16.mxu0 %v5460
    %5972 = vmatpush1.bf16.msra.mxu0 %v5459
    %5973 = vmatprep.subr.bf16.mxu0 %v5467
    %5974 = vmatpush1.bf16.msra.mxu0 %v5466
    %5975 = vmatprep.subr.bf16.mxu0 %v5474
    %5976 = vmatpush1.bf16.msra.mxu0 %v5473
    %5977 = vmatprep.subr.bf16.mxu0 %v5481
    %5978 = vmatpush1.bf16.msra.mxu0 %v5480
    %5979 = vmatprep.subr.bf16.mxu0 %v5488
    %5980 = vmatpush1.bf16.msra.mxu0 %v5487
    %5981 = vmatprep.subr.bf16.mxu0 %v5495
    %5982 = vmatpush1.bf16.msra.mxu0 %v5494
    %5983 = vmatprep.subr.bf16.mxu0 %v5502
    %5984 = vmatpush1.bf16.msra.mxu0 %v5501
    %5985 = vmatprep.subr.bf16.mxu0 %v5509
    %5986 = vmatpush1.bf16.msra.mxu0 %v5508
    %5987 = vmatprep.subr.bf16.mxu0 %v5516
    %5988 = vmatpush1.bf16.msra.mxu0 %v5515
    %5989 = vmatprep.subr.bf16.mxu0 %v5523
    %5990 = vmatpush1.bf16.msra.mxu0 %v5522
    %5991 = vmatprep.subr.bf16.mxu0 %v5530
    %5992 = vmatpush1.bf16.msra.mxu0 %v5529
    %5993 = vmatprep.mubr.bf16.mxu0 %v4310
    %5994 = vmatmul.mubr.bf16.gmra.mrb[0].mxu0 %v4309
    %v5995 = vpop.f32.mrb[0].mxu0
    %v5996 = vadd.f32 %v5955, %v5995
    %v5997 = vpop.f32.mrb[0].mxu0
    %v5998 = vadd.f32 %v5957, %v5997
    %v5999 = vpop.f32.mrb[0].mxu0
    %v6000 = vpop.f32.mrb[0].mxu0
    %6001 = vdwg.mxu0
    %6002 = vmatprep.subr.bf16.mxu0 0
    %6003 = vmatpush1.bf16.msra.mxu0 %v5314
    %6004 = vmatprep.subr.bf16.mxu0 0
    %6005 = vmatpush1.bf16.msra.mxu0 %v5321
    %6006 = vmatprep.subr.bf16.mxu0 0
    %6007 = vmatpush1.bf16.msra.mxu0 %v5328
    %6008 = vmatprep.subr.bf16.mxu0 0
    %6009 = vmatpush1.bf16.msra.mxu0 %v5335
    %6010 = vmatprep.subr.bf16.mxu0 0
    %6011 = vmatpush1.bf16.msra.mxu0 %v5342
    %6012 = vmatprep.subr.bf16.mxu0 0
    %6013 = vmatpush1.bf16.msra.mxu0 %v5349
    %6014 = vmatprep.subr.bf16.mxu0 0
    %6015 = vmatpush1.bf16.msra.mxu0 %v5356
    %6016 = vmatprep.subr.bf16.mxu0 0
    %6017 = vmatpush1.bf16.msra.mxu0 %v5363
    %6018 = vmatprep.subr.bf16.mxu0 0
    %6019 = vmatpush1.bf16.msra.mxu0 %v5370
    %6020 = vmatprep.subr.bf16.mxu0 0
    %6021 = vmatpush1.bf16.msra.mxu0 %v5377
    %6022 = vmatprep.subr.bf16.mxu0 0
    %6023 = vmatpush1.bf16.msra.mxu0 %v5384
    %6024 = vmatprep.subr.bf16.mxu0 0
    %6025 = vmatpush1.bf16.msra.mxu0 %v5391
    %6026 = vmatprep.subr.bf16.mxu0 0
    %6027 = vmatpush1.bf16.msra.mxu0 %v5398
    %6028 = vmatprep.subr.bf16.mxu0 0
    %6029 = vmatpush1.bf16.msra.mxu0 %v5405
    %6030 = vmatprep.subr.bf16.mxu0 0
    %6031 = vmatpush1.bf16.msra.mxu0 %v5412
    %6032 = vmatprep.subr.bf16.mxu0 0
    %6033 = vmatpush1.bf16.msra.mxu0 %v5419
    %6034 = vmatprep.mubr.bf16.mxu0 %v4308
    %6035 = vmatmul.mubr.bf16.gmra.mrb[0].mxu0 %v4307
    %v6036 = vpop.f32.mrb[0].mxu0
    %v6037 = vadd.f32 %v4596, %v6036
    %v6038 = vpop.f32.mrb[0].mxu0
    %v6039 = vpop.f32.mrb[0].mxu0
    %v6040 = vpop.f32.mrb[0].mxu0
    %6041 = vdwg.mxu0
    %6042 = vmatprep.subr.bf16.mxu0 0
    %6043 = vmatpush1.bf16.msra.mxu0 %v5426
    %6044 = vmatprep.subr.bf16.mxu0 0
    %6045 = vmatpush1.bf16.msra.mxu0 %v5433
    %6046 = vmatprep.subr.bf16.mxu0 0
    %6047 = vmatpush1.bf16.msra.mxu0 %v5440
    %6048 = vmatprep.subr.bf16.mxu0 0
    %6049 = vmatpush1.bf16.msra.mxu0 %v5447
    %6050 = vmatprep.subr.bf16.mxu0 0
    %6051 = vmatpush1.bf16.msra.mxu0 %v5454
    %6052 = vmatprep.subr.bf16.mxu0 0
    %6053 = vmatpush1.bf16.msra.mxu0 %v5461
    %6054 = vmatprep.subr.bf16.mxu0 0
    %6055 = vmatpush1.bf16.msra.mxu0 %v5468
    %6056 = vmatprep.subr.bf16.mxu0 0
    %6057 = vmatpush1.bf16.msra.mxu0 %v5475
    %6058 = vmatprep.subr.bf16.mxu0 0
    %6059 = vmatpush1.bf16.msra.mxu0 %v5482
    %6060 = vmatprep.subr.bf16.mxu0 0
    %6061 = vmatpush1.bf16.msra.mxu0 %v5489
    %6062 = vmatprep.subr.bf16.mxu0 0
    %6063 = vmatpush1.bf16.msra.mxu0 %v5496
    %6064 = vmatprep.subr.bf16.mxu0 0
    %6065 = vmatpush1.bf16.msra.mxu0 %v5503
    %6066 = vmatprep.subr.bf16.mxu0 0
    %6067 = vmatpush1.bf16.msra.mxu0 %v5510
    %6068 = vmatprep.subr.bf16.mxu0 0
    %6069 = vmatpush1.bf16.msra.mxu0 %v5517
    %6070 = vmatprep.subr.bf16.mxu0 0
    %6071 = vmatpush1.bf16.msra.mxu0 %v5524
    %6072 = vmatprep.subr.bf16.mxu0 0
    %6073 = vmatpush1.bf16.msra.mxu0 %v5531
    %6074 = vmatprep.mubr.bf16.mxu0 %v4310
    %6075 = vmatmul.mubr.bf16.gmra.mrb[0].mxu0 %v4309
    %v6076 = vpop.f32.mrb[0].mxu0
    %v6077 = vadd.f32 %v6037, %v6076
    %v6078 = vpop.f32.mrb[0].mxu0
    %v6079 = vpop.f32.mrb[0].mxu0
    %v6080 = vpop.f32.mrb[0].mxu0
    %6081 = vdwg.mxu0
    %v6082 = vxor.u32 %v5832, 2147483648
    %v6083 = vxor.u32 %v5834, 2147483648
    %v6084 = vxor.u32 %v5914, 2147483648
    %v6085 = vxor.u32 %v5916, 2147483648
    %v6086 = vxor.u32 %v5996, 2147483648
    %v6087 = vxor.u32 %v5998, 2147483648
    %v6088 = vxor.u32 %v6077, 2147483648
    %v6089 = vmul.f32 %v6082, 1.442695
    %v6090 = vpow.pop %v6089
    %v6091 = vmul.f32 %v6083, 1.442695
    %v6092 = vpow.pop %v6091
    %v6093 = vmul.f32 %v6084, 1.442695
    %v6094 = vpow.pop %v6093
    %v6095 = vmul.f32 %v6085, 1.442695
    %v6096 = vpow.pop %v6095
    %v6097 = vmul.f32 %v6086, 1.442695
    %v6098 = vpow.pop %v6097
    %v6099 = vmul.f32 %v6087, 1.442695
    %v6100 = vpow.pop %v6099
    %v6101 = vmul.f32 %v6088, 1.442695
    %v6102 = vpow.pop %v6101
    %v6103 = vadd.f32 %v6090, 1.0
    %v6104 = vadd.f32 %v6092, 1.0
    %v6105 = vadd.f32 %v6094, 1.0
    %v6106 = vadd.f32 %v6096, 1.0
    %v6107 = vadd.f32 %v6098, 1.0
    %v6108 = vadd.f32 %v6100, 1.0
    %v6109 = vadd.f32 %v6102, 1.0
    %v6110 = vrcp.pop %v6103
    %v6111 = vmul.f32 1.0, %v6110
    %v6112 = vrcp.pop %v6104
    %v6113 = vmul.f32 1.0, %v6112
    %v6114 = vrcp.pop %v6105
    %v6115 = vmul.f32 1.0, %v6114
    %v6116 = vrcp.pop %v6106
    %v6117 = vmul.f32 1.0, %v6116
    %v6118 = vrcp.pop %v6107
    %v6119 = vmul.f32 1.0, %v6118
    %v6120 = vrcp.pop %v6108
    %v6121 = vmul.f32 1.0, %v6120
    %v6122 = vrcp.pop %v6109
    %v6123 = vmul.f32 1.0, %v6122
    %6124 = vst [vmem:[#allocation38] sm:$0xff] %v6111
    %6125 = vst [vmem:[#allocation38 + $0x8] sm:$0xff] %v6113
    %6126 = vst [vmem:[#allocation38 + $0x10] sm:$0xff] %v6115
    %6127 = vst [vmem:[#allocation38 + $0x18] sm:$0xff] %v6117
    %6128 = vst [vmem:[#allocation38 + $0x20] sm:$0xff] %v6119
    %6129 = vst [vmem:[#allocation38 + $0x28] sm:$0xff] %v6121
    %6130 = vst [vmem:[#allocation38 + $0x30] sm:$0xff] %v6123
    // Predicated region
    $region234: #{autoencoder_forward.1} parent=1 // pred_check
      _
    $region235: #{autoencoder_forward.1} parent=1 // pred_check_branch
      %6132 = sbr.rel (0) target = $region237
    $region236: #{autoencoder_forward.1} parent=1 // pred_region
      _
    $region237: #{autoencoder_forward.1} parent=1 // pred_fallthru
      _
    // Predicated region
    $region238: #{autoencoder_forward.1} parent=1 // pred_check
      _
    $region239: #{autoencoder_forward.1} parent=1 // pred_check_branch
      %6134 = sbr.rel (0) target = $region241
    $region240: #{autoencoder_forward.1} parent=1 // pred_region
      %s6136 = ssub.s32 896, 896
      %6137 = vsyncadd [#allocation4], %s6136
      %s6139 = sshll.u32 [#allocation38], 4
      %s6140 = int_to_ptr.vmem [resolvable:$true] %s6139
      %6142 = dma.vmem_to_hbm [thread:$0]  %s6140, 896, %s73, [#allocation4]
    $region241: #{autoencoder_forward.1} parent=1 // pred_fallthru
      _
    // Predicated region
    $region242: #{autoencoder_forward.1} parent=1 // pred_check
      _
    $region243: #{autoencoder_forward.1} parent=1 // pred_check_branch
      %6144 = sbr.rel (0) target = $region245
    $region244: #{autoencoder_forward.1} parent=1 // pred_region
      _
    $region245: #{autoencoder_forward.1} parent=1 // pred_fallthru
      _
    // Predicated region
    $region246: #{autoencoder_forward.1} parent=1 // pred_check
      _
    $region247: #{autoencoder_forward.1} parent=1 // pred_check_branch
      %6146 = sbr.rel (0) target = $region249
    $region248: #{autoencoder_forward.1} parent=1 // pred_region
      %6147 = dma.done [#allocation4], 896
    $region249: #{autoencoder_forward.1} parent=1 // pred_fallthru
      _
    %6148 = vsyncpa [#allocation3], 1
    %6149 = vsyncpa [#allocation6], 1
    %6150 = vsyncpa [#allocation9], 1
    %6151 = vsyncpa [#allocation12], 1
    %6152 = vsyncpa [#allocation15], 1
    %6153 = vsyncpa [#allocation18], 1
    %6154 = vsyncpa [#allocation21], 1
    %6155 = vsyncpa [#allocation24], 1
    %6156 = vsyncpa [#allocation27], 1
    %6157 = vsyncpa [#allocation30], 1
    %6158 = vsyncpa [#allocation33], 1
    %6159 = vsyncpa [#allocation36], 1
    %6160 = vsyncpa [#allocation4], 1

</llo_original>
